<compile_context>
chip_gen: v6e
topology: v6e:2x2x1
jax: 0.10.0
libtpu: 0.0.40
codegen_flags: <defaults>
</compile_context>

<pallas_src>
import functools

import numpy as np
import jax
import jax.numpy as jnp
from jax.experimental import pallas as pl
from jax.experimental.pallas import tpu as pltpu

EPS = 1e-6          # SAM uses eps=1e-6 for its LayerNorms / LayerNorm2d
OUT_LANES = 128     # lane-dense output width

_VMEM = pl.BlockSpec(memory_space=pltpu.MemorySpace.VMEM)


# --------------------------- in-kernel helpers --------------------------------


def _mxu(a, b):
    """MXU matmul: bf16 operands, f32 accumulation."""
    return jnp.dot(a.astype(jnp.bfloat16), b.astype(jnp.bfloat16),
                   preferred_element_type=jnp.float32)


def _layernorm(x, g, b):
    """LayerNorm over the last axis; one-pass E[x], E[x^2] stats; eps=1e-6."""
    inv_n = 1.0 / x.shape[-1]
    mu = jnp.sum(x, axis=-1, keepdims=True) * inv_n
    ex2 = jnp.sum(x * x, axis=-1, keepdims=True) * inv_n
    var = ex2 - mu * mu
    return (x - mu) * jax.lax.rsqrt(var + EPS) * g + b


def _gelu_tanh(x):
    # TODO(synk): exact erf-GELU (PyTorch nn.GELU default) replaced with the
    # tanh approximation -- erf lowering in Mosaic is not guaranteed; tanh runs
    # on the EUP slot essentially for free next to the MXU work.
    c = 0.7978845608028654  # sqrt(2/pi)
    return 0.5 * x * (1.0 + jnp.tanh(c * (x + 0.044715 * x * x * x)))


# --------------------------- the fused encoder kernel --------------------------


def _sam_encoder_kernel(
    patches_ref, inv_std_ref, patch_w_ref, patch_b_ref, pos_ref,
    ln1_g_ref, ln1_b_ref, qkv_w_ref, qkv_b_ref, proj_w_ref, proj_b_ref,
    ln2_g_ref, ln2_b_ref, mlp1_w_ref, mlp1_b_ref, mlp2_w_ref, mlp2_b_ref,
    neck1_w_ref, nln1_g_ref, nln1_b_ref, shift_ref, neck2_w_ref,
    nln2_g_ref, nln2_b_ref, out_ref,
    *, B, N, D, num_heads, Cout):
    BN = B * N
    dh = D // num_heads
    scale = float(dh) ** -0.5

    # --- patch embed: pixel-std normalize (reciprocal multiply) + matmul + pos ---
    xp = patches_ref[...] * inv_std_ref[...]                           # (BN, C*p*p)
    x = _mxu(xp, patch_w_ref[...]) + patch_b_ref[...] + pos_ref[...]   # (BN, D)

    # --- ViT block: LN1 -> qkv -> per-(batch, head) attention -> proj -> residual
    xn = _layernorm(x, ln1_g_ref[...], ln1_b_ref[...])
    qkv = _mxu(xn, qkv_w_ref[...]) + qkv_b_ref[...]                    # (BN, 3D)
    per_batch = []
    for b in range(B):                                  # unrolled (small, static)
        rows = qkv[b * N:(b + 1) * N, :]                               # (N, 3D)
        heads = []
        for h in range(num_heads):
            q = rows[:, h * dh:(h + 1) * dh] * scale                   # (N, dh)
            k = rows[:, D + h * dh:D + (h + 1) * dh]
            v = rows[:, 2 * D + h * dh:2 * D + (h + 1) * dh]
            s = jax.lax.dot_general(                                   # q @ k^T
                q.astype(jnp.bfloat16), k.astype(jnp.bfloat16),
                (((1,), (1,)), ((), ())),
                preferred_element_type=jnp.float32)                    # (N, N)
            s = s - jnp.max(s, axis=-1, keepdims=True)
            p = jnp.exp(s)
            p = p * pl.reciprocal(jnp.sum(p, axis=-1, keepdims=True), approx=True)
            heads.append(_mxu(p, v))                                   # (N, dh)
        per_batch.append(jnp.concatenate(heads, axis=-1))              # (N, D)
    attn = jnp.concatenate(per_batch, axis=0)                          # (BN, D)
    x = x + _mxu(attn, proj_w_ref[...]) + proj_b_ref[...]              # residual fused

    # --- MLP block: LN2 -> fc1 -> GELU -> fc2 -> residual (all in-VMEM) ---
    xn = _layernorm(x, ln2_g_ref[...], ln2_b_ref[...])
    hdn = _mxu(xn, mlp1_w_ref[...]) + mlp1_b_ref[...]
    hdn = _gelu_tanh(hdn)
    x = x + _mxu(hdn, mlp2_w_ref[...]) + mlp2_b_ref[...]

    # --- neck: 1x1 conv -> LayerNorm2d -> 3x3 conv -> LayerNorm2d ---
    y = _mxu(x, neck1_w_ref[...])                                      # 1x1 conv, no bias
    y = _layernorm(y, nln1_g_ref[...], nln1_b_ref[...])                # LN over channels

    # 3x3 conv (padding=1, no bias): for each batch b and kernel tap t=3*di+dj,
    #   out_b += (S_t @ y_b) @ W_t
    # where S_t is a constant per-batch (N, N) 0/1 matrix implementing the
    # zero-padded spatial shift on (i, j) token rows.  S_t has at most one 1
    # per row, so applying it in bf16 is an exact row selection.
    # TODO(synk): at real SAM sizes (64x64 tokens) grid the neck spatially with
    # a halo'd BlockSpec instead of shift matrices.
    conv_rows = []
    for b in range(B):
        yb = y[b * N:(b + 1) * N, :]                                   # (N, Cout)
        acc_b = None
        for t in range(9):
            s_t = shift_ref[t * N:(t + 1) * N, :]                      # (N, N) 0/1
            w_t = neck2_w_ref[t * Cout:(t + 1) * Cout, :]              # (Cout, Cout)
            term = _mxu(_mxu(s_t, yb), w_t)                            # (N, Cout)
            acc_b = term if acc_b is None else acc_b + term
        conv_rows.append(acc_b)
    conv = jnp.concatenate(conv_rows, axis=0)                          # (BN, Cout)
    y2 = _layernorm(conv, nln2_g_ref[...], nln2_b_ref[...])

    # lane-dense output: pad channels to OUT_LANES so the HBM store is unmasked.
    if OUT_LANES > Cout:
        y2 = jnp.concatenate(
            [y2, jnp.zeros((BN, OUT_LANES - Cout), jnp.float32)], axis=-1)
    out_ref[...] = y2


def pallas_sam_encoder(patches, inv_std, pos_flat, shift_mats, params,
                       *, B, N, D, num_heads, Cout):
    BN = B * N
    kernel = functools.partial(_sam_encoder_kernel, B=B, N=N, D=D,
                               num_heads=num_heads, Cout=Cout)
    r = lambda a: a.reshape(1, -1)                    # 1-D params -> (1, n) slabs
    bf = lambda a: a.astype(jnp.bfloat16)             # weight slabs shipped as bf16
    args = (
        patches, inv_std,
        bf(params["patch_w"]), r(params["patch_b"]), pos_flat,
        r(params["ln1_g"]), r(params["ln1_b"]),
        bf(params["qkv_w"]), r(params["qkv_b"]),
        bf(params["proj_w"]), r(params["proj_b"]),
        r(params["ln2_g"]), r(params["ln2_b"]),
        bf(params["mlp1_w"]), r(params["mlp1_b"]),
        bf(params["mlp2_w"]), r(params["mlp2_b"]),
        bf(params["neck1_w"]), r(params["neck_ln1_g"]), r(params["neck_ln1_b"]),
        shift_mats, bf(params["neck2_w"]),
        r(params["neck_ln2_g"]), r(params["neck_ln2_b"]),
    )
    return pl.pallas_call(
        kernel,
        out_shape=jax.ShapeDtypeStruct((BN, OUT_LANES), jnp.float32),
        in_specs=[_VMEM] * len(args),
        out_specs=_VMEM,
        compiler_params=pltpu.CompilerParams(vmem_limit_bytes=64 * 1024 * 1024),
    )(*args)


# --------------------------- parameters --------------------------------------


def init_params(key, *, in_chans=3, img_size=32, patch=8, embed_dim=32,
                num_heads=2, mlp_ratio=4, out_chans=16):
    Hp = img_size // patch
    ks = jax.random.split(key, 8)

    def lin(k, fan_in, shape):
        return jax.random.normal(k, shape, jnp.float32) / jnp.sqrt(float(fan_in))

    p = {
        # patch embed (Conv2d(in_chans, D, kernel=patch, stride=patch)) as matmul,
        # rows ordered (c, di, dj) to match the NCHW patch extraction.
        "patch_w": lin(ks[0], in_chans * patch * patch,
                       (in_chans * patch * patch, embed_dim)),
        "patch_b": jnp.zeros((embed_dim,), jnp.float32),
        # absolute positional embedding (1, Hp, Wp, D)
        "pos": 0.02 * jax.random.normal(ks[1], (1, Hp, Hp, embed_dim), jnp.float32),
        # transformer block
        "ln1_g": jnp.ones((embed_dim,), jnp.float32),
        "ln1_b": jnp.zeros((embed_dim,), jnp.float32),
        "qkv_w": lin(ks[2], embed_dim, (embed_dim, 3 * embed_dim)),
        "qkv_b": jnp.zeros((3 * embed_dim,), jnp.float32),
        "proj_w": lin(ks[3], embed_dim, (embed_dim, embed_dim)),
        "proj_b": jnp.zeros((embed_dim,), jnp.float32),
        "ln2_g": jnp.ones((embed_dim,), jnp.float32),
        "ln2_b": jnp.zeros((embed_dim,), jnp.float32),
        "mlp1_w": lin(ks[4], embed_dim, (embed_dim, mlp_ratio * embed_dim)),
        "mlp1_b": jnp.zeros((mlp_ratio * embed_dim,), jnp.float32),
        "mlp2_w": lin(ks[5], mlp_ratio * embed_dim,
                      (mlp_ratio * embed_dim, embed_dim)),
        "mlp2_b": jnp.zeros((embed_dim,), jnp.float32),
        # neck: 1x1 conv (no bias), LN2d, 3x3 conv (no bias, rows stacked per
        # kernel tap t=3*di+dj with c_in fastest), LN2d
        "neck1_w": lin(ks[6], embed_dim, (embed_dim, out_chans)),
        "neck_ln1_g": jnp.ones((out_chans,), jnp.float32),
        "neck_ln1_b": jnp.zeros((out_chans,), jnp.float32),
        "neck2_w": lin(ks[7], out_chans * 9, (out_chans * 9, out_chans)),
        "neck_ln2_g": jnp.ones((out_chans,), jnp.float32),
        "neck_ln2_b": jnp.zeros((out_chans,), jnp.float32),
    }
    return p


def _build_shift_mats(Hp, Wp):
    """Per-batch constant 0/1 matrices for the zero-padded 3x3 spatial shifts.

    Returns a (9*N, N) bf16 slab; tap t=3*di+dj occupies rows [t*N, (t+1)*N).
    At most one 1 per row, so the bf16 matmul with it is an exact row select.
    """
    N = Hp * Wp
    S = np.zeros((9, N, N), np.float32)
    for t, (di, dj) in enumerate((a, b) for a in range(3) for b in range(3)):
        for i in range(Hp):
            for j in range(Wp):
                ii, jj = i + di - 1, j + dj - 1
                if 0 <= ii < Hp and 0 <= jj < Wp:
                    S[t, i * Wp + j, ii * Wp + jj] = 1.0
    return jnp.asarray(S.reshape(9 * N, N), dtype=jnp.bfloat16)


# --------------------------- forward pass -------------------------------------


def sam_unet_forward(image, params, *, img_size=32, patch=8, num_heads=2):
    B, C, H, W = image.shape

    # --- ResizeLongestSide.apply_image_torch (bilinear, align_corners=False) ---
    # TODO(synk): PyTorch uses antialias=True; jax.image.resize only anti-aliases
    # on downscale — identical behaviour for the upscaling path exercised here.
    scale = img_size / max(H, W)
    newh, neww = int(H * scale + 0.5), int(W * scale + 0.5)
    x = jax.image.resize(image.astype(jnp.float32), (B, C, newh, neww),
                         method="bilinear")

    # --- sam.preprocess: (x - mean) here (fuses with the resize); * 1/std is a
    # reciprocal multiply inside the kernel; zero-pad to square so padded pixels
    # stay exactly 0, as in SAM.
    pixel_mean = jnp.array([123.675, 116.28, 103.53], jnp.float32)
    pixel_std = jnp.array([58.395, 57.12, 57.375], jnp.float32)
    x = x - pixel_mean.reshape(1, C, 1, 1)
    x = jnp.pad(x, ((0, 0), (0, 0), (0, img_size - newh), (0, img_size - neww)))
    assert x.shape == (B, 3, img_size, img_size)

    # --- patch extraction (one small fused XLA transpose) ---
    # TODO(synk): at real SAM sizes deliver patch tiles via a BlockSpec index_map
    # gridded over (Hp, Wp) instead of materializing this permuted slab in HBM.
    Hp = Wp = img_size // patch
    patches = (x.reshape(B, C, Hp, patch, Wp, patch)
                 .transpose(0, 2, 4, 1, 3, 5)
                 .reshape(B * Hp * Wp, C * patch * patch))
    inv_std = jnp.repeat(1.0 / pixel_std, patch * patch).reshape(1, -1)

    D = params["patch_w"].shape[1]
    Cout = params["neck1_w"].shape[1]
    N = Hp * Wp
    pos_flat = jnp.broadcast_to(params["pos"].reshape(1, N, D),
                                (B, N, D)).reshape(B * N, D)
    shift_mats = _build_shift_mats(Hp, Wp)

    # --- the whole image encoder in ONE fused Pallas kernel ---
    out = pallas_sam_encoder(patches, inv_std, pos_flat, shift_mats, params,
                             B=B, N=N, D=D, num_heads=num_heads, Cout=Cout)

    # back to PyTorch NCHW embedding layout: (B, out_chans, Hp, Wp)
    return out[:, :Cout].reshape(B, Hp, Wp, Cout).transpose(0, 3, 1, 2)


# --------------------------------- main ---------------------------------------

if __name__ == "__main__":
    key = jax.random.PRNGKey(0)
    k_img, k_par = jax.random.split(key)

    # small image, NCHW, pixel-scale values like a real RGB image
    image = jax.random.uniform(k_img, (2, 3, 16, 16), jnp.float32) * 255.0
    params = init_params(k_par, in_chans=3, img_size=32, patch=8,
                         embed_dim=32, num_heads=2, mlp_ratio=4, out_chans=16)

    fwd = jax.jit(functools.partial(sam_unet_forward, img_size=32, patch=8,
                                    num_heads=2))
    out = fwd(image, params)
    out = jax.block_until_ready(out)

    assert out.shape == (2, 16, 4, 4), out.shape
    assert out.dtype == jnp.float32
    assert bool(jnp.all(jnp.isfinite(out)))
    print("KERNEL_OK")
</pallas_src>

<mosaic_0001>
module attributes {stable_mosaic.version = 11 : i64} {
  func.func @_sam_encoder_kernel(%arg0: memref<32x192xf32, #tpu.memory_space<vmem>>, %arg1: memref<1x192xf32, #tpu.memory_space<vmem>>, %arg2: memref<192x32xbf16, #tpu.memory_space<vmem>>, %arg3: memref<1x32xf32, #tpu.memory_space<vmem>>, %arg4: memref<32x32xf32, #tpu.memory_space<vmem>>, %arg5: memref<1x32xf32, #tpu.memory_space<vmem>>, %arg6: memref<1x32xf32, #tpu.memory_space<vmem>>, %arg7: memref<32x96xbf16, #tpu.memory_space<vmem>>, %arg8: memref<1x96xf32, #tpu.memory_space<vmem>>, %arg9: memref<32x32xbf16, #tpu.memory_space<vmem>>, %arg10: memref<1x32xf32, #tpu.memory_space<vmem>>, %arg11: memref<1x32xf32, #tpu.memory_space<vmem>>, %arg12: memref<1x32xf32, #tpu.memory_space<vmem>>, %arg13: memref<32x128xbf16, #tpu.memory_space<vmem>>, %arg14: memref<1x128xf32, #tpu.memory_space<vmem>>, %arg15: memref<128x32xbf16, #tpu.memory_space<vmem>>, %arg16: memref<1x32xf32, #tpu.memory_space<vmem>>, %arg17: memref<32x16xbf16, #tpu.memory_space<vmem>>, %arg18: memref<1x16xf32, #tpu.memory_space<vmem>>, %arg19: memref<1x16xf32, #tpu.memory_space<vmem>>, %arg20: memref<144x16xbf16, #tpu.memory_space<vmem>>, %arg21: memref<144x16xbf16, #tpu.memory_space<vmem>>, %arg22: memref<1x16xf32, #tpu.memory_space<vmem>>, %arg23: memref<1x16xf32, #tpu.memory_space<vmem>>, %arg24: memref<32x128xf32, #tpu.memory_space<vmem>>) attributes {dimension_semantics = [], scalar_prefetch = 0 : i64, scratch_operands = 0 : i64, tpu.core_type = #tpu.core_type<tc>} {
    %c0 = arith.constant 0 : index
    %c0_0 = arith.constant 0 : index
    %0 = vector.load %arg0[%c0, %c0_0] : memref<32x192xf32, #tpu.memory_space<vmem>>, vector<32x192xf32>
    %c0_1 = arith.constant 0 : index
    %c0_2 = arith.constant 0 : index
    %1 = vector.load %arg1[%c0_1, %c0_2] : memref<1x192xf32, #tpu.memory_space<vmem>>, vector<1x192xf32>
    %2 = vector.broadcast %1 : vector<1x192xf32> to vector<32x192xf32>
    %3 = arith.mulf %0, %2 : vector<32x192xf32>
    %c0_3 = arith.constant 0 : index
    %c0_4 = arith.constant 0 : index
    %4 = vector.load %arg2[%c0_3, %c0_4] : memref<192x32xbf16, #tpu.memory_space<vmem>>, vector<192x32xbf16>
    %5 = arith.truncf %3 : vector<32x192xf32> to vector<32x192xbf16>
    %cst = arith.constant dense<0.000000e+00> : vector<32x32xf32>
    %6 = tpu.matmul %5, %4, %cst {dimension_numbers = #tpu.dot_dimension_numbers<[1], [0], [0], [1], [0, 0, 1, 1], [], []>} : vector<32x192xbf16>, vector<192x32xbf16>, vector<32x32xf32> -> vector<32x32xf32>
    %c0_5 = arith.constant 0 : index
    %c0_6 = arith.constant 0 : index
    %7 = vector.load %arg3[%c0_5, %c0_6] : memref<1x32xf32, #tpu.memory_space<vmem>>, vector<1x32xf32>
    %8 = vector.broadcast %7 : vector<1x32xf32> to vector<32x32xf32>
    %9 = arith.addf %6, %8 : vector<32x32xf32>
    %c0_7 = arith.constant 0 : index
    %c0_8 = arith.constant 0 : index
    %10 = vector.load %arg4[%c0_7, %c0_8] : memref<32x32xf32, #tpu.memory_space<vmem>>, vector<32x32xf32>
    %11 = arith.addf %9, %10 : vector<32x32xf32>
    %c0_9 = arith.constant 0 : index
    %c0_10 = arith.constant 0 : index
    %12 = vector.load %arg5[%c0_9, %c0_10] : memref<1x32xf32, #tpu.memory_space<vmem>>, vector<1x32xf32>
    %c0_11 = arith.constant 0 : index
    %c0_12 = arith.constant 0 : index
    %13 = vector.load %arg6[%c0_11, %c0_12] : memref<1x32xf32, #tpu.memory_space<vmem>>, vector<1x32xf32>
    %cst_13 = arith.constant dense<0.000000e+00> : vector<32xf32>
    %14 = vector.multi_reduction <add>, %11, %cst_13 [1] : vector<32x32xf32> to vector<32xf32>
    %15 = vector.shape_cast %14 : vector<32xf32> to vector<32x1xf32>
    %cst_14 = arith.constant 3.125000e-02 : f32
    %16 = vector.broadcast %cst_14 : f32 to vector<32x1xf32>
    %17 = arith.mulf %15, %16 : vector<32x1xf32>
    %18 = arith.mulf %11, %11 : vector<32x32xf32>
    %cst_15 = arith.constant dense<0.000000e+00> : vector<32xf32>
    %19 = vector.multi_reduction <add>, %18, %cst_15 [1] : vector<32x32xf32> to vector<32xf32>
    %20 = vector.shape_cast %19 : vector<32xf32> to vector<32x1xf32>
    %cst_16 = arith.constant 3.125000e-02 : f32
    %21 = vector.broadcast %cst_16 : f32 to vector<32x1xf32>
    %22 = arith.mulf %20, %21 : vector<32x1xf32>
    %23 = arith.mulf %17, %17 : vector<32x1xf32>
    %24 = arith.subf %22, %23 : vector<32x1xf32>
    %25 = vector.broadcast %17 : vector<32x1xf32> to vector<32x32xf32>
    %26 = arith.subf %11, %25 : vector<32x32xf32>
    %cst_17 = arith.constant 9.99999997E-7 : f32
    %27 = vector.broadcast %cst_17 : f32 to vector<32x1xf32>
    %28 = arith.addf %24, %27 : vector<32x1xf32>
    %29 = math.rsqrt %28 : vector<32x1xf32>
    %30 = vector.broadcast %29 : vector<32x1xf32> to vector<32x32xf32>
    %31 = arith.mulf %26, %30 : vector<32x32xf32>
    %32 = vector.broadcast %12 : vector<1x32xf32> to vector<32x32xf32>
    %33 = arith.mulf %31, %32 : vector<32x32xf32>
    %34 = vector.broadcast %13 : vector<1x32xf32> to vector<32x32xf32>
    %35 = arith.addf %33, %34 : vector<32x32xf32>
    %c0_18 = arith.constant 0 : index
    %c0_19 = arith.constant 0 : index
    %36 = vector.load %arg7[%c0_18, %c0_19] : memref<32x96xbf16, #tpu.memory_space<vmem>>, vector<32x96xbf16>
    %37 = arith.truncf %35 : vector<32x32xf32> to vector<32x32xbf16>
    %cst_20 = arith.constant dense<0.000000e+00> : vector<32x96xf32>
    %38 = tpu.matmul %37, %36, %cst_20 {dimension_numbers = #tpu.dot_dimension_numbers<[1], [0], [0], [1], [0, 0, 1, 1], [], []>} : vector<32x32xbf16>, vector<32x96xbf16>, vector<32x96xf32> -> vector<32x96xf32>
    %c0_21 = arith.constant 0 : index
    %c0_22 = arith.constant 0 : index
    %39 = vector.load %arg8[%c0_21, %c0_22] : memref<1x96xf32, #tpu.memory_space<vmem>>, vector<1x96xf32>
    %40 = vector.broadcast %39 : vector<1x96xf32> to vector<32x96xf32>
    %41 = arith.addf %38, %40 : vector<32x96xf32>
    %42 = vector.extract_strided_slice %41 {offsets = [0, 0], sizes = [16, 96], strides = [1, 1]} : vector<32x96xf32> to vector<16x96xf32>
    %43 = vector.extract_strided_slice %42 {offsets = [0, 0], sizes = [16, 16], strides = [1, 1]} : vector<16x96xf32> to vector<16x16xf32>
    %cst_23 = arith.constant 2.500000e-01 : f32
    %44 = vector.broadcast %cst_23 : f32 to vector<16x16xf32>
    %45 = arith.mulf %43, %44 : vector<16x16xf32>
    %46 = vector.extract_strided_slice %42 {offsets = [0, 32], sizes = [16, 16], strides = [1, 1]} : vector<16x96xf32> to vector<16x16xf32>
    %47 = vector.extract_strided_slice %42 {offsets = [0, 64], sizes = [16, 16], strides = [1, 1]} : vector<16x96xf32> to vector<16x16xf32>
    %48 = arith.truncf %45 : vector<16x16xf32> to vector<16x16xbf16>
    %49 = arith.truncf %46 : vector<16x16xf32> to vector<16x16xbf16>
    %cst_24 = arith.constant dense<0.000000e+00> : vector<16x16xf32>
    %50 = tpu.matmul %48, %49, %cst_24 {dimension_numbers = #tpu.dot_dimension_numbers<[1], [1], [0], [0], [0, 0, 1, 0], [], []>} : vector<16x16xbf16>, vector<16x16xbf16>, vector<16x16xf32> -> vector<16x16xf32>
    %cst_25 = arith.constant dense<0xFF800000> : vector<16xf32>
    %51 = vector.multi_reduction <maximumf>, %50, %cst_25 [1] : vector<16x16xf32> to vector<16xf32>
    %52 = vector.shape_cast %51 : vector<16xf32> to vector<16x1xf32>
    %53 = vector.broadcast %52 : vector<16x1xf32> to vector<16x16xf32>
    %54 = arith.subf %50, %53 : vector<16x16xf32>
    %55 = math.exp %54 : vector<16x16xf32>
    %cst_26 = arith.constant dense<0.000000e+00> : vector<16xf32>
    %56 = vector.multi_reduction <add>, %55, %cst_26 [1] : vector<16x16xf32> to vector<16xf32>
    %57 = vector.shape_cast %56 : vector<16xf32> to vector<16x1xf32>
    %58 = tpu.reciprocal %57 {approx = true} : vector<16x1xf32> -> vector<16x1xf32>
    %59 = vector.broadcast %58 : vector<16x1xf32> to vector<16x16xf32>
    %60 = arith.mulf %55, %59 : vector<16x16xf32>
    %61 = arith.truncf %60 : vector<16x16xf32> to vector<16x16xbf16>
    %62 = arith.truncf %47 : vector<16x16xf32> to vector<16x16xbf16>
    %cst_27 = arith.constant dense<0.000000e+00> : vector<16x16xf32>
    %63 = tpu.matmul %61, %62, %cst_27 {dimension_numbers = #tpu.dot_dimension_numbers<[1], [0], [0], [1], [0, 0, 1, 1], [], []>} : vector<16x16xbf16>, vector<16x16xbf16>, vector<16x16xf32> -> vector<16x16xf32>
    %64 = vector.extract_strided_slice %42 {offsets = [0, 16], sizes = [16, 16], strides = [1, 1]} : vector<16x96xf32> to vector<16x16xf32>
    %cst_28 = arith.constant 2.500000e-01 : f32
    %65 = vector.broadcast %cst_28 : f32 to vector<16x16xf32>
    %66 = arith.mulf %64, %65 : vector<16x16xf32>
    %67 = vector.extract_strided_slice %42 {offsets = [0, 48], sizes = [16, 16], strides = [1, 1]} : vector<16x96xf32> to vector<16x16xf32>
    %68 = vector.extract_strided_slice %42 {offsets = [0, 80], sizes = [16, 16], strides = [1, 1]} : vector<16x96xf32> to vector<16x16xf32>
    %69 = arith.truncf %66 : vector<16x16xf32> to vector<16x16xbf16>
    %70 = arith.truncf %67 : vector<16x16xf32> to vector<16x16xbf16>
    %cst_29 = arith.constant dense<0.000000e+00> : vector<16x16xf32>
    %71 = tpu.matmul %69, %70, %cst_29 {dimension_numbers = #tpu.dot_dimension_numbers<[1], [1], [0], [0], [0, 0, 1, 0], [], []>} : vector<16x16xbf16>, vector<16x16xbf16>, vector<16x16xf32> -> vector<16x16xf32>
    %cst_30 = arith.constant dense<0xFF800000> : vector<16xf32>
    %72 = vector.multi_reduction <maximumf>, %71, %cst_30 [1] : vector<16x16xf32> to vector<16xf32>
    %73 = vector.shape_cast %72 : vector<16xf32> to vector<16x1xf32>
    %74 = vector.broadcast %73 : vector<16x1xf32> to vector<16x16xf32>
    %75 = arith.subf %71, %74 : vector<16x16xf32>
    %76 = math.exp %75 : vector<16x16xf32>
    %cst_31 = arith.constant dense<0.000000e+00> : vector<16xf32>
    %77 = vector.multi_reduction <add>, %76, %cst_31 [1] : vector<16x16xf32> to vector<16xf32>
    %78 = vector.shape_cast %77 : vector<16xf32> to vector<16x1xf32>
    %79 = tpu.reciprocal %78 {approx = true} : vector<16x1xf32> -> vector<16x1xf32>
    %80 = vector.broadcast %79 : vector<16x1xf32> to vector<16x16xf32>
    %81 = arith.mulf %76, %80 : vector<16x16xf32>
    %82 = arith.truncf %81 : vector<16x16xf32> to vector<16x16xbf16>
    %83 = arith.truncf %68 : vector<16x16xf32> to vector<16x16xbf16>
    %cst_32 = arith.constant dense<0.000000e+00> : vector<16x16xf32>
    %84 = tpu.matmul %82, %83, %cst_32 {dimension_numbers = #tpu.dot_dimension_numbers<[1], [0], [0], [1], [0, 0, 1, 1], [], []>} : vector<16x16xbf16>, vector<16x16xbf16>, vector<16x16xf32> -> vector<16x16xf32>
    %85 = tpu.concatenate %63, %84 in 1 : vector<16x16xf32>, vector<16x16xf32> -> vector<16x32xf32>
    %86 = vector.extract_strided_slice %41 {offsets = [16, 0], sizes = [16, 96], strides = [1, 1]} : vector<32x96xf32> to vector<16x96xf32>
    %87 = vector.extract_strided_slice %86 {offsets = [0, 0], sizes = [16, 16], strides = [1, 1]} : vector<16x96xf32> to vector<16x16xf32>
    %cst_33 = arith.constant 2.500000e-01 : f32
    %88 = vector.broadcast %cst_33 : f32 to vector<16x16xf32>
    %89 = arith.mulf %87, %88 : vector<16x16xf32>
    %90 = vector.extract_strided_slice %86 {offsets = [0, 32], sizes = [16, 16], strides = [1, 1]} : vector<16x96xf32> to vector<16x16xf32>
    %91 = vector.extract_strided_slice %86 {offsets = [0, 64], sizes = [16, 16], strides = [1, 1]} : vector<16x96xf32> to vector<16x16xf32>
    %92 = arith.truncf %89 : vector<16x16xf32> to vector<16x16xbf16>
    %93 = arith.truncf %90 : vector<16x16xf32> to vector<16x16xbf16>
    %cst_34 = arith.constant dense<0.000000e+00> : vector<16x16xf32>
    %94 = tpu.matmul %92, %93, %cst_34 {dimension_numbers = #tpu.dot_dimension_numbers<[1], [1], [0], [0], [0, 0, 1, 0], [], []>} : vector<16x16xbf16>, vector<16x16xbf16>, vector<16x16xf32> -> vector<16x16xf32>
    %cst_35 = arith.constant dense<0xFF800000> : vector<16xf32>
    %95 = vector.multi_reduction <maximumf>, %94, %cst_35 [1] : vector<16x16xf32> to vector<16xf32>
    %96 = vector.shape_cast %95 : vector<16xf32> to vector<16x1xf32>
    %97 = vector.broadcast %96 : vector<16x1xf32> to vector<16x16xf32>
    %98 = arith.subf %94, %97 : vector<16x16xf32>
    %99 = math.exp %98 : vector<16x16xf32>
    %cst_36 = arith.constant dense<0.000000e+00> : vector<16xf32>
    %100 = vector.multi_reduction <add>, %99, %cst_36 [1] : vector<16x16xf32> to vector<16xf32>
    %101 = vector.shape_cast %100 : vector<16xf32> to vector<16x1xf32>
    %102 = tpu.reciprocal %101 {approx = true} : vector<16x1xf32> -> vector<16x1xf32>
    %103 = vector.broadcast %102 : vector<16x1xf32> to vector<16x16xf32>
    %104 = arith.mulf %99, %103 : vector<16x16xf32>
    %105 = arith.truncf %104 : vector<16x16xf32> to vector<16x16xbf16>
    %106 = arith.truncf %91 : vector<16x16xf32> to vector<16x16xbf16>
    %cst_37 = arith.constant dense<0.000000e+00> : vector<16x16xf32>
    %107 = tpu.matmul %105, %106, %cst_37 {dimension_numbers = #tpu.dot_dimension_numbers<[1], [0], [0], [1], [0, 0, 1, 1], [], []>} : vector<16x16xbf16>, vector<16x16xbf16>, vector<16x16xf32> -> vector<16x16xf32>
    %108 = vector.extract_strided_slice %86 {offsets = [0, 16], sizes = [16, 16], strides = [1, 1]} : vector<16x96xf32> to vector<16x16xf32>
    %cst_38 = arith.constant 2.500000e-01 : f32
    %109 = vector.broadcast %cst_38 : f32 to vector<16x16xf32>
    %110 = arith.mulf %108, %109 : vector<16x16xf32>
    %111 = vector.extract_strided_slice %86 {offsets = [0, 48], sizes = [16, 16], strides = [1, 1]} : vector<16x96xf32> to vector<16x16xf32>
    %112 = vector.extract_strided_slice %86 {offsets = [0, 80], sizes = [16, 16], strides = [1, 1]} : vector<16x96xf32> to vector<16x16xf32>
    %113 = arith.truncf %110 : vector<16x16xf32> to vector<16x16xbf16>
    %114 = arith.truncf %111 : vector<16x16xf32> to vector<16x16xbf16>
    %cst_39 = arith.constant dense<0.000000e+00> : vector<16x16xf32>
    %115 = tpu.matmul %113, %114, %cst_39 {dimension_numbers = #tpu.dot_dimension_numbers<[1], [1], [0], [0], [0, 0, 1, 0], [], []>} : vector<16x16xbf16>, vector<16x16xbf16>, vector<16x16xf32> -> vector<16x16xf32>
    %cst_40 = arith.constant dense<0xFF800000> : vector<16xf32>
    %116 = vector.multi_reduction <maximumf>, %115, %cst_40 [1] : vector<16x16xf32> to vector<16xf32>
    %117 = vector.shape_cast %116 : vector<16xf32> to vector<16x1xf32>
    %118 = vector.broadcast %117 : vector<16x1xf32> to vector<16x16xf32>
    %119 = arith.subf %115, %118 : vector<16x16xf32>
    %120 = math.exp %119 : vector<16x16xf32>
    %cst_41 = arith.constant dense<0.000000e+00> : vector<16xf32>
    %121 = vector.multi_reduction <add>, %120, %cst_41 [1] : vector<16x16xf32> to vector<16xf32>
    %122 = vector.shape_cast %121 : vector<16xf32> to vector<16x1xf32>
    %123 = tpu.reciprocal %122 {approx = true} : vector<16x1xf32> -> vector<16x1xf32>
    %124 = vector.broadcast %123 : vector<16x1xf32> to vector<16x16xf32>
    %125 = arith.mulf %120, %124 : vector<16x16xf32>
    %126 = arith.truncf %125 : vector<16x16xf32> to vector<16x16xbf16>
    %127 = arith.truncf %112 : vector<16x16xf32> to vector<16x16xbf16>
    %cst_42 = arith.constant dense<0.000000e+00> : vector<16x16xf32>
    %128 = tpu.matmul %126, %127, %cst_42 {dimension_numbers = #tpu.dot_dimension_numbers<[1], [0], [0], [1], [0, 0, 1, 1], [], []>} : vector<16x16xbf16>, vector<16x16xbf16>, vector<16x16xf32> -> vector<16x16xf32>
    %129 = tpu.concatenate %107, %128 in 1 : vector<16x16xf32>, vector<16x16xf32> -> vector<16x32xf32>
    %130 = tpu.concatenate %85, %129 in 0 : vector<16x32xf32>, vector<16x32xf32> -> vector<32x32xf32>
    %c0_43 = arith.constant 0 : index
    %c0_44 = arith.constant 0 : index
    %131 = vector.load %arg9[%c0_43, %c0_44] : memref<32x32xbf16, #tpu.memory_space<vmem>>, vector<32x32xbf16>
    %132 = arith.truncf %130 : vector<32x32xf32> to vector<32x32xbf16>
    %cst_45 = arith.constant dense<0.000000e+00> : vector<32x32xf32>
    %133 = tpu.matmul %132, %131, %cst_45 {dimension_numbers = #tpu.dot_dimension_numbers<[1], [0], [0], [1], [0, 0, 1, 1], [], []>} : vector<32x32xbf16>, vector<32x32xbf16>, vector<32x32xf32> -> vector<32x32xf32>
    %134 = arith.addf %11, %133 : vector<32x32xf32>
    %c0_46 = arith.constant 0 : index
    %c0_47 = arith.constant 0 : index
    %135 = vector.load %arg10[%c0_46, %c0_47] : memref<1x32xf32, #tpu.memory_space<vmem>>, vector<1x32xf32>
    %136 = vector.broadcast %135 : vector<1x32xf32> to vector<32x32xf32>
    %137 = arith.addf %134, %136 : vector<32x32xf32>
    %c0_48 = arith.constant 0 : index
    %c0_49 = arith.constant 0 : index
    %138 = vector.load %arg11[%c0_48, %c0_49] : memref<1x32xf32, #tpu.memory_space<vmem>>, vector<1x32xf32>
    %c0_50 = arith.constant 0 : index
    %c0_51 = arith.constant 0 : index
    %139 = vector.load %arg12[%c0_50, %c0_51] : memref<1x32xf32, #tpu.memory_space<vmem>>, vector<1x32xf32>
    %cst_52 = arith.constant dense<0.000000e+00> : vector<32xf32>
    %140 = vector.multi_reduction <add>, %137, %cst_52 [1] : vector<32x32xf32> to vector<32xf32>
    %141 = vector.shape_cast %140 : vector<32xf32> to vector<32x1xf32>
    %cst_53 = arith.constant 3.125000e-02 : f32
    %142 = vector.broadcast %cst_53 : f32 to vector<32x1xf32>
    %143 = arith.mulf %141, %142 : vector<32x1xf32>
    %144 = arith.mulf %137, %137 : vector<32x32xf32>
    %cst_54 = arith.constant dense<0.000000e+00> : vector<32xf32>
    %145 = vector.multi_reduction <add>, %144, %cst_54 [1] : vector<32x32xf32> to vector<32xf32>
    %146 = vector.shape_cast %145 : vector<32xf32> to vector<32x1xf32>
    %cst_55 = arith.constant 3.125000e-02 : f32
    %147 = vector.broadcast %cst_55 : f32 to vector<32x1xf32>
    %148 = arith.mulf %146, %147 : vector<32x1xf32>
    %149 = arith.mulf %143, %143 : vector<32x1xf32>
    %150 = arith.subf %148, %149 : vector<32x1xf32>
    %151 = vector.broadcast %143 : vector<32x1xf32> to vector<32x32xf32>
    %152 = arith.subf %137, %151 : vector<32x32xf32>
    %cst_56 = arith.constant 9.99999997E-7 : f32
    %153 = vector.broadcast %cst_56 : f32 to vector<32x1xf32>
    %154 = arith.addf %150, %153 : vector<32x1xf32>
    %155 = math.rsqrt %154 : vector<32x1xf32>
    %156 = vector.broadcast %155 : vector<32x1xf32> to vector<32x32xf32>
    %157 = arith.mulf %152, %156 : vector<32x32xf32>
    %158 = vector.broadcast %138 : vector<1x32xf32> to vector<32x32xf32>
    %159 = arith.mulf %157, %158 : vector<32x32xf32>
    %160 = vector.broadcast %139 : vector<1x32xf32> to vector<32x32xf32>
    %161 = arith.addf %159, %160 : vector<32x32xf32>
    %c0_57 = arith.constant 0 : index
    %c0_58 = arith.constant 0 : index
    %162 = vector.load %arg13[%c0_57, %c0_58] : memref<32x128xbf16, #tpu.memory_space<vmem>>, vector<32x128xbf16>
    %163 = arith.truncf %161 : vector<32x32xf32> to vector<32x32xbf16>
    %cst_59 = arith.constant dense<0.000000e+00> : vector<32x128xf32>
    %164 = tpu.matmul %163, %162, %cst_59 {dimension_numbers = #tpu.dot_dimension_numbers<[1], [0], [0], [1], [0, 0, 1, 1], [], []>} : vector<32x32xbf16>, vector<32x128xbf16>, vector<32x128xf32> -> vector<32x128xf32>
    %c0_60 = arith.constant 0 : index
    %c0_61 = arith.constant 0 : index
    %165 = vector.load %arg14[%c0_60, %c0_61] : memref<1x128xf32, #tpu.memory_space<vmem>>, vector<1x128xf32>
    %166 = vector.broadcast %165 : vector<1x128xf32> to vector<32x128xf32>
    %167 = arith.addf %164, %166 : vector<32x128xf32>
    %cst_62 = arith.constant 5.000000e-01 : f32
    %168 = vector.broadcast %cst_62 : f32 to vector<32x128xf32>
    %169 = arith.mulf %168, %167 : vector<32x128xf32>
    %cst_63 = arith.constant 4.471500e-02 : f32
    %170 = vector.broadcast %cst_63 : f32 to vector<32x128xf32>
    %171 = arith.mulf %170, %167 : vector<32x128xf32>
    %172 = arith.mulf %171, %167 : vector<32x128xf32>
    %173 = arith.mulf %172, %167 : vector<32x128xf32>
    %174 = arith.addf %167, %173 : vector<32x128xf32>
    %cst_64 = arith.constant 0.797884583 : f32
    %175 = vector.broadcast %cst_64 : f32 to vector<32x128xf32>
    %176 = arith.mulf %175, %174 : vector<32x128xf32>
    %177 = math.tanh %176 : vector<32x128xf32>
    %cst_65 = arith.constant 1.000000e+00 : f32
    %178 = vector.broadcast %cst_65 : f32 to vector<32x128xf32>
    %179 = arith.addf %178, %177 : vector<32x128xf32>
    %180 = arith.mulf %169, %179 : vector<32x128xf32>
    %c0_66 = arith.constant 0 : index
    %c0_67 = arith.constant 0 : index
    %181 = vector.load %arg15[%c0_66, %c0_67] : memref<128x32xbf16, #tpu.memory_space<vmem>>, vector<128x32xbf16>
    %182 = arith.truncf %180 : vector<32x128xf32> to vector<32x128xbf16>
    %cst_68 = arith.constant dense<0.000000e+00> : vector<32x32xf32>
    %183 = tpu.matmul %182, %181, %cst_68 {dimension_numbers = #tpu.dot_dimension_numbers<[1], [0], [0], [1], [0, 0, 1, 1], [], []>} : vector<32x128xbf16>, vector<128x32xbf16>, vector<32x32xf32> -> vector<32x32xf32>
    %184 = arith.addf %137, %183 : vector<32x32xf32>
    %c0_69 = arith.constant 0 : index
    %c0_70 = arith.constant 0 : index
    %185 = vector.load %arg16[%c0_69, %c0_70] : memref<1x32xf32, #tpu.memory_space<vmem>>, vector<1x32xf32>
    %186 = vector.broadcast %185 : vector<1x32xf32> to vector<32x32xf32>
    %187 = arith.addf %184, %186 : vector<32x32xf32>
    %c0_71 = arith.constant 0 : index
    %c0_72 = arith.constant 0 : index
    %188 = vector.load %arg17[%c0_71, %c0_72] : memref<32x16xbf16, #tpu.memory_space<vmem>>, vector<32x16xbf16>
    %189 = arith.truncf %187 : vector<32x32xf32> to vector<32x32xbf16>
    %cst_73 = arith.constant dense<0.000000e+00> : vector<32x16xf32>
    %190 = tpu.matmul %189, %188, %cst_73 {dimension_numbers = #tpu.dot_dimension_numbers<[1], [0], [0], [1], [0, 0, 1, 1], [], []>} : vector<32x32xbf16>, vector<32x16xbf16>, vector<32x16xf32> -> vector<32x16xf32>
    %c0_74 = arith.constant 0 : index
    %c0_75 = arith.constant 0 : index
    %191 = vector.load %arg18[%c0_74, %c0_75] : memref<1x16xf32, #tpu.memory_space<vmem>>, vector<1x16xf32>
    %c0_76 = arith.constant 0 : index
    %c0_77 = arith.constant 0 : index
    %192 = vector.load %arg19[%c0_76, %c0_77] : memref<1x16xf32, #tpu.memory_space<vmem>>, vector<1x16xf32>
    %cst_78 = arith.constant dense<0.000000e+00> : vector<32xf32>
    %193 = vector.multi_reduction <add>, %190, %cst_78 [1] : vector<32x16xf32> to vector<32xf32>
    %194 = vector.shape_cast %193 : vector<32xf32> to vector<32x1xf32>
    %cst_79 = arith.constant 6.250000e-02 : f32
    %195 = vector.broadcast %cst_79 : f32 to vector<32x1xf32>
    %196 = arith.mulf %194, %195 : vector<32x1xf32>
    %197 = arith.mulf %190, %190 : vector<32x16xf32>
    %cst_80 = arith.constant dense<0.000000e+00> : vector<32xf32>
    %198 = vector.multi_reduction <add>, %197, %cst_80 [1] : vector<32x16xf32> to vector<32xf32>
    %199 = vector.shape_cast %198 : vector<32xf32> to vector<32x1xf32>
    %cst_81 = arith.constant 6.250000e-02 : f32
    %200 = vector.broadcast %cst_81 : f32 to vector<32x1xf32>
    %201 = arith.mulf %199, %200 : vector<32x1xf32>
    %202 = arith.mulf %196, %196 : vector<32x1xf32>
    %203 = arith.subf %201, %202 : vector<32x1xf32>
    %204 = vector.broadcast %196 : vector<32x1xf32> to vector<32x16xf32>
    %205 = arith.subf %190, %204 : vector<32x16xf32>
    %cst_82 = arith.constant 9.99999997E-7 : f32
    %206 = vector.broadcast %cst_82 : f32 to vector<32x1xf32>
    %207 = arith.addf %203, %206 : vector<32x1xf32>
    %208 = math.rsqrt %207 : vector<32x1xf32>
    %209 = vector.broadcast %208 : vector<32x1xf32> to vector<32x16xf32>
    %210 = arith.mulf %205, %209 : vector<32x16xf32>
    %211 = vector.broadcast %191 : vector<1x16xf32> to vector<32x16xf32>
    %212 = arith.mulf %210, %211 : vector<32x16xf32>
    %213 = vector.broadcast %192 : vector<1x16xf32> to vector<32x16xf32>
    %214 = arith.addf %212, %213 : vector<32x16xf32>
    %215 = vector.extract_strided_slice %214 {offsets = [0, 0], sizes = [16, 16], strides = [1, 1]} : vector<32x16xf32> to vector<16x16xf32>
    %c0_83 = arith.constant 0 : index
    %c0_84 = arith.constant 0 : index
    %216 = vector.load %arg20[%c0_83, %c0_84] : memref<144x16xbf16, #tpu.memory_space<vmem>>, vector<16x16xbf16>
    %c0_85 = arith.constant 0 : index
    %c0_86 = arith.constant 0 : index
    %217 = vector.load %arg21[%c0_85, %c0_86] : memref<144x16xbf16, #tpu.memory_space<vmem>>, vector<16x16xbf16>
    %218 = arith.truncf %215 : vector<16x16xf32> to vector<16x16xbf16>
    %cst_87 = arith.constant dense<0.000000e+00> : vector<16x16xf32>
    %219 = tpu.matmul %216, %218, %cst_87 {dimension_numbers = #tpu.dot_dimension_numbers<[1], [0], [0], [1], [0, 0, 1, 1], [], []>} : vector<16x16xbf16>, vector<16x16xbf16>, vector<16x16xf32> -> vector<16x16xf32>
    %220 = arith.truncf %219 : vector<16x16xf32> to vector<16x16xbf16>
    %cst_88 = arith.constant dense<0.000000e+00> : vector<16x16xf32>
    %221 = tpu.matmul %220, %217, %cst_88 {dimension_numbers = #tpu.dot_dimension_numbers<[1], [0], [0], [1], [0, 0, 1, 1], [], []>} : vector<16x16xbf16>, vector<16x16xbf16>, vector<16x16xf32> -> vector<16x16xf32>
    %c16 = arith.constant 16 : index
    %c0_89 = arith.constant 0 : index
    %222 = vector.load %arg20[%c16, %c0_89] : memref<144x16xbf16, #tpu.memory_space<vmem>>, vector<16x16xbf16>
    %c16_90 = arith.constant 16 : index
    %c0_91 = arith.constant 0 : index
    %223 = vector.load %arg21[%c16_90, %c0_91] : memref<144x16xbf16, #tpu.memory_space<vmem>>, vector<16x16xbf16>
    %224 = arith.truncf %215 : vector<16x16xf32> to vector<16x16xbf16>
    %cst_92 = arith.constant dense<0.000000e+00> : vector<16x16xf32>
    %225 = tpu.matmul %222, %224, %cst_92 {dimension_numbers = #tpu.dot_dimension_numbers<[1], [0], [0], [1], [0, 0, 1, 1], [], []>} : vector<16x16xbf16>, vector<16x16xbf16>, vector<16x16xf32> -> vector<16x16xf32>
    %226 = arith.truncf %225 : vector<16x16xf32> to vector<16x16xbf16>
    %cst_93 = arith.constant dense<0.000000e+00> : vector<16x16xf32>
    %227 = tpu.matmul %226, %223, %cst_93 {dimension_numbers = #tpu.dot_dimension_numbers<[1], [0], [0], [1], [0, 0, 1, 1], [], []>} : vector<16x16xbf16>, vector<16x16xbf16>, vector<16x16xf32> -> vector<16x16xf32>
    %228 = arith.addf %221, %227 : vector<16x16xf32>
    %c32 = arith.constant 32 : index
    %c0_94 = arith.constant 0 : index
    %229 = vector.load %arg20[%c32, %c0_94] : memref<144x16xbf16, #tpu.memory_space<vmem>>, vector<16x16xbf16>
    %c32_95 = arith.constant 32 : index
    %c0_96 = arith.constant 0 : index
    %230 = vector.load %arg21[%c32_95, %c0_96] : memref<144x16xbf16, #tpu.memory_space<vmem>>, vector<16x16xbf16>
    %231 = arith.truncf %215 : vector<16x16xf32> to vector<16x16xbf16>
    %cst_97 = arith.constant dense<0.000000e+00> : vector<16x16xf32>
    %232 = tpu.matmul %229, %231, %cst_97 {dimension_numbers = #tpu.dot_dimension_numbers<[1], [0], [0], [1], [0, 0, 1, 1], [], []>} : vector<16x16xbf16>, vector<16x16xbf16>, vector<16x16xf32> -> vector<16x16xf32>
    %233 = arith.truncf %232 : vector<16x16xf32> to vector<16x16xbf16>
    %cst_98 = arith.constant dense<0.000000e+00> : vector<16x16xf32>
    %234 = tpu.matmul %233, %230, %cst_98 {dimension_numbers = #tpu.dot_dimension_numbers<[1], [0], [0], [1], [0, 0, 1, 1], [], []>} : vector<16x16xbf16>, vector<16x16xbf16>, vector<16x16xf32> -> vector<16x16xf32>
    %235 = arith.addf %228, %234 : vector<16x16xf32>
    %c48 = arith.constant 48 : index
    %c0_99 = arith.constant 0 : index
    %236 = vector.load %arg20[%c48, %c0_99] : memref<144x16xbf16, #tpu.memory_space<vmem>>, vector<16x16xbf16>
    %c48_100 = arith.constant 48 : index
    %c0_101 = arith.constant 0 : index
    %237 = vector.load %arg21[%c48_100, %c0_101] : memref<144x16xbf16, #tpu.memory_space<vmem>>, vector<16x16xbf16>
    %238 = arith.truncf %215 : vector<16x16xf32> to vector<16x16xbf16>
    %cst_102 = arith.constant dense<0.000000e+00> : vector<16x16xf32>
    %239 = tpu.matmul %236, %238, %cst_102 {dimension_numbers = #tpu.dot_dimension_numbers<[1], [0], [0], [1], [0, 0, 1, 1], [], []>} : vector<16x16xbf16>, vector<16x16xbf16>, vector<16x16xf32> -> vector<16x16xf32>
    %240 = arith.truncf %239 : vector<16x16xf32> to vector<16x16xbf16>
    %cst_103 = arith.constant dense<0.000000e+00> : vector<16x16xf32>
    %241 = tpu.matmul %240, %237, %cst_103 {dimension_numbers = #tpu.dot_dimension_numbers<[1], [0], [0], [1], [0, 0, 1, 1], [], []>} : vector<16x16xbf16>, vector<16x16xbf16>, vector<16x16xf32> -> vector<16x16xf32>
    %242 = arith.addf %235, %241 : vector<16x16xf32>
    %c64 = arith.constant 64 : index
    %c0_104 = arith.constant 0 : index
    %243 = vector.load %arg20[%c64, %c0_104] : memref<144x16xbf16, #tpu.memory_space<vmem>>, vector<16x16xbf16>
    %c64_105 = arith.constant 64 : index
    %c0_106 = arith.constant 0 : index
    %244 = vector.load %arg21[%c64_105, %c0_106] : memref<144x16xbf16, #tpu.memory_space<vmem>>, vector<16x16xbf16>
    %245 = arith.truncf %215 : vector<16x16xf32> to vector<16x16xbf16>
    %cst_107 = arith.constant dense<0.000000e+00> : vector<16x16xf32>
    %246 = tpu.matmul %243, %245, %cst_107 {dimension_numbers = #tpu.dot_dimension_numbers<[1], [0], [0], [1], [0, 0, 1, 1], [], []>} : vector<16x16xbf16>, vector<16x16xbf16>, vector<16x16xf32> -> vector<16x16xf32>
    %247 = arith.truncf %246 : vector<16x16xf32> to vector<16x16xbf16>
    %cst_108 = arith.constant dense<0.000000e+00> : vector<16x16xf32>
    %248 = tpu.matmul %247, %244, %cst_108 {dimension_numbers = #tpu.dot_dimension_numbers<[1], [0], [0], [1], [0, 0, 1, 1], [], []>} : vector<16x16xbf16>, vector<16x16xbf16>, vector<16x16xf32> -> vector<16x16xf32>
    %249 = arith.addf %242, %248 : vector<16x16xf32>
    %c80 = arith.constant 80 : index
    %c0_109 = arith.constant 0 : index
    %250 = vector.load %arg20[%c80, %c0_109] : memref<144x16xbf16, #tpu.memory_space<vmem>>, vector<16x16xbf16>
    %c80_110 = arith.constant 80 : index
    %c0_111 = arith.constant 0 : index
    %251 = vector.load %arg21[%c80_110, %c0_111] : memref<144x16xbf16, #tpu.memory_space<vmem>>, vector<16x16xbf16>
    %252 = arith.truncf %215 : vector<16x16xf32> to vector<16x16xbf16>
    %cst_112 = arith.constant dense<0.000000e+00> : vector<16x16xf32>
    %253 = tpu.matmul %250, %252, %cst_112 {dimension_numbers = #tpu.dot_dimension_numbers<[1], [0], [0], [1], [0, 0, 1, 1], [], []>} : vector<16x16xbf16>, vector<16x16xbf16>, vector<16x16xf32> -> vector<16x16xf32>
    %254 = arith.truncf %253 : vector<16x16xf32> to vector<16x16xbf16>
    %cst_113 = arith.constant dense<0.000000e+00> : vector<16x16xf32>
    %255 = tpu.matmul %254, %251, %cst_113 {dimension_numbers = #tpu.dot_dimension_numbers<[1], [0], [0], [1], [0, 0, 1, 1], [], []>} : vector<16x16xbf16>, vector<16x16xbf16>, vector<16x16xf32> -> vector<16x16xf32>
    %256 = arith.addf %249, %255 : vector<16x16xf32>
    %c96 = arith.constant 96 : index
    %c0_114 = arith.constant 0 : index
    %257 = vector.load %arg20[%c96, %c0_114] : memref<144x16xbf16, #tpu.memory_space<vmem>>, vector<16x16xbf16>
    %c96_115 = arith.constant 96 : index
    %c0_116 = arith.constant 0 : index
    %258 = vector.load %arg21[%c96_115, %c0_116] : memref<144x16xbf16, #tpu.memory_space<vmem>>, vector<16x16xbf16>
    %259 = arith.truncf %215 : vector<16x16xf32> to vector<16x16xbf16>
    %cst_117 = arith.constant dense<0.000000e+00> : vector<16x16xf32>
    %260 = tpu.matmul %257, %259, %cst_117 {dimension_numbers = #tpu.dot_dimension_numbers<[1], [0], [0], [1], [0, 0, 1, 1], [], []>} : vector<16x16xbf16>, vector<16x16xbf16>, vector<16x16xf32> -> vector<16x16xf32>
    %261 = arith.truncf %260 : vector<16x16xf32> to vector<16x16xbf16>
    %cst_118 = arith.constant dense<0.000000e+00> : vector<16x16xf32>
    %262 = tpu.matmul %261, %258, %cst_118 {dimension_numbers = #tpu.dot_dimension_numbers<[1], [0], [0], [1], [0, 0, 1, 1], [], []>} : vector<16x16xbf16>, vector<16x16xbf16>, vector<16x16xf32> -> vector<16x16xf32>
    %263 = arith.addf %256, %262 : vector<16x16xf32>
    %c112 = arith.constant 112 : index
    %c0_119 = arith.constant 0 : index
    %264 = vector.load %arg20[%c112, %c0_119] : memref<144x16xbf16, #tpu.memory_space<vmem>>, vector<16x16xbf16>
    %c112_120 = arith.constant 112 : index
    %c0_121 = arith.constant 0 : index
    %265 = vector.load %arg21[%c112_120, %c0_121] : memref<144x16xbf16, #tpu.memory_space<vmem>>, vector<16x16xbf16>
    %266 = arith.truncf %215 : vector<16x16xf32> to vector<16x16xbf16>
    %cst_122 = arith.constant dense<0.000000e+00> : vector<16x16xf32>
    %267 = tpu.matmul %264, %266, %cst_122 {dimension_numbers = #tpu.dot_dimension_numbers<[1], [0], [0], [1], [0, 0, 1, 1], [], []>} : vector<16x16xbf16>, vector<16x16xbf16>, vector<16x16xf32> -> vector<16x16xf32>
    %268 = arith.truncf %267 : vector<16x16xf32> to vector<16x16xbf16>
    %cst_123 = arith.constant dense<0.000000e+00> : vector<16x16xf32>
    %269 = tpu.matmul %268, %265, %cst_123 {dimension_numbers = #tpu.dot_dimension_numbers<[1], [0], [0], [1], [0, 0, 1, 1], [], []>} : vector<16x16xbf16>, vector<16x16xbf16>, vector<16x16xf32> -> vector<16x16xf32>
    %270 = arith.addf %263, %269 : vector<16x16xf32>
    %c128 = arith.constant 128 : index
    %c0_124 = arith.constant 0 : index
    %271 = vector.load %arg20[%c128, %c0_124] : memref<144x16xbf16, #tpu.memory_space<vmem>>, vector<16x16xbf16>
    %c128_125 = arith.constant 128 : index
    %c0_126 = arith.constant 0 : index
    %272 = vector.load %arg21[%c128_125, %c0_126] : memref<144x16xbf16, #tpu.memory_space<vmem>>, vector<16x16xbf16>
    %273 = arith.truncf %215 : vector<16x16xf32> to vector<16x16xbf16>
    %cst_127 = arith.constant dense<0.000000e+00> : vector<16x16xf32>
    %274 = tpu.matmul %271, %273, %cst_127 {dimension_numbers = #tpu.dot_dimension_numbers<[1], [0], [0], [1], [0, 0, 1, 1], [], []>} : vector<16x16xbf16>, vector<16x16xbf16>, vector<16x16xf32> -> vector<16x16xf32>
    %275 = arith.truncf %274 : vector<16x16xf32> to vector<16x16xbf16>
    %cst_128 = arith.constant dense<0.000000e+00> : vector<16x16xf32>
    %276 = tpu.matmul %275, %272, %cst_128 {dimension_numbers = #tpu.dot_dimension_numbers<[1], [0], [0], [1], [0, 0, 1, 1], [], []>} : vector<16x16xbf16>, vector<16x16xbf16>, vector<16x16xf32> -> vector<16x16xf32>
    %277 = arith.addf %270, %276 : vector<16x16xf32>
    %278 = vector.extract_strided_slice %214 {offsets = [16, 0], sizes = [16, 16], strides = [1, 1]} : vector<32x16xf32> to vector<16x16xf32>
    %c0_129 = arith.constant 0 : index
    %c0_130 = arith.constant 0 : index
    %279 = vector.load %arg20[%c0_129, %c0_130] : memref<144x16xbf16, #tpu.memory_space<vmem>>, vector<16x16xbf16>
    %c0_131 = arith.constant 0 : index
    %c0_132 = arith.constant 0 : index
    %280 = vector.load %arg21[%c0_131, %c0_132] : memref<144x16xbf16, #tpu.memory_space<vmem>>, vector<16x16xbf16>
    %281 = arith.truncf %278 : vector<16x16xf32> to vector<16x16xbf16>
    %cst_133 = arith.constant dense<0.000000e+00> : vector<16x16xf32>
    %282 = tpu.matmul %279, %281, %cst_133 {dimension_numbers = #tpu.dot_dimension_numbers<[1], [0], [0], [1], [0, 0, 1, 1], [], []>} : vector<16x16xbf16>, vector<16x16xbf16>, vector<16x16xf32> -> vector<16x16xf32>
    %283 = arith.truncf %282 : vector<16x16xf32> to vector<16x16xbf16>
    %cst_134 = arith.constant dense<0.000000e+00> : vector<16x16xf32>
    %284 = tpu.matmul %283, %280, %cst_134 {dimension_numbers = #tpu.dot_dimension_numbers<[1], [0], [0], [1], [0, 0, 1, 1], [], []>} : vector<16x16xbf16>, vector<16x16xbf16>, vector<16x16xf32> -> vector<16x16xf32>
    %c16_135 = arith.constant 16 : index
    %c0_136 = arith.constant 0 : index
    %285 = vector.load %arg20[%c16_135, %c0_136] : memref<144x16xbf16, #tpu.memory_space<vmem>>, vector<16x16xbf16>
    %c16_137 = arith.constant 16 : index
    %c0_138 = arith.constant 0 : index
    %286 = vector.load %arg21[%c16_137, %c0_138] : memref<144x16xbf16, #tpu.memory_space<vmem>>, vector<16x16xbf16>
    %287 = arith.truncf %278 : vector<16x16xf32> to vector<16x16xbf16>
    %cst_139 = arith.constant dense<0.000000e+00> : vector<16x16xf32>
    %288 = tpu.matmul %285, %287, %cst_139 {dimension_numbers = #tpu.dot_dimension_numbers<[1], [0], [0], [1], [0, 0, 1, 1], [], []>} : vector<16x16xbf16>, vector<16x16xbf16>, vector<16x16xf32> -> vector<16x16xf32>
    %289 = arith.truncf %288 : vector<16x16xf32> to vector<16x16xbf16>
    %cst_140 = arith.constant dense<0.000000e+00> : vector<16x16xf32>
    %290 = tpu.matmul %289, %286, %cst_140 {dimension_numbers = #tpu.dot_dimension_numbers<[1], [0], [0], [1], [0, 0, 1, 1], [], []>} : vector<16x16xbf16>, vector<16x16xbf16>, vector<16x16xf32> -> vector<16x16xf32>
    %291 = arith.addf %284, %290 : vector<16x16xf32>
    %c32_141 = arith.constant 32 : index
    %c0_142 = arith.constant 0 : index
    %292 = vector.load %arg20[%c32_141, %c0_142] : memref<144x16xbf16, #tpu.memory_space<vmem>>, vector<16x16xbf16>
    %c32_143 = arith.constant 32 : index
    %c0_144 = arith.constant 0 : index
    %293 = vector.load %arg21[%c32_143, %c0_144] : memref<144x16xbf16, #tpu.memory_space<vmem>>, vector<16x16xbf16>
    %294 = arith.truncf %278 : vector<16x16xf32> to vector<16x16xbf16>
    %cst_145 = arith.constant dense<0.000000e+00> : vector<16x16xf32>
    %295 = tpu.matmul %292, %294, %cst_145 {dimension_numbers = #tpu.dot_dimension_numbers<[1], [0], [0], [1], [0, 0, 1, 1], [], []>} : vector<16x16xbf16>, vector<16x16xbf16>, vector<16x16xf32> -> vector<16x16xf32>
    %296 = arith.truncf %295 : vector<16x16xf32> to vector<16x16xbf16>
    %cst_146 = arith.constant dense<0.000000e+00> : vector<16x16xf32>
    %297 = tpu.matmul %296, %293, %cst_146 {dimension_numbers = #tpu.dot_dimension_numbers<[1], [0], [0], [1], [0, 0, 1, 1], [], []>} : vector<16x16xbf16>, vector<16x16xbf16>, vector<16x16xf32> -> vector<16x16xf32>
    %298 = arith.addf %291, %297 : vector<16x16xf32>
    %c48_147 = arith.constant 48 : index
    %c0_148 = arith.constant 0 : index
    %299 = vector.load %arg20[%c48_147, %c0_148] : memref<144x16xbf16, #tpu.memory_space<vmem>>, vector<16x16xbf16>
    %c48_149 = arith.constant 48 : index
    %c0_150 = arith.constant 0 : index
    %300 = vector.load %arg21[%c48_149, %c0_150] : memref<144x16xbf16, #tpu.memory_space<vmem>>, vector<16x16xbf16>
    %301 = arith.truncf %278 : vector<16x16xf32> to vector<16x16xbf16>
    %cst_151 = arith.constant dense<0.000000e+00> : vector<16x16xf32>
    %302 = tpu.matmul %299, %301, %cst_151 {dimension_numbers = #tpu.dot_dimension_numbers<[1], [0], [0], [1], [0, 0, 1, 1], [], []>} : vector<16x16xbf16>, vector<16x16xbf16>, vector<16x16xf32> -> vector<16x16xf32>
    %303 = arith.truncf %302 : vector<16x16xf32> to vector<16x16xbf16>
    %cst_152 = arith.constant dense<0.000000e+00> : vector<16x16xf32>
    %304 = tpu.matmul %303, %300, %cst_152 {dimension_numbers = #tpu.dot_dimension_numbers<[1], [0], [0], [1], [0, 0, 1, 1], [], []>} : vector<16x16xbf16>, vector<16x16xbf16>, vector<16x16xf32> -> vector<16x16xf32>
    %305 = arith.addf %298, %304 : vector<16x16xf32>
    %c64_153 = arith.constant 64 : index
    %c0_154 = arith.constant 0 : index
    %306 = vector.load %arg20[%c64_153, %c0_154] : memref<144x16xbf16, #tpu.memory_space<vmem>>, vector<16x16xbf16>
    %c64_155 = arith.constant 64 : index
    %c0_156 = arith.constant 0 : index
    %307 = vector.load %arg21[%c64_155, %c0_156] : memref<144x16xbf16, #tpu.memory_space<vmem>>, vector<16x16xbf16>
    %308 = arith.truncf %278 : vector<16x16xf32> to vector<16x16xbf16>
    %cst_157 = arith.constant dense<0.000000e+00> : vector<16x16xf32>
    %309 = tpu.matmul %306, %308, %cst_157 {dimension_numbers = #tpu.dot_dimension_numbers<[1], [0], [0], [1], [0, 0, 1, 1], [], []>} : vector<16x16xbf16>, vector<16x16xbf16>, vector<16x16xf32> -> vector<16x16xf32>
    %310 = arith.truncf %309 : vector<16x16xf32> to vector<16x16xbf16>
    %cst_158 = arith.constant dense<0.000000e+00> : vector<16x16xf32>
    %311 = tpu.matmul %310, %307, %cst_158 {dimension_numbers = #tpu.dot_dimension_numbers<[1], [0], [0], [1], [0, 0, 1, 1], [], []>} : vector<16x16xbf16>, vector<16x16xbf16>, vector<16x16xf32> -> vector<16x16xf32>
    %312 = arith.addf %305, %311 : vector<16x16xf32>
    %c80_159 = arith.constant 80 : index
    %c0_160 = arith.constant 0 : index
    %313 = vector.load %arg20[%c80_159, %c0_160] : memref<144x16xbf16, #tpu.memory_space<vmem>>, vector<16x16xbf16>
    %c80_161 = arith.constant 80 : index
    %c0_162 = arith.constant 0 : index
    %314 = vector.load %arg21[%c80_161, %c0_162] : memref<144x16xbf16, #tpu.memory_space<vmem>>, vector<16x16xbf16>
    %315 = arith.truncf %278 : vector<16x16xf32> to vector<16x16xbf16>
    %cst_163 = arith.constant dense<0.000000e+00> : vector<16x16xf32>
    %316 = tpu.matmul %313, %315, %cst_163 {dimension_numbers = #tpu.dot_dimension_numbers<[1], [0], [0], [1], [0, 0, 1, 1], [], []>} : vector<16x16xbf16>, vector<16x16xbf16>, vector<16x16xf32> -> vector<16x16xf32>
    %317 = arith.truncf %316 : vector<16x16xf32> to vector<16x16xbf16>
    %cst_164 = arith.constant dense<0.000000e+00> : vector<16x16xf32>
    %318 = tpu.matmul %317, %314, %cst_164 {dimension_numbers = #tpu.dot_dimension_numbers<[1], [0], [0], [1], [0, 0, 1, 1], [], []>} : vector<16x16xbf16>, vector<16x16xbf16>, vector<16x16xf32> -> vector<16x16xf32>
    %319 = arith.addf %312, %318 : vector<16x16xf32>
    %c96_165 = arith.constant 96 : index
    %c0_166 = arith.constant 0 : index
    %320 = vector.load %arg20[%c96_165, %c0_166] : memref<144x16xbf16, #tpu.memory_space<vmem>>, vector<16x16xbf16>
    %c96_167 = arith.constant 96 : index
    %c0_168 = arith.constant 0 : index
    %321 = vector.load %arg21[%c96_167, %c0_168] : memref<144x16xbf16, #tpu.memory_space<vmem>>, vector<16x16xbf16>
    %322 = arith.truncf %278 : vector<16x16xf32> to vector<16x16xbf16>
    %cst_169 = arith.constant dense<0.000000e+00> : vector<16x16xf32>
    %323 = tpu.matmul %320, %322, %cst_169 {dimension_numbers = #tpu.dot_dimension_numbers<[1], [0], [0], [1], [0, 0, 1, 1], [], []>} : vector<16x16xbf16>, vector<16x16xbf16>, vector<16x16xf32> -> vector<16x16xf32>
    %324 = arith.truncf %323 : vector<16x16xf32> to vector<16x16xbf16>
    %cst_170 = arith.constant dense<0.000000e+00> : vector<16x16xf32>
    %325 = tpu.matmul %324, %321, %cst_170 {dimension_numbers = #tpu.dot_dimension_numbers<[1], [0], [0], [1], [0, 0, 1, 1], [], []>} : vector<16x16xbf16>, vector<16x16xbf16>, vector<16x16xf32> -> vector<16x16xf32>
    %326 = arith.addf %319, %325 : vector<16x16xf32>
    %c112_171 = arith.constant 112 : index
    %c0_172 = arith.constant 0 : index
    %327 = vector.load %arg20[%c112_171, %c0_172] : memref<144x16xbf16, #tpu.memory_space<vmem>>, vector<16x16xbf16>
    %c112_173 = arith.constant 112 : index
    %c0_174 = arith.constant 0 : index
    %328 = vector.load %arg21[%c112_173, %c0_174] : memref<144x16xbf16, #tpu.memory_space<vmem>>, vector<16x16xbf16>
    %329 = arith.truncf %278 : vector<16x16xf32> to vector<16x16xbf16>
    %cst_175 = arith.constant dense<0.000000e+00> : vector<16x16xf32>
    %330 = tpu.matmul %327, %329, %cst_175 {dimension_numbers = #tpu.dot_dimension_numbers<[1], [0], [0], [1], [0, 0, 1, 1], [], []>} : vector<16x16xbf16>, vector<16x16xbf16>, vector<16x16xf32> -> vector<16x16xf32>
    %331 = arith.truncf %330 : vector<16x16xf32> to vector<16x16xbf16>
    %cst_176 = arith.constant dense<0.000000e+00> : vector<16x16xf32>
    %332 = tpu.matmul %331, %328, %cst_176 {dimension_numbers = #tpu.dot_dimension_numbers<[1], [0], [0], [1], [0, 0, 1, 1], [], []>} : vector<16x16xbf16>, vector<16x16xbf16>, vector<16x16xf32> -> vector<16x16xf32>
    %333 = arith.addf %326, %332 : vector<16x16xf32>
    %c128_177 = arith.constant 128 : index
    %c0_178 = arith.constant 0 : index
    %334 = vector.load %arg20[%c128_177, %c0_178] : memref<144x16xbf16, #tpu.memory_space<vmem>>, vector<16x16xbf16>
    %c128_179 = arith.constant 128 : index
    %c0_180 = arith.constant 0 : index
    %335 = vector.load %arg21[%c128_179, %c0_180] : memref<144x16xbf16, #tpu.memory_space<vmem>>, vector<16x16xbf16>
    %336 = arith.truncf %278 : vector<16x16xf32> to vector<16x16xbf16>
    %cst_181 = arith.constant dense<0.000000e+00> : vector<16x16xf32>
    %337 = tpu.matmul %334, %336, %cst_181 {dimension_numbers = #tpu.dot_dimension_numbers<[1], [0], [0], [1], [0, 0, 1, 1], [], []>} : vector<16x16xbf16>, vector<16x16xbf16>, vector<16x16xf32> -> vector<16x16xf32>
    %338 = arith.truncf %337 : vector<16x16xf32> to vector<16x16xbf16>
    %cst_182 = arith.constant dense<0.000000e+00> : vector<16x16xf32>
    %339 = tpu.matmul %338, %335, %cst_182 {dimension_numbers = #tpu.dot_dimension_numbers<[1], [0], [0], [1], [0, 0, 1, 1], [], []>} : vector<16x16xbf16>, vector<16x16xbf16>, vector<16x16xf32> -> vector<16x16xf32>
    %340 = arith.addf %333, %339 : vector<16x16xf32>
    %341 = tpu.concatenate %277, %340 in 0 : vector<16x16xf32>, vector<16x16xf32> -> vector<32x16xf32>
    %c0_183 = arith.constant 0 : index
    %c0_184 = arith.constant 0 : index
    %342 = vector.load %arg22[%c0_183, %c0_184] : memref<1x16xf32, #tpu.memory_space<vmem>>, vector<1x16xf32>
    %c0_185 = arith.constant 0 : index
    %c0_186 = arith.constant 0 : index
    %343 = vector.load %arg23[%c0_185, %c0_186] : memref<1x16xf32, #tpu.memory_space<vmem>>, vector<1x16xf32>
    %cst_187 = arith.constant dense<0.000000e+00> : vector<32xf32>
    %344 = vector.multi_reduction <add>, %341, %cst_187 [1] : vector<32x16xf32> to vector<32xf32>
    %345 = vector.shape_cast %344 : vector<32xf32> to vector<32x1xf32>
    %cst_188 = arith.constant 6.250000e-02 : f32
    %346 = vector.broadcast %cst_188 : f32 to vector<32x1xf32>
    %347 = arith.mulf %345, %346 : vector<32x1xf32>
    %348 = arith.mulf %341, %341 : vector<32x16xf32>
    %cst_189 = arith.constant dense<0.000000e+00> : vector<32xf32>
    %349 = vector.multi_reduction <add>, %348, %cst_189 [1] : vector<32x16xf32> to vector<32xf32>
    %350 = vector.shape_cast %349 : vector<32xf32> to vector<32x1xf32>
    %cst_190 = arith.constant 6.250000e-02 : f32
    %351 = vector.broadcast %cst_190 : f32 to vector<32x1xf32>
    %352 = arith.mulf %350, %351 : vector<32x1xf32>
    %353 = arith.mulf %347, %347 : vector<32x1xf32>
    %354 = arith.subf %352, %353 : vector<32x1xf32>
    %355 = vector.broadcast %347 : vector<32x1xf32> to vector<32x16xf32>
    %356 = arith.subf %341, %355 : vector<32x16xf32>
    %cst_191 = arith.constant 9.99999997E-7 : f32
    %357 = vector.broadcast %cst_191 : f32 to vector<32x1xf32>
    %358 = arith.addf %354, %357 : vector<32x1xf32>
    %359 = math.rsqrt %358 : vector<32x1xf32>
    %360 = vector.broadcast %359 : vector<32x1xf32> to vector<32x16xf32>
    %361 = arith.mulf %356, %360 : vector<32x16xf32>
    %362 = vector.broadcast %342 : vector<1x16xf32> to vector<32x16xf32>
    %363 = arith.mulf %361, %362 : vector<32x16xf32>
    %364 = vector.broadcast %343 : vector<1x16xf32> to vector<32x16xf32>
    %365 = arith.addf %363, %364 : vector<32x16xf32>
    %cst_192 = arith.constant 0.000000e+00 : f32
    %366 = vector.broadcast %cst_192 : f32 to vector<32x112xf32>
    %367 = tpu.concatenate %365, %366 in 1 : vector<32x16xf32>, vector<32x112xf32> -> vector<32x128xf32>
    %c0_193 = arith.constant 0 : index
    %c0_194 = arith.constant 0 : index
    %368 = vector.load %arg24[%c0_193, %c0_194] : memref<32x128xf32, #tpu.memory_space<vmem>>, vector<32x128xf32>
    tpu.vector_store %arg24[%c0_193, %c0_194], %367 {strides = array<i32>} : memref<32x128xf32, #tpu.memory_space<vmem>>, vector<32x128xf32>,
    return
  }
}

</mosaic_0001>

<llo_original>
// kernel: sam_unet_forward.1
$region0: #{sam_unet_forward.1}
  #allocation0 [shape = 'u32[]', space=smem, size = 0x4, offset = 0x4, fixed_abs, tag = 'smem constant byte address 0x4 - core index']
  #allocation1 [shape = 'u32[144,128]{1,0:T(1,128)}', space=vmem, size = 0x12000, scoped, tag = 'internal scratch']
  %s0 = inlined_call_operand.vmem [shape: f32[32,192], index: 0, kind: input, shape index: {}]
  %s1 = inlined_call_operand.vmem [shape: f32[1,192], index: 1, kind: input, shape index: {}]
  %s2 = inlined_call_operand.vmem [shape: bf16[192,32], index: 2, kind: input, shape index: {}]
  %s3 = inlined_call_operand.vmem [shape: f32[1,32], index: 3, kind: input, shape index: {}]
  %s4 = inlined_call_operand.vmem [shape: f32[32,32], index: 4, kind: input, shape index: {}]
  %s5 = inlined_call_operand.vmem [shape: f32[1,32], index: 5, kind: input, shape index: {}]
  %s6 = inlined_call_operand.vmem [shape: f32[1,32], index: 6, kind: input, shape index: {}]
  %s7 = inlined_call_operand.vmem [shape: bf16[32,96], index: 7, kind: input, shape index: {}]
  %s8 = inlined_call_operand.vmem [shape: f32[1,96], index: 8, kind: input, shape index: {}]
  %s9 = inlined_call_operand.vmem [shape: bf16[32,32], index: 9, kind: input, shape index: {}]
  %s10 = inlined_call_operand.vmem [shape: f32[1,32], index: 10, kind: input, shape index: {}]
  %s11 = inlined_call_operand.vmem [shape: f32[1,32], index: 11, kind: input, shape index: {}]
  %s12 = inlined_call_operand.vmem [shape: f32[1,32], index: 12, kind: input, shape index: {}]
  %s13 = inlined_call_operand.vmem [shape: bf16[32,128], index: 13, kind: input, shape index: {}]
  %s14 = inlined_call_operand.vmem [shape: f32[1,128], index: 14, kind: input, shape index: {}]
  %s15 = inlined_call_operand.vmem [shape: bf16[128,32], index: 15, kind: input, shape index: {}]
  %s16 = inlined_call_operand.vmem [shape: f32[1,32], index: 16, kind: input, shape index: {}]
  %s17 = inlined_call_operand.vmem [shape: bf16[32,16], index: 17, kind: input, shape index: {}]
  %s18 = inlined_call_operand.vmem [shape: f32[1,16], index: 18, kind: input, shape index: {}]
  %s19 = inlined_call_operand.vmem [shape: f32[1,16], index: 19, kind: input, shape index: {}]
  %s20 = inlined_call_operand.vmem [shape: bf16[144,16], index: 20, kind: input, shape index: {}]
  %s21 = inlined_call_operand.vmem [shape: bf16[144,16], index: 21, kind: input, shape index: {}]
  %s22 = inlined_call_operand.vmem [shape: f32[1,16], index: 22, kind: input, shape index: {}]
  %s23 = inlined_call_operand.vmem [shape: f32[1,16], index: 23, kind: input, shape index: {}]
  %s24 = inlined_call_operand.hbm [shape: f32[32,128], index: 24, kind: output, shape index: {}]
  %s25 = sld [smem:[#allocation0]]
  $region106: #{sam_unet_forward.1} parent=0
    _
  %s27 = ssub.s32 1, %s25
  %s28 = scalar_select 0, %s27, %s25
  $region1: #{sam_unet_forward.1} parent=0
    #allocation2 [shape = 'u8[16384]{0}', space=vmem, size = 0x4000, scoped, tag = 'output window, operand 0, single buffered']
    #allocation3 [shape = 's32[1]{0}', space=sflag, size = 0x4, scoped, tag = 'scoped memory for sam_unet_forward.1']
    %29 = vsyncpa [#allocation3], 0
    // Predicated region
    $region2: #{sam_unet_forward.1} parent=1 // pred_check
      _
    $region3: #{sam_unet_forward.1} parent=1 // pred_check_branch
      %31 = sbr.rel (0) target = $region5
    $region4: #{sam_unet_forward.1} parent=1 // pred_region
      _
    $region5: #{sam_unet_forward.1} parent=1 // pred_fallthru
      _
    // Predicated region
    $region6: #{sam_unet_forward.1} parent=1 // pred_check
      _
    $region7: #{sam_unet_forward.1} parent=1 // pred_check_branch
      %33 = sbr.rel (0) target = $region9
    $region8: #{sam_unet_forward.1} parent=1 // pred_region
      _
    $region9: #{sam_unet_forward.1} parent=1 // pred_fallthru
      _
    // Predicated region
    $region10: #{sam_unet_forward.1} parent=1 // pred_check
      _
    $region11: #{sam_unet_forward.1} parent=1 // pred_check_branch
      %35 = sbr.rel (0) target = $region13
    $region12: #{sam_unet_forward.1} parent=1 // pred_region
      _
    $region13: #{sam_unet_forward.1} parent=1 // pred_fallthru
      _
    // Predicated region
    $region14: #{sam_unet_forward.1} parent=1 // pred_check
      _
    $region15: #{sam_unet_forward.1} parent=1 // pred_check_branch
      %37 = sbr.rel (0) target = $region17
    $region16: #{sam_unet_forward.1} parent=1 // pred_region
      _
    $region17: #{sam_unet_forward.1} parent=1 // pred_fallthru
      _
    // Predicated region
    $region18: #{sam_unet_forward.1} parent=1 // pred_check
      _
    $region19: #{sam_unet_forward.1} parent=1 // pred_check_branch
      %39 = sbr.rel (0) target = $region21
    $region20: #{sam_unet_forward.1} parent=1 // pred_region
      _
    $region21: #{sam_unet_forward.1} parent=1 // pred_fallthru
      _
    // Predicated region
    $region22: #{sam_unet_forward.1} parent=1 // pred_check
      _
    $region23: #{sam_unet_forward.1} parent=1 // pred_check_branch
      %41 = sbr.rel (0) target = $region25
    $region24: #{sam_unet_forward.1} parent=1 // pred_region
      _
    $region25: #{sam_unet_forward.1} parent=1 // pred_fallthru
      _
    // Predicated region
    $region26: #{sam_unet_forward.1} parent=1 // pred_check
      _
    $region27: #{sam_unet_forward.1} parent=1 // pred_check_branch
      %43 = sbr.rel (0) target = $region29
    $region28: #{sam_unet_forward.1} parent=1 // pred_region
      _
    $region29: #{sam_unet_forward.1} parent=1 // pred_fallthru
      _
    // Predicated region
    $region30: #{sam_unet_forward.1} parent=1 // pred_check
      _
    $region31: #{sam_unet_forward.1} parent=1 // pred_check_branch
      %45 = sbr.rel (0) target = $region33
    $region32: #{sam_unet_forward.1} parent=1 // pred_region
      _
    $region33: #{sam_unet_forward.1} parent=1 // pred_fallthru
      _
    // Predicated region
    $region34: #{sam_unet_forward.1} parent=1 // pred_check
      _
    $region35: #{sam_unet_forward.1} parent=1 // pred_check_branch
      %47 = sbr.rel (0) target = $region37
    $region36: #{sam_unet_forward.1} parent=1 // pred_region
      _
    $region37: #{sam_unet_forward.1} parent=1 // pred_fallthru
      _
    // Predicated region
    $region38: #{sam_unet_forward.1} parent=1 // pred_check
      _
    $region39: #{sam_unet_forward.1} parent=1 // pred_check_branch
      %49 = sbr.rel (0) target = $region41
    $region40: #{sam_unet_forward.1} parent=1 // pred_region
      _
    $region41: #{sam_unet_forward.1} parent=1 // pred_fallthru
      _
    // Predicated region
    $region42: #{sam_unet_forward.1} parent=1 // pred_check
      _
    $region43: #{sam_unet_forward.1} parent=1 // pred_check_branch
      %51 = sbr.rel (0) target = $region45
    $region44: #{sam_unet_forward.1} parent=1 // pred_region
      _
    $region45: #{sam_unet_forward.1} parent=1 // pred_fallthru
      _
    // Predicated region
    $region46: #{sam_unet_forward.1} parent=1 // pred_check
      _
    $region47: #{sam_unet_forward.1} parent=1 // pred_check_branch
      %53 = sbr.rel (0) target = $region49
    $region48: #{sam_unet_forward.1} parent=1 // pred_region
      _
    $region49: #{sam_unet_forward.1} parent=1 // pred_fallthru
      _
    // Predicated region
    $region50: #{sam_unet_forward.1} parent=1 // pred_check
      _
    $region51: #{sam_unet_forward.1} parent=1 // pred_check_branch
      %55 = sbr.rel (0) target = $region53
    $region52: #{sam_unet_forward.1} parent=1 // pred_region
      _
    $region53: #{sam_unet_forward.1} parent=1 // pred_fallthru
      _
    // Predicated region
    $region54: #{sam_unet_forward.1} parent=1 // pred_check
      _
    $region55: #{sam_unet_forward.1} parent=1 // pred_check_branch
      %57 = sbr.rel (0) target = $region57
    $region56: #{sam_unet_forward.1} parent=1 // pred_region
      _
    $region57: #{sam_unet_forward.1} parent=1 // pred_fallthru
      _
    // Predicated region
    $region58: #{sam_unet_forward.1} parent=1 // pred_check
      _
    $region59: #{sam_unet_forward.1} parent=1 // pred_check_branch
      %59 = sbr.rel (0) target = $region61
    $region60: #{sam_unet_forward.1} parent=1 // pred_region
      _
    $region61: #{sam_unet_forward.1} parent=1 // pred_fallthru
      _
    // Predicated region
    $region62: #{sam_unet_forward.1} parent=1 // pred_check
      _
    $region63: #{sam_unet_forward.1} parent=1 // pred_check_branch
      %61 = sbr.rel (0) target = $region65
    $region64: #{sam_unet_forward.1} parent=1 // pred_region
      _
    $region65: #{sam_unet_forward.1} parent=1 // pred_fallthru
      _
    // Predicated region
    $region66: #{sam_unet_forward.1} parent=1 // pred_check
      _
    $region67: #{sam_unet_forward.1} parent=1 // pred_check_branch
      %63 = sbr.rel (0) target = $region69
    $region68: #{sam_unet_forward.1} parent=1 // pred_region
      _
    $region69: #{sam_unet_forward.1} parent=1 // pred_fallthru
      _
    // Predicated region
    $region70: #{sam_unet_forward.1} parent=1 // pred_check
      _
    $region71: #{sam_unet_forward.1} parent=1 // pred_check_branch
      %65 = sbr.rel (0) target = $region73
    $region72: #{sam_unet_forward.1} parent=1 // pred_region
      _
    $region73: #{sam_unet_forward.1} parent=1 // pred_fallthru
      _
    // Predicated region
    $region74: #{sam_unet_forward.1} parent=1 // pred_check
      _
    $region75: #{sam_unet_forward.1} parent=1 // pred_check_branch
      %67 = sbr.rel (0) target = $region77
    $region76: #{sam_unet_forward.1} parent=1 // pred_region
      _
    $region77: #{sam_unet_forward.1} parent=1 // pred_fallthru
      _
    // Predicated region
    $region78: #{sam_unet_forward.1} parent=1 // pred_check
      _
    $region79: #{sam_unet_forward.1} parent=1 // pred_check_branch
      %69 = sbr.rel (0) target = $region81
    $region80: #{sam_unet_forward.1} parent=1 // pred_region
      _
    $region81: #{sam_unet_forward.1} parent=1 // pred_fallthru
      _
    // Predicated region
    $region82: #{sam_unet_forward.1} parent=1 // pred_check
      _
    $region83: #{sam_unet_forward.1} parent=1 // pred_check_branch
      %71 = sbr.rel (0) target = $region85
    $region84: #{sam_unet_forward.1} parent=1 // pred_region
      _
    $region85: #{sam_unet_forward.1} parent=1 // pred_fallthru
      _
    // Predicated region
    $region86: #{sam_unet_forward.1} parent=1 // pred_check
      _
    $region87: #{sam_unet_forward.1} parent=1 // pred_check_branch
      %73 = sbr.rel (0) target = $region89
    $region88: #{sam_unet_forward.1} parent=1 // pred_region
      _
    $region89: #{sam_unet_forward.1} parent=1 // pred_fallthru
      _
    // Predicated region
    $region90: #{sam_unet_forward.1} parent=1 // pred_check
      _
    $region91: #{sam_unet_forward.1} parent=1 // pred_check_branch
      %75 = sbr.rel (0) target = $region93
    $region92: #{sam_unet_forward.1} parent=1 // pred_region
      _
    $region93: #{sam_unet_forward.1} parent=1 // pred_fallthru
      _
    // Predicated region
    $region94: #{sam_unet_forward.1} parent=1 // pred_check
      _
    $region95: #{sam_unet_forward.1} parent=1 // pred_check_branch
      %77 = sbr.rel (0) target = $region97
    $region96: #{sam_unet_forward.1} parent=1 // pred_region
      _
    $region97: #{sam_unet_forward.1} parent=1 // pred_fallthru
      _
    %v79 = vld [vmem:[%s0] sm:$0xff]
    %v80 = vld [vmem:[%s0 + $0x8] sm:$0xff]
    %v81 = vld [vmem:[%s0 + $0x10] sm:$0xff]
    %v82 = vld [vmem:[%s0 + $0x18] sm:$0xff]
    %v83 = vld [vmem:[%s0 + $0x20] sm:$0xff]
    %v84 = vld [vmem:[%s0 + $0x28] sm:$0xff]
    %v85 = vld [vmem:[%s0 + $0x30] sm:$0xff]
    %v86 = vld [vmem:[%s0 + $0x38] sm:$0xff]
    %v87 = vld [vmem:[%s1] sm:$0x3]
    %v89 = vlaneseq
    %v90 = vshrl.u32 %v89, 7
    %v91 = vsub.s32 0, %v90
    %v92 = vrot.slane %v87, %v91
    %v93 = vlaneseq
    %v94 = vshrl.u32 %v93, 7
    %v95 = vsub.s32 1, %v94
    %v96 = vrot.slane %v87, %v95
    %v99 = vmul.f32 %v79, %v92
    %v100 = vmul.f32 %v80, %v96
    %v101 = vmul.f32 %v81, %v92
    %v102 = vmul.f32 %v82, %v96
    %v103 = vmul.f32 %v83, %v92
    %v104 = vmul.f32 %v84, %v96
    %v105 = vmul.f32 %v85, %v92
    %v106 = vmul.f32 %v86, %v96
    %v107 = vld [vmem:[%s2] sm:$0xf]
    %v108 = vld [vmem:[%s2 + $0x4] sm:$0xf]
    %v109 = vld [vmem:[%s2 + $0x8] sm:$0xf]
    %v110 = vld [vmem:[%s2 + $0xc] sm:$0xf]
    %v111 = vld [vmem:[%s2 + $0x10] sm:$0xf]
    %v112 = vld [vmem:[%s2 + $0x14] sm:$0xf]
    %v113 = vld [vmem:[%s2 + $0x18] sm:$0xf]
    %v114 = vld [vmem:[%s2 + $0x1c] sm:$0xf]
    %v115 = vld [vmem:[%s2 + $0x20] sm:$0xf]
    %v116 = vld [vmem:[%s2 + $0x24] sm:$0xf]
    %v117 = vld [vmem:[%s2 + $0x28] sm:$0xf]
    %v118 = vld [vmem:[%s2 + $0x2c] sm:$0xf]
    %v119 = vld [vmem:[%s2 + $0x30] sm:$0xf]
    %v120 = vld [vmem:[%s2 + $0x34] sm:$0xf]
    %v121 = vld [vmem:[%s2 + $0x38] sm:$0xf]
    %v122 = vld [vmem:[%s2 + $0x3c] sm:$0xf]
    %v123 = vld [vmem:[%s2 + $0x40] sm:$0xf]
    %v124 = vld [vmem:[%s2 + $0x44] sm:$0xf]
    %v125 = vld [vmem:[%s2 + $0x48] sm:$0xf]
    %v126 = vld [vmem:[%s2 + $0x4c] sm:$0xf]
    %v127 = vld [vmem:[%s2 + $0x50] sm:$0xf]
    %v128 = vld [vmem:[%s2 + $0x54] sm:$0xf]
    %v129 = vld [vmem:[%s2 + $0x58] sm:$0xf]
    %v130 = vld [vmem:[%s2 + $0x5c] sm:$0xf]
    %v131 = vpack.c.bf16 %v101, %v99
    %v132 = vpack.c.bf16 %v102, %v100
    %v133 = vpack.c.bf16 %v105, %v103
    %v134 = vpack.c.bf16 %v106, %v104
    %v135 = vld [vmem:[%s3] sm:$0x1]
    %v137 = vlaneseq
    %v138 = vshrl.u32 %v137, 7
    %v139 = vsub.s32 0, %v138
    %v140 = vrot.slane %v135, %v139
    %v166 = vunpack.c.l.b16 %v107
    %v167 = vunpack.c.l.b16 %v108
    %v168 = vunpack.c.l.b16 %v109
    %v169 = vunpack.c.l.b16 %v110
    %v170 = vunpack.c.l.b16 %v111
    %v171 = vunpack.c.l.b16 %v112
    %v172 = vunpack.c.l.b16 %v113
    %v173 = vunpack.c.l.b16 %v114
    %v174 = vunpack.c.l.b16 %v115
    %v175 = vunpack.c.l.b16 %v116
    %v176 = vunpack.c.l.b16 %v117
    %v177 = vunpack.c.l.b16 %v118
    %v178 = vunpack.c.l.b16 %v119
    %v179 = vunpack.c.l.b16 %v120
    %v180 = vunpack.c.l.b16 %v121
    %v181 = vunpack.c.l.b16 %v122
    %v182 = vunpack.c.l.b16 %v123
    %v183 = vunpack.c.l.b16 %v124
    %v184 = vunpack.c.l.b16 %v125
    %v185 = vunpack.c.l.b16 %v126
    %v186 = vunpack.c.l.b16 %v127
    %v187 = vunpack.c.l.b16 %v128
    %v188 = vunpack.c.l.b16 %v129
    %v189 = vunpack.c.l.b16 %v130
    %v190 = vpack.c.b16 %v167, %v166
    %v191 = vpack.c.b16 %v169, %v168
    %v192 = vpack.c.b16 %v171, %v170
    %v193 = vpack.c.b16 %v173, %v172
    %v194 = vpack.c.b16 %v175, %v174
    %v195 = vpack.c.b16 %v177, %v176
    %v196 = vpack.c.b16 %v179, %v178
    %v197 = vpack.c.b16 %v181, %v180
    %v198 = vpack.c.b16 %v183, %v182
    %v199 = vpack.c.b16 %v185, %v184
    %v200 = vpack.c.b16 %v187, %v186
    %v201 = vpack.c.b16 %v189, %v188
    %vm214 = vcmask 523264
    %v216 = vsel %vm214, %v132, 0
    %v219 = vsel %vm214, %v134, 0
    %221 = vmatprep.subr.bf16.mxu0 0
    %222 = vmatpush1.bf16.msra.mxu0 %v197
    %223 = vmatprep.subr.bf16.mxu0 0
    %224 = vmatpush1.bf16.msra.mxu0 %v196
    %225 = vmatprep.subr.bf16.mxu0 0
    %226 = vmatpush1.bf16.msra.mxu0 %v195
    %227 = vmatprep.subr.bf16.mxu0 0
    %228 = vmatpush1.bf16.msra.mxu0 %v194
    %229 = vmatprep.subr.bf16.mxu0 0
    %230 = vmatpush1.bf16.msra.mxu0 %v193
    %231 = vmatprep.subr.bf16.mxu0 0
    %232 = vmatpush1.bf16.msra.mxu0 %v192
    %233 = vmatprep.subr.bf16.mxu0 0
    %234 = vmatpush1.bf16.msra.mxu0 %v191
    %235 = vmatprep.subr.bf16.mxu0 0
    %236 = vmatpush1.bf16.msra.mxu0 %v190
    %237 = vmatprep.subr.bf16.mxu0 0
    %238 = vmatpush2.bf16.msra.mxu0 0
    %239 = vmatprep.subr.bf16.mxu0 0
    %240 = vmatpush2.bf16.msra.mxu0 0
    %241 = vmatprep.subr.bf16.mxu0 0
    %242 = vmatpush2.bf16.msra.mxu0 0
    %243 = vmatprep.subr.bf16.mxu0 0
    %244 = vmatpush2.bf16.msra.mxu0 0
    %245 = vmatprep.subr.bf16.mxu0 0
    %246 = vmatpush2.bf16.msra.mxu0 %v201
    %247 = vmatprep.subr.bf16.mxu0 0
    %248 = vmatpush2.bf16.msra.mxu0 %v200
    %249 = vmatprep.subr.bf16.mxu0 0
    %250 = vmatpush2.bf16.msra.mxu0 %v199
    %251 = vmatprep.subr.bf16.mxu0 0
    %252 = vmatpush2.bf16.msra.mxu0 %v198
    %253 = vmatprep.mubr.bf16.mxu0 %v216
    %254 = vmatmul.mubr.bf16.gmra.mxu0 %v131
    %v255 = vpop.f32.mrf.mxu0
    %v256 = vadd.f32 %v140, %v255
    %v257 = vpop.f32.mrf.mxu0
    %v258 = vpop.f32.mrf.mxu0
    %v259 = vadd.f32 %v140, %v258
    %v260 = vpop.f32.mrf.mxu0
    %261 = vmatprep.mubr.bf16.mxu0 %v219
    %262 = vmatmul.mubr.bf16.gmra.mxu0 %v133
    %v263 = vpop.f32.mrf.mxu0
    %v264 = vadd.f32 %v140, %v263
    %v265 = vpop.f32.mrf.mxu0
    %v266 = vpop.f32.mrf.mxu0
    %v267 = vadd.f32 %v140, %v266
    %v268 = vpop.f32.mrf.mxu0
    %269 = vdwg.mxu0
    %v270 = vld [vmem:[%s4] sm:$0xff]
    %v271 = vld [vmem:[%s4 + $0x8] sm:$0xff]
    %v272 = vld [vmem:[%s4 + $0x10] sm:$0xff]
    %v273 = vld [vmem:[%s4 + $0x18] sm:$0xff]
    %v274 = vadd.f32 %v256, %v270
    %v275 = vadd.f32 %v259, %v271
    %v276 = vadd.f32 %v264, %v272
    %v277 = vadd.f32 %v267, %v273
    %v278 = vld [vmem:[%s5] sm:$0x1]
    %v279 = vld [vmem:[%s6] sm:$0x1]
    %vm280 = vcmask 261120
    %v281 = vsel %vm280, %v274, 0.0
    %282 = vadd.xlane.f32.xlu0 %v281
    %v283 = vpop.xlane.xlu0 %282
    %v284 = vsel %vm280, %v275, 0.0
    %285 = vadd.xlane.f32.xlu0 %v284
    %v286 = vpop.xlane.xlu0 %285
    %v287 = vsel %vm280, %v276, 0.0
    %288 = vadd.xlane.f32.xlu0 %v287
    %v289 = vpop.xlane.xlu0 %288
    %v290 = vsel %vm280, %v277, 0.0
    %291 = vadd.xlane.f32.xlu0 %v290
    %v292 = vpop.xlane.xlu0 %291
    %v293 = vmul.f32 %v283, 0.03125
    %v294 = vmul.f32 %v286, 0.03125
    %v295 = vmul.f32 %v289, 0.03125
    %v296 = vmul.f32 %v292, 0.03125
    %v297 = vmul.f32 %v274, %v274
    %v298 = vmul.f32 %v275, %v275
    %v299 = vmul.f32 %v276, %v276
    %v300 = vmul.f32 %v277, %v277
    %v301 = vsel %vm280, %v297, 0.0
    %302 = vadd.xlane.f32.xlu0 %v301
    %v303 = vpop.xlane.xlu0 %302
    %v304 = vsel %vm280, %v298, 0.0
    %305 = vadd.xlane.f32.xlu0 %v304
    %v306 = vpop.xlane.xlu0 %305
    %v307 = vsel %vm280, %v299, 0.0
    %308 = vadd.xlane.f32.xlu0 %v307
    %v309 = vpop.xlane.xlu0 %308
    %v310 = vsel %vm280, %v300, 0.0
    %311 = vadd.xlane.f32.xlu0 %v310
    %v312 = vpop.xlane.xlu0 %311
    %v313 = vmul.f32 %v303, 0.03125
    %v314 = vmul.f32 %v306, 0.03125
    %v315 = vmul.f32 %v309, 0.03125
    %v316 = vmul.f32 %v312, 0.03125
    %v317 = vmul.f32 %v293, %v293
    %v318 = vmul.f32 %v294, %v294
    %v319 = vmul.f32 %v295, %v295
    %v320 = vmul.f32 %v296, %v296
    %v321 = vsub.f32 %v313, %v317
    %v322 = vsub.f32 %v314, %v318
    %v323 = vsub.f32 %v315, %v319
    %v324 = vsub.f32 %v316, %v320
    %v325 = vsub.f32 %v274, %v293
    %v326 = vsub.f32 %v275, %v294
    %v327 = vsub.f32 %v276, %v295
    %v328 = vsub.f32 %v277, %v296
    %v329 = vadd.f32 %v321, 1e-06
    %v330 = vadd.f32 %v322, 1e-06
    %v331 = vadd.f32 %v323, 1e-06
    %v332 = vadd.f32 %v324, 1e-06
    %v333 = vrsqrt.pop %v329
    %v334 = vrsqrt.pop %v330
    %v335 = vrsqrt.pop %v331
    %v336 = vrsqrt.pop %v332
    %v337 = vmul.f32 %v325, %v333
    %v338 = vmul.f32 %v326, %v334
    %v339 = vmul.f32 %v327, %v335
    %v340 = vmul.f32 %v328, %v336
    %v342 = vlaneseq
    %v343 = vshrl.u32 %v342, 7
    %v344 = vsub.s32 0, %v343
    %v345 = vrot.slane %v278, %v344
    %v347 = vmul.f32 %v337, %v345
    %v348 = vmul.f32 %v338, %v345
    %v349 = vmul.f32 %v339, %v345
    %v350 = vmul.f32 %v340, %v345
    %v352 = vlaneseq
    %v353 = vshrl.u32 %v352, 7
    %v354 = vsub.s32 0, %v353
    %v355 = vrot.slane %v279, %v354
    %v357 = vadd.f32 %v347, %v355
    %v358 = vadd.f32 %v348, %v355
    %v359 = vadd.f32 %v349, %v355
    %v360 = vadd.f32 %v350, %v355
    %v361 = vld [vmem:[%s7] sm:$0xf]
    %v362 = vld [vmem:[%s7 + $0x4] sm:$0xf]
    %v363 = vld [vmem:[%s7 + $0x8] sm:$0xf]
    %v364 = vld [vmem:[%s7 + $0xc] sm:$0xf]
    %v365 = vpack.c.bf16 %v358, %v357
    %v366 = vpack.c.bf16 %v360, %v359
    %v367 = vld [vmem:[%s8] sm:$0x1]
    %v369 = vlaneseq
    %v370 = vshrl.u32 %v369, 7
    %v371 = vsub.s32 0, %v370
    %v372 = vrot.slane %v367, %v371
    %v378 = vunpack.c.l.b16 %v361
    %v379 = vunpack.c.l.b16 %v362
    %v380 = vunpack.c.l.b16 %v363
    %v381 = vunpack.c.l.b16 %v364
    %v382 = vpack.c.b16 %v379, %v378
    %v383 = vpack.c.b16 %v381, %v380
    %v387 = vsel %vm280, %v365, 0
    %v390 = vsel %vm280, %v366, 0
    %392 = vmatprep.subr.bf16.mxu0 0
    %393 = vmatpush1.bf16.msra.mxu0 0
    %394 = vmatprep.subr.bf16.mxu0 0
    %395 = vmatpush1.bf16.msra.mxu0 0
    %396 = vmatprep.subr.bf16.mxu0 0
    %397 = vmatpush1.bf16.msra.mxu0 0
    %398 = vmatprep.subr.bf16.mxu0 0
    %399 = vmatpush1.bf16.msra.mxu0 0
    %400 = vmatprep.subr.bf16.mxu0 0
    %401 = vmatpush1.bf16.msra.mxu0 0
    %402 = vmatprep.subr.bf16.mxu0 0
    %403 = vmatpush1.bf16.msra.mxu0 0
    %404 = vmatprep.subr.bf16.mxu0 0
    %405 = vmatpush1.bf16.msra.mxu0 %v383
    %406 = vmatprep.subr.bf16.mxu0 0
    %407 = vmatpush1.bf16.msra.mxu0 %v382
    %408 = vmatprep.subr.bf16.mxu0 0
    %409 = vmatpush2.bf16.msra.mxu0 0
    %410 = vmatprep.subr.bf16.mxu0 0
    %411 = vmatpush2.bf16.msra.mxu0 0
    %412 = vmatprep.subr.bf16.mxu0 0
    %413 = vmatpush2.bf16.msra.mxu0 0
    %414 = vmatprep.subr.bf16.mxu0 0
    %415 = vmatpush2.bf16.msra.mxu0 0
    %416 = vmatprep.subr.bf16.mxu0 0
    %417 = vmatpush2.bf16.msra.mxu0 0
    %418 = vmatprep.subr.bf16.mxu0 0
    %419 = vmatpush2.bf16.msra.mxu0 0
    %420 = vmatprep.subr.bf16.mxu0 0
    %421 = vmatpush2.bf16.msra.mxu0 0
    %422 = vmatprep.subr.bf16.mxu0 0
    %423 = vmatpush2.bf16.msra.mxu0 0
    %424 = vmatprep.mubr.bf16.mxu0 0
    %425 = vmatmul.mubr.bf16.gmra.mxu0 %v387
    %v426 = vpop.f32.mrf.mxu0
    %v427 = vadd.f32 %v372, %v426
    %v428 = vpop.f32.mrf.mxu0
    %v429 = vpop.f32.mrf.mxu0
    %v430 = vadd.f32 %v372, %v429
    %v431 = vpop.f32.mrf.mxu0
    %432 = vmatprep.mubr.bf16.mxu0 0
    %433 = vmatmul.mubr.bf16.gmra.mxu0 %v390
    %v434 = vpop.f32.mrf.mxu0
    %v435 = vadd.f32 %v372, %v434
    %v436 = vpop.f32.mrf.mxu0
    %v437 = vpop.f32.mrf.mxu0
    %v438 = vadd.f32 %v372, %v437
    %v439 = vpop.f32.mrf.mxu0
    %440 = vdwg.mxu0
    %v441 = vmul.f32 %v427, 0.25
    %v442 = vmul.f32 %v430, 0.25
    %v443 = vpack.c.bf16 %v442, %v441
    %v444 = vpack.c.bf16 %v430, %v427
    %446 = vrot.lane.b32.xlu0 %v444, 96
    %v447 = vpop.permute.xlu0 %446
    %vm448 = vcmask 130048
    %v450 = vsel %vm448, %v443, 0
    %v453 = vsel %vm448, %v447, 0
    %455 = vmatprep.subr.bf16.mxu0 0
    %456 = vmatpush1.bf16.xpose.msra.mxu0 0
    %457 = vmatprep.subr.bf16.mxu0 0
    %458 = vmatpush1.bf16.xpose.msra.mxu0 0
    %459 = vmatprep.subr.bf16.mxu0 0
    %460 = vmatpush1.bf16.xpose.msra.mxu0 0
    %461 = vmatprep.subr.bf16.mxu0 0
    %462 = vmatpush1.bf16.xpose.msra.mxu0 0
    %463 = vmatprep.subr.bf16.mxu0 0
    %464 = vmatpush1.bf16.xpose.msra.mxu0 0
    %465 = vmatprep.subr.bf16.mxu0 0
    %466 = vmatpush1.bf16.xpose.msra.mxu0 0
    %467 = vmatprep.subr.bf16.mxu0 0
    %468 = vmatpush1.bf16.xpose.msra.mxu0 0
    %469 = vmatprep.subr.bf16.mxu0 0
    %470 = vmatpush1.bf16.xpose.msra.mxu0 %v453
    %471 = vmatprep.subr.bf16.mxu0 0
    %472 = vmatpush2.bf16.xpose.msra.mxu0 0
    %473 = vmatprep.subr.bf16.mxu0 0
    %474 = vmatpush2.bf16.xpose.msra.mxu0 0
    %475 = vmatprep.subr.bf16.mxu0 0
    %476 = vmatpush2.bf16.xpose.msra.mxu0 0
    %477 = vmatprep.subr.bf16.mxu0 0
    %478 = vmatpush2.bf16.xpose.msra.mxu0 0
    %479 = vmatprep.subr.bf16.mxu0 0
    %480 = vmatpush2.bf16.xpose.msra.mxu0 0
    %481 = vmatprep.subr.bf16.mxu0 0
    %482 = vmatpush2.bf16.xpose.msra.mxu0 0
    %483 = vmatprep.subr.bf16.mxu0 0
    %484 = vmatpush2.bf16.xpose.msra.mxu0 0
    %485 = vmatprep.subr.bf16.mxu0 0
    %486 = vmatpush2.bf16.xpose.msra.mxu0 0
    %487 = vmatprep.mubr.bf16.mxu0 0
    %488 = vmatmul.mubr.bf16.gmra.mxu0 %v450
    %v489 = vpop.f32.mrf.mxu0
    %v490 = vadd.f32 0.0, %v489
    %v491 = vpop.f32.mrf.mxu0
    %v492 = vpop.f32.mrf.mxu0
    %v493 = vadd.f32 0.0, %v492
    %v494 = vpop.f32.mrf.mxu0
    %495 = vdwg.mxu0
    %v496 = vsel %vm448, %v490, -inf
    %497 = vmax.xlane.f32.xlu0 %v496
    %v498 = vpop.xlane.xlu0 %497
    %v499 = vsel %vm448, %v493, -inf
    %500 = vmax.xlane.f32.xlu0 %v499
    %v501 = vpop.xlane.xlu0 %500
    %v502 = vsub.f32 %v490, %v498
    %v503 = vsub.f32 %v493, %v501
    %v504 = vmul.f32 %v502, 1.442695
    %v505 = vpow.pop %v504
    %v506 = vmul.f32 %v503, 1.442695
    %v507 = vpow.pop %v506
    %v508 = vsel %vm448, %v505, 0.0
    %509 = vadd.xlane.f32.xlu0 %v508
    %v510 = vpop.xlane.xlu0 %509
    %v511 = vsel %vm448, %v507, 0.0
    %512 = vadd.xlane.f32.xlu0 %v511
    %v513 = vpop.xlane.xlu0 %512
    %v514 = vrcp.pop %v510
    %v515 = vrcp.pop %v513
    %v516 = vmul.f32 %v505, %v514
    %v517 = vmul.f32 %v507, %v515
    %v518 = vpack.c.bf16 %v517, %v516
    %519 = vrot.lane.b32.xlu0 %v444, 64
    %v520 = vpop.permute.xlu0 %519
    %v523 = vsel %vm448, %v518, 0
    %525 = vmatprep.subr.bf16.mxu0 0
    %526 = vmatpush1.bf16.msra.mxu0 0
    %527 = vmatprep.subr.bf16.mxu0 0
    %528 = vmatpush1.bf16.msra.mxu0 0
    %529 = vmatprep.subr.bf16.mxu0 0
    %530 = vmatpush1.bf16.msra.mxu0 0
    %531 = vmatprep.subr.bf16.mxu0 0
    %532 = vmatpush1.bf16.msra.mxu0 0
    %533 = vmatprep.subr.bf16.mxu0 0
    %534 = vmatpush1.bf16.msra.mxu0 0
    %535 = vmatprep.subr.bf16.mxu0 0
    %536 = vmatpush1.bf16.msra.mxu0 0
    %537 = vmatprep.subr.bf16.mxu0 0
    %538 = vmatpush1.bf16.msra.mxu0 0
    %539 = vmatprep.subr.bf16.mxu0 0
    %540 = vmatpush1.bf16.msra.mxu0 %v520
    %541 = vmatprep.subr.bf16.mxu0 0
    %542 = vmatpush2.bf16.msra.mxu0 0
    %543 = vmatprep.subr.bf16.mxu0 0
    %544 = vmatpush2.bf16.msra.mxu0 0
    %545 = vmatprep.subr.bf16.mxu0 0
    %546 = vmatpush2.bf16.msra.mxu0 0
    %547 = vmatprep.subr.bf16.mxu0 0
    %548 = vmatpush2.bf16.msra.mxu0 0
    %549 = vmatprep.subr.bf16.mxu0 0
    %550 = vmatpush2.bf16.msra.mxu0 0
    %551 = vmatprep.subr.bf16.mxu0 0
    %552 = vmatpush2.bf16.msra.mxu0 0
    %553 = vmatprep.subr.bf16.mxu0 0
    %554 = vmatpush2.bf16.msra.mxu0 0
    %555 = vmatprep.subr.bf16.mxu0 0
    %556 = vmatpush2.bf16.msra.mxu0 0
    %557 = vmatprep.mubr.bf16.mxu0 0
    %558 = vmatmul.mubr.bf16.gmra.mxu0 %v523
    %v559 = vpop.f32.mrf.mxu0
    %v560 = vadd.f32 0.0, %v559
    %v561 = vpop.f32.mrf.mxu0
    %v562 = vpop.f32.mrf.mxu0
    %v563 = vadd.f32 0.0, %v562
    %v564 = vpop.f32.mrf.mxu0
    %565 = vdwg.mxu0
    %567 = vrot.lane.b32.xlu0 %v443, 112
    %v568 = vpop.permute.xlu0 %567
    %569 = vrot.lane.b32.xlu0 %v444, 80
    %v570 = vpop.permute.xlu0 %569
    %v572 = vsel %vm448, %v568, 0
    %v575 = vsel %vm448, %v570, 0
    %577 = vmatprep.subr.bf16.mxu0 0
    %578 = vmatpush1.bf16.xpose.msra.mxu0 0
    %579 = vmatprep.subr.bf16.mxu0 0
    %580 = vmatpush1.bf16.xpose.msra.mxu0 0
    %581 = vmatprep.subr.bf16.mxu0 0
    %582 = vmatpush1.bf16.xpose.msra.mxu0 0
    %583 = vmatprep.subr.bf16.mxu0 0
    %584 = vmatpush1.bf16.xpose.msra.mxu0 0
    %585 = vmatprep.subr.bf16.mxu0 0
    %586 = vmatpush1.bf16.xpose.msra.mxu0 0
    %587 = vmatprep.subr.bf16.mxu0 0
    %588 = vmatpush1.bf16.xpose.msra.mxu0 0
    %589 = vmatprep.subr.bf16.mxu0 0
    %590 = vmatpush1.bf16.xpose.msra.mxu0 0
    %591 = vmatprep.subr.bf16.mxu0 0
    %592 = vmatpush1.bf16.xpose.msra.mxu0 %v575
    %593 = vmatprep.subr.bf16.mxu0 0
    %594 = vmatpush2.bf16.xpose.msra.mxu0 0
    %595 = vmatprep.subr.bf16.mxu0 0
    %596 = vmatpush2.bf16.xpose.msra.mxu0 0
    %597 = vmatprep.subr.bf16.mxu0 0
    %598 = vmatpush2.bf16.xpose.msra.mxu0 0
    %599 = vmatprep.subr.bf16.mxu0 0
    %600 = vmatpush2.bf16.xpose.msra.mxu0 0
    %601 = vmatprep.subr.bf16.mxu0 0
    %602 = vmatpush2.bf16.xpose.msra.mxu0 0
    %603 = vmatprep.subr.bf16.mxu0 0
    %604 = vmatpush2.bf16.xpose.msra.mxu0 0
    %605 = vmatprep.subr.bf16.mxu0 0
    %606 = vmatpush2.bf16.xpose.msra.mxu0 0
    %607 = vmatprep.subr.bf16.mxu0 0
    %608 = vmatpush2.bf16.xpose.msra.mxu0 0
    %609 = vmatprep.mubr.bf16.mxu0 0
    %610 = vmatmul.mubr.bf16.gmra.mxu0 %v572
    %v611 = vpop.f32.mrf.mxu0
    %v612 = vadd.f32 0.0, %v611
    %v613 = vpop.f32.mrf.mxu0
    %v614 = vpop.f32.mrf.mxu0
    %v615 = vadd.f32 0.0, %v614
    %v616 = vpop.f32.mrf.mxu0
    %617 = vdwg.mxu0
    %v618 = vsel %vm448, %v612, -inf
    %619 = vmax.xlane.f32.xlu0 %v618
    %v620 = vpop.xlane.xlu0 %619
    %v621 = vsel %vm448, %v615, -inf
    %622 = vmax.xlane.f32.xlu0 %v621
    %v623 = vpop.xlane.xlu0 %622
    %v624 = vsub.f32 %v612, %v620
    %v625 = vsub.f32 %v615, %v623
    %v626 = vmul.f32 %v624, 1.442695
    %v627 = vpow.pop %v626
    %v628 = vmul.f32 %v625, 1.442695
    %v629 = vpow.pop %v628
    %v630 = vsel %vm448, %v627, 0.0
    %631 = vadd.xlane.f32.xlu0 %v630
    %v632 = vpop.xlane.xlu0 %631
    %v633 = vsel %vm448, %v629, 0.0
    %634 = vadd.xlane.f32.xlu0 %v633
    %v635 = vpop.xlane.xlu0 %634
    %v636 = vrcp.pop %v632
    %v637 = vrcp.pop %v635
    %v638 = vmul.f32 %v627, %v636
    %v639 = vmul.f32 %v629, %v637
    %v640 = vpack.c.bf16 %v639, %v638
    %641 = vrot.lane.b32.xlu0 %v444, 48
    %v642 = vpop.permute.xlu0 %641
    %v645 = vsel %vm448, %v640, 0
    %647 = vmatprep.subr.bf16.mxu0 0
    %648 = vmatpush1.bf16.msra.mxu0 0
    %649 = vmatprep.subr.bf16.mxu0 0
    %650 = vmatpush1.bf16.msra.mxu0 0
    %651 = vmatprep.subr.bf16.mxu0 0
    %652 = vmatpush1.bf16.msra.mxu0 0
    %653 = vmatprep.subr.bf16.mxu0 0
    %654 = vmatpush1.bf16.msra.mxu0 0
    %655 = vmatprep.subr.bf16.mxu0 0
    %656 = vmatpush1.bf16.msra.mxu0 0
    %657 = vmatprep.subr.bf16.mxu0 0
    %658 = vmatpush1.bf16.msra.mxu0 0
    %659 = vmatprep.subr.bf16.mxu0 0
    %660 = vmatpush1.bf16.msra.mxu0 0
    %661 = vmatprep.subr.bf16.mxu0 0
    %662 = vmatpush1.bf16.msra.mxu0 %v642
    %663 = vmatprep.subr.bf16.mxu0 0
    %664 = vmatpush2.bf16.msra.mxu0 0
    %665 = vmatprep.subr.bf16.mxu0 0
    %666 = vmatpush2.bf16.msra.mxu0 0
    %667 = vmatprep.subr.bf16.mxu0 0
    %668 = vmatpush2.bf16.msra.mxu0 0
    %669 = vmatprep.subr.bf16.mxu0 0
    %670 = vmatpush2.bf16.msra.mxu0 0
    %671 = vmatprep.subr.bf16.mxu0 0
    %672 = vmatpush2.bf16.msra.mxu0 0
    %673 = vmatprep.subr.bf16.mxu0 0
    %674 = vmatpush2.bf16.msra.mxu0 0
    %675 = vmatprep.subr.bf16.mxu0 0
    %676 = vmatpush2.bf16.msra.mxu0 0
    %677 = vmatprep.subr.bf16.mxu0 0
    %678 = vmatpush2.bf16.msra.mxu0 0
    %679 = vmatprep.mubr.bf16.mxu0 0
    %680 = vmatmul.mubr.bf16.gmra.mxu0 %v645
    %v681 = vpop.f32.mrf.mxu0
    %v682 = vadd.f32 0.0, %v681
    %v683 = vpop.f32.mrf.mxu0
    %v684 = vpop.f32.mrf.mxu0
    %v685 = vadd.f32 0.0, %v684
    %v686 = vpop.f32.mrf.mxu0
    %687 = vdwg.mxu0
    %690 = vrot.lane.b32.xlu0 %v682, 16
    %v691 = vpop.permute.xlu0 %690
    %692 = vrot.lane.b32.xlu0 %v685, 16
    %v693 = vpop.permute.xlu0 %692
    %v696 = vsel %vm448, %v560, %v691
    %v697 = vsel %vm448, %v563, %v693
    %v698 = vmul.f32 %v435, 0.25
    %v699 = vmul.f32 %v438, 0.25
    %v700 = vpack.c.bf16 %v699, %v698
    %v701 = vpack.c.bf16 %v438, %v435
    %703 = vrot.lane.b32.xlu0 %v701, 96
    %v704 = vpop.permute.xlu0 %703
    %v706 = vsel %vm448, %v700, 0
    %v709 = vsel %vm448, %v704, 0
    %711 = vmatprep.subr.bf16.mxu0 0
    %712 = vmatpush1.bf16.xpose.msra.mxu0 0
    %713 = vmatprep.subr.bf16.mxu0 0
    %714 = vmatpush1.bf16.xpose.msra.mxu0 0
    %715 = vmatprep.subr.bf16.mxu0 0
    %716 = vmatpush1.bf16.xpose.msra.mxu0 0
    %717 = vmatprep.subr.bf16.mxu0 0
    %718 = vmatpush1.bf16.xpose.msra.mxu0 0
    %719 = vmatprep.subr.bf16.mxu0 0
    %720 = vmatpush1.bf16.xpose.msra.mxu0 0
    %721 = vmatprep.subr.bf16.mxu0 0
    %722 = vmatpush1.bf16.xpose.msra.mxu0 0
    %723 = vmatprep.subr.bf16.mxu0 0
    %724 = vmatpush1.bf16.xpose.msra.mxu0 0
    %725 = vmatprep.subr.bf16.mxu0 0
    %726 = vmatpush1.bf16.xpose.msra.mxu0 %v709
    %727 = vmatprep.subr.bf16.mxu0 0
    %728 = vmatpush2.bf16.xpose.msra.mxu0 0
    %729 = vmatprep.subr.bf16.mxu0 0
    %730 = vmatpush2.bf16.xpose.msra.mxu0 0
    %731 = vmatprep.subr.bf16.mxu0 0
    %732 = vmatpush2.bf16.xpose.msra.mxu0 0
    %733 = vmatprep.subr.bf16.mxu0 0
    %734 = vmatpush2.bf16.xpose.msra.mxu0 0
    %735 = vmatprep.subr.bf16.mxu0 0
    %736 = vmatpush2.bf16.xpose.msra.mxu0 0
    %737 = vmatprep.subr.bf16.mxu0 0
    %738 = vmatpush2.bf16.xpose.msra.mxu0 0
    %739 = vmatprep.subr.bf16.mxu0 0
    %740 = vmatpush2.bf16.xpose.msra.mxu0 0
    %741 = vmatprep.subr.bf16.mxu0 0
    %742 = vmatpush2.bf16.xpose.msra.mxu0 0
    %743 = vmatprep.mubr.bf16.mxu0 0
    %744 = vmatmul.mubr.bf16.gmra.mxu0 %v706
    %v745 = vpop.f32.mrf.mxu0
    %v746 = vadd.f32 0.0, %v745
    %v747 = vpop.f32.mrf.mxu0
    %v748 = vpop.f32.mrf.mxu0
    %v749 = vadd.f32 0.0, %v748
    %v750 = vpop.f32.mrf.mxu0
    %751 = vdwg.mxu0
    %v752 = vsel %vm448, %v746, -inf
    %753 = vmax.xlane.f32.xlu0 %v752
    %v754 = vpop.xlane.xlu0 %753
    %v755 = vsel %vm448, %v749, -inf
    %756 = vmax.xlane.f32.xlu0 %v755
    %v757 = vpop.xlane.xlu0 %756
    %v758 = vsub.f32 %v746, %v754
    %v759 = vsub.f32 %v749, %v757
    %v760 = vmul.f32 %v758, 1.442695
    %v761 = vpow.pop %v760
    %v762 = vmul.f32 %v759, 1.442695
    %v763 = vpow.pop %v762
    %v764 = vsel %vm448, %v761, 0.0
    %765 = vadd.xlane.f32.xlu0 %v764
    %v766 = vpop.xlane.xlu0 %765
    %v767 = vsel %vm448, %v763, 0.0
    %768 = vadd.xlane.f32.xlu0 %v767
    %v769 = vpop.xlane.xlu0 %768
    %v770 = vrcp.pop %v766
    %v771 = vrcp.pop %v769
    %v772 = vmul.f32 %v761, %v770
    %v773 = vmul.f32 %v763, %v771
    %v774 = vpack.c.bf16 %v773, %v772
    %775 = vrot.lane.b32.xlu0 %v701, 64
    %v776 = vpop.permute.xlu0 %775
    %v779 = vsel %vm448, %v774, 0
    %781 = vmatprep.subr.bf16.mxu0 0
    %782 = vmatpush1.bf16.msra.mxu0 0
    %783 = vmatprep.subr.bf16.mxu0 0
    %784 = vmatpush1.bf16.msra.mxu0 0
    %785 = vmatprep.subr.bf16.mxu0 0
    %786 = vmatpush1.bf16.msra.mxu0 0
    %787 = vmatprep.subr.bf16.mxu0 0
    %788 = vmatpush1.bf16.msra.mxu0 0
    %789 = vmatprep.subr.bf16.mxu0 0
    %790 = vmatpush1.bf16.msra.mxu0 0
    %791 = vmatprep.subr.bf16.mxu0 0
    %792 = vmatpush1.bf16.msra.mxu0 0
    %793 = vmatprep.subr.bf16.mxu0 0
    %794 = vmatpush1.bf16.msra.mxu0 0
    %795 = vmatprep.subr.bf16.mxu0 0
    %796 = vmatpush1.bf16.msra.mxu0 %v776
    %797 = vmatprep.subr.bf16.mxu0 0
    %798 = vmatpush2.bf16.msra.mxu0 0
    %799 = vmatprep.subr.bf16.mxu0 0
    %800 = vmatpush2.bf16.msra.mxu0 0
    %801 = vmatprep.subr.bf16.mxu0 0
    %802 = vmatpush2.bf16.msra.mxu0 0
    %803 = vmatprep.subr.bf16.mxu0 0
    %804 = vmatpush2.bf16.msra.mxu0 0
    %805 = vmatprep.subr.bf16.mxu0 0
    %806 = vmatpush2.bf16.msra.mxu0 0
    %807 = vmatprep.subr.bf16.mxu0 0
    %808 = vmatpush2.bf16.msra.mxu0 0
    %809 = vmatprep.subr.bf16.mxu0 0
    %810 = vmatpush2.bf16.msra.mxu0 0
    %811 = vmatprep.subr.bf16.mxu0 0
    %812 = vmatpush2.bf16.msra.mxu0 0
    %813 = vmatprep.mubr.bf16.mxu0 0
    %814 = vmatmul.mubr.bf16.gmra.mxu0 %v779
    %v815 = vpop.f32.mrf.mxu0
    %v816 = vadd.f32 0.0, %v815
    %v817 = vpop.f32.mrf.mxu0
    %v818 = vpop.f32.mrf.mxu0
    %v819 = vadd.f32 0.0, %v818
    %v820 = vpop.f32.mrf.mxu0
    %821 = vdwg.mxu0
    %823 = vrot.lane.b32.xlu0 %v700, 112
    %v824 = vpop.permute.xlu0 %823
    %825 = vrot.lane.b32.xlu0 %v701, 80
    %v826 = vpop.permute.xlu0 %825
    %v828 = vsel %vm448, %v824, 0
    %v831 = vsel %vm448, %v826, 0
    %833 = vmatprep.subr.bf16.mxu0 0
    %834 = vmatpush1.bf16.xpose.msra.mxu0 0
    %835 = vmatprep.subr.bf16.mxu0 0
    %836 = vmatpush1.bf16.xpose.msra.mxu0 0
    %837 = vmatprep.subr.bf16.mxu0 0
    %838 = vmatpush1.bf16.xpose.msra.mxu0 0
    %839 = vmatprep.subr.bf16.mxu0 0
    %840 = vmatpush1.bf16.xpose.msra.mxu0 0
    %841 = vmatprep.subr.bf16.mxu0 0
    %842 = vmatpush1.bf16.xpose.msra.mxu0 0
    %843 = vmatprep.subr.bf16.mxu0 0
    %844 = vmatpush1.bf16.xpose.msra.mxu0 0
    %845 = vmatprep.subr.bf16.mxu0 0
    %846 = vmatpush1.bf16.xpose.msra.mxu0 0
    %847 = vmatprep.subr.bf16.mxu0 0
    %848 = vmatpush1.bf16.xpose.msra.mxu0 %v831
    %849 = vmatprep.subr.bf16.mxu0 0
    %850 = vmatpush2.bf16.xpose.msra.mxu0 0
    %851 = vmatprep.subr.bf16.mxu0 0
    %852 = vmatpush2.bf16.xpose.msra.mxu0 0
    %853 = vmatprep.subr.bf16.mxu0 0
    %854 = vmatpush2.bf16.xpose.msra.mxu0 0
    %855 = vmatprep.subr.bf16.mxu0 0
    %856 = vmatpush2.bf16.xpose.msra.mxu0 0
    %857 = vmatprep.subr.bf16.mxu0 0
    %858 = vmatpush2.bf16.xpose.msra.mxu0 0
    %859 = vmatprep.subr.bf16.mxu0 0
    %860 = vmatpush2.bf16.xpose.msra.mxu0 0
    %861 = vmatprep.subr.bf16.mxu0 0
    %862 = vmatpush2.bf16.xpose.msra.mxu0 0
    %863 = vmatprep.subr.bf16.mxu0 0
    %864 = vmatpush2.bf16.xpose.msra.mxu0 0
    %865 = vmatprep.mubr.bf16.mxu0 0
    %866 = vmatmul.mubr.bf16.gmra.mxu0 %v828
    %v867 = vpop.f32.mrf.mxu0
    %v868 = vadd.f32 0.0, %v867
    %v869 = vpop.f32.mrf.mxu0
    %v870 = vpop.f32.mrf.mxu0
    %v871 = vadd.f32 0.0, %v870
    %v872 = vpop.f32.mrf.mxu0
    %873 = vdwg.mxu0
    %v874 = vsel %vm448, %v868, -inf
    %875 = vmax.xlane.f32.xlu0 %v874
    %v876 = vpop.xlane.xlu0 %875
    %v877 = vsel %vm448, %v871, -inf
    %878 = vmax.xlane.f32.xlu0 %v877
    %v879 = vpop.xlane.xlu0 %878
    %v880 = vsub.f32 %v868, %v876
    %v881 = vsub.f32 %v871, %v879
    %v882 = vmul.f32 %v880, 1.442695
    %v883 = vpow.pop %v882
    %v884 = vmul.f32 %v881, 1.442695
    %v885 = vpow.pop %v884
    %v886 = vsel %vm448, %v883, 0.0
    %887 = vadd.xlane.f32.xlu0 %v886
    %v888 = vpop.xlane.xlu0 %887
    %v889 = vsel %vm448, %v885, 0.0
    %890 = vadd.xlane.f32.xlu0 %v889
    %v891 = vpop.xlane.xlu0 %890
    %v892 = vrcp.pop %v888
    %v893 = vrcp.pop %v891
    %v894 = vmul.f32 %v883, %v892
    %v895 = vmul.f32 %v885, %v893
    %v896 = vpack.c.bf16 %v895, %v894
    %897 = vrot.lane.b32.xlu0 %v701, 48
    %v898 = vpop.permute.xlu0 %897
    %v901 = vsel %vm448, %v896, 0
    %903 = vmatprep.subr.bf16.mxu0 0
    %904 = vmatpush1.bf16.msra.mxu0 0
    %905 = vmatprep.subr.bf16.mxu0 0
    %906 = vmatpush1.bf16.msra.mxu0 0
    %907 = vmatprep.subr.bf16.mxu0 0
    %908 = vmatpush1.bf16.msra.mxu0 0
    %909 = vmatprep.subr.bf16.mxu0 0
    %910 = vmatpush1.bf16.msra.mxu0 0
    %911 = vmatprep.subr.bf16.mxu0 0
    %912 = vmatpush1.bf16.msra.mxu0 0
    %913 = vmatprep.subr.bf16.mxu0 0
    %914 = vmatpush1.bf16.msra.mxu0 0
    %915 = vmatprep.subr.bf16.mxu0 0
    %916 = vmatpush1.bf16.msra.mxu0 0
    %917 = vmatprep.subr.bf16.mxu0 0
    %918 = vmatpush1.bf16.msra.mxu0 %v898
    %919 = vmatprep.subr.bf16.mxu0 0
    %920 = vmatpush2.bf16.msra.mxu0 0
    %921 = vmatprep.subr.bf16.mxu0 0
    %922 = vmatpush2.bf16.msra.mxu0 0
    %923 = vmatprep.subr.bf16.mxu0 0
    %924 = vmatpush2.bf16.msra.mxu0 0
    %925 = vmatprep.subr.bf16.mxu0 0
    %926 = vmatpush2.bf16.msra.mxu0 0
    %927 = vmatprep.subr.bf16.mxu0 0
    %928 = vmatpush2.bf16.msra.mxu0 0
    %929 = vmatprep.subr.bf16.mxu0 0
    %930 = vmatpush2.bf16.msra.mxu0 0
    %931 = vmatprep.subr.bf16.mxu0 0
    %932 = vmatpush2.bf16.msra.mxu0 0
    %933 = vmatprep.subr.bf16.mxu0 0
    %934 = vmatpush2.bf16.msra.mxu0 0
    %935 = vmatprep.mubr.bf16.mxu0 0
    %936 = vmatmul.mubr.bf16.gmra.mxu0 %v901
    %v937 = vpop.f32.mrf.mxu0
    %v938 = vadd.f32 0.0, %v937
    %v939 = vpop.f32.mrf.mxu0
    %v940 = vpop.f32.mrf.mxu0
    %v941 = vadd.f32 0.0, %v940
    %v942 = vpop.f32.mrf.mxu0
    %943 = vdwg.mxu0
    %946 = vrot.lane.b32.xlu0 %v938, 16
    %v947 = vpop.permute.xlu0 %946
    %948 = vrot.lane.b32.xlu0 %v941, 16
    %v949 = vpop.permute.xlu0 %948
    %v952 = vsel %vm448, %v816, %v947
    %v953 = vsel %vm448, %v819, %v949
    %v954 = vld [vmem:[%s9] sm:$0xf]
    %v955 = vld [vmem:[%s9 + $0x4] sm:$0xf]
    %v956 = vld [vmem:[%s9 + $0x8] sm:$0xf]
    %v957 = vld [vmem:[%s9 + $0xc] sm:$0xf]
    %v958 = vpack.c.bf16 %v697, %v696
    %v959 = vpack.c.bf16 %v953, %v952
    %v964 = vunpack.c.l.b16 %v954
    %v965 = vunpack.c.l.b16 %v955
    %v966 = vunpack.c.l.b16 %v956
    %v967 = vunpack.c.l.b16 %v957
    %v968 = vpack.c.b16 %v965, %v964
    %v969 = vpack.c.b16 %v967, %v966
    %v973 = vsel %vm280, %v958, 0
    %v976 = vsel %vm280, %v959, 0
    %978 = vmatprep.subr.bf16.mxu0 0
    %979 = vmatpush1.bf16.msra.mxu0 0
    %980 = vmatprep.subr.bf16.mxu0 0
    %981 = vmatpush1.bf16.msra.mxu0 0
    %982 = vmatprep.subr.bf16.mxu0 0
    %983 = vmatpush1.bf16.msra.mxu0 0
    %984 = vmatprep.subr.bf16.mxu0 0
    %985 = vmatpush1.bf16.msra.mxu0 0
    %986 = vmatprep.subr.bf16.mxu0 0
    %987 = vmatpush1.bf16.msra.mxu0 0
    %988 = vmatprep.subr.bf16.mxu0 0
    %989 = vmatpush1.bf16.msra.mxu0 0
    %990 = vmatprep.subr.bf16.mxu0 0
    %991 = vmatpush1.bf16.msra.mxu0 %v969
    %992 = vmatprep.subr.bf16.mxu0 0
    %993 = vmatpush1.bf16.msra.mxu0 %v968
    %994 = vmatprep.subr.bf16.mxu0 0
    %995 = vmatpush2.bf16.msra.mxu0 0
    %996 = vmatprep.subr.bf16.mxu0 0
    %997 = vmatpush2.bf16.msra.mxu0 0
    %998 = vmatprep.subr.bf16.mxu0 0
    %999 = vmatpush2.bf16.msra.mxu0 0
    %1000 = vmatprep.subr.bf16.mxu0 0
    %1001 = vmatpush2.bf16.msra.mxu0 0
    %1002 = vmatprep.subr.bf16.mxu0 0
    %1003 = vmatpush2.bf16.msra.mxu0 0
    %1004 = vmatprep.subr.bf16.mxu0 0
    %1005 = vmatpush2.bf16.msra.mxu0 0
    %1006 = vmatprep.subr.bf16.mxu0 0
    %1007 = vmatpush2.bf16.msra.mxu0 0
    %1008 = vmatprep.subr.bf16.mxu0 0
    %1009 = vmatpush2.bf16.msra.mxu0 0
    %1010 = vmatprep.mubr.bf16.mxu0 0
    %1011 = vmatmul.mubr.bf16.gmra.mxu0 %v973
    %v1012 = vpop.f32.mrf.mxu0
    %v1013 = vadd.f32 0.0, %v1012
    %v1014 = vpop.f32.mrf.mxu0
    %v1015 = vpop.f32.mrf.mxu0
    %v1016 = vadd.f32 0.0, %v1015
    %v1017 = vpop.f32.mrf.mxu0
    %1018 = vmatprep.mubr.bf16.mxu0 0
    %1019 = vmatmul.mubr.bf16.gmra.mxu0 %v976
    %v1020 = vpop.f32.mrf.mxu0
    %v1021 = vadd.f32 0.0, %v1020
    %v1022 = vpop.f32.mrf.mxu0
    %v1023 = vpop.f32.mrf.mxu0
    %v1024 = vadd.f32 0.0, %v1023
    %v1025 = vpop.f32.mrf.mxu0
    %1026 = vdwg.mxu0
    %v1027 = vadd.f32 %v274, %v1013
    %v1028 = vadd.f32 %v275, %v1016
    %v1029 = vadd.f32 %v276, %v1021
    %v1030 = vadd.f32 %v277, %v1024
    %v1031 = vld [vmem:[%s10] sm:$0x1]
    %v1033 = vlaneseq
    %v1034 = vshrl.u32 %v1033, 7
    %v1035 = vsub.s32 0, %v1034
    %v1036 = vrot.slane %v1031, %v1035
    %v1038 = vadd.f32 %v1027, %v1036
    %v1039 = vadd.f32 %v1028, %v1036
    %v1040 = vadd.f32 %v1029, %v1036
    %v1041 = vadd.f32 %v1030, %v1036
    %v1042 = vld [vmem:[%s11] sm:$0x1]
    %v1043 = vld [vmem:[%s12] sm:$0x1]
    %v1044 = vsel %vm280, %v1038, 0.0
    %1045 = vadd.xlane.f32.xlu0 %v1044
    %v1046 = vpop.xlane.xlu0 %1045
    %v1047 = vsel %vm280, %v1039, 0.0
    %1048 = vadd.xlane.f32.xlu0 %v1047
    %v1049 = vpop.xlane.xlu0 %1048
    %v1050 = vsel %vm280, %v1040, 0.0
    %1051 = vadd.xlane.f32.xlu0 %v1050
    %v1052 = vpop.xlane.xlu0 %1051
    %v1053 = vsel %vm280, %v1041, 0.0
    %1054 = vadd.xlane.f32.xlu0 %v1053
    %v1055 = vpop.xlane.xlu0 %1054
    %v1056 = vmul.f32 %v1046, 0.03125
    %v1057 = vmul.f32 %v1049, 0.03125
    %v1058 = vmul.f32 %v1052, 0.03125
    %v1059 = vmul.f32 %v1055, 0.03125
    %v1060 = vmul.f32 %v1038, %v1038
    %v1061 = vmul.f32 %v1039, %v1039
    %v1062 = vmul.f32 %v1040, %v1040
    %v1063 = vmul.f32 %v1041, %v1041
    %v1064 = vsel %vm280, %v1060, 0.0
    %1065 = vadd.xlane.f32.xlu0 %v1064
    %v1066 = vpop.xlane.xlu0 %1065
    %v1067 = vsel %vm280, %v1061, 0.0
    %1068 = vadd.xlane.f32.xlu0 %v1067
    %v1069 = vpop.xlane.xlu0 %1068
    %v1070 = vsel %vm280, %v1062, 0.0
    %1071 = vadd.xlane.f32.xlu0 %v1070
    %v1072 = vpop.xlane.xlu0 %1071
    %v1073 = vsel %vm280, %v1063, 0.0
    %1074 = vadd.xlane.f32.xlu0 %v1073
    %v1075 = vpop.xlane.xlu0 %1074
    %v1076 = vmul.f32 %v1066, 0.03125
    %v1077 = vmul.f32 %v1069, 0.03125
    %v1078 = vmul.f32 %v1072, 0.03125
    %v1079 = vmul.f32 %v1075, 0.03125
    %v1080 = vmul.f32 %v1056, %v1056
    %v1081 = vmul.f32 %v1057, %v1057
    %v1082 = vmul.f32 %v1058, %v1058
    %v1083 = vmul.f32 %v1059, %v1059
    %v1084 = vsub.f32 %v1076, %v1080
    %v1085 = vsub.f32 %v1077, %v1081
    %v1086 = vsub.f32 %v1078, %v1082
    %v1087 = vsub.f32 %v1079, %v1083
    %v1088 = vsub.f32 %v1038, %v1056
    %v1089 = vsub.f32 %v1039, %v1057
    %v1090 = vsub.f32 %v1040, %v1058
    %v1091 = vsub.f32 %v1041, %v1059
    %v1092 = vadd.f32 %v1084, 1e-06
    %v1093 = vadd.f32 %v1085, 1e-06
    %v1094 = vadd.f32 %v1086, 1e-06
    %v1095 = vadd.f32 %v1087, 1e-06
    %v1096 = vrsqrt.pop %v1092
    %v1097 = vrsqrt.pop %v1093
    %v1098 = vrsqrt.pop %v1094
    %v1099 = vrsqrt.pop %v1095
    %v1100 = vmul.f32 %v1088, %v1096
    %v1101 = vmul.f32 %v1089, %v1097
    %v1102 = vmul.f32 %v1090, %v1098
    %v1103 = vmul.f32 %v1091, %v1099
    %v1105 = vlaneseq
    %v1106 = vshrl.u32 %v1105, 7
    %v1107 = vsub.s32 0, %v1106
    %v1108 = vrot.slane %v1042, %v1107
    %v1110 = vmul.f32 %v1100, %v1108
    %v1111 = vmul.f32 %v1101, %v1108
    %v1112 = vmul.f32 %v1102, %v1108
    %v1113 = vmul.f32 %v1103, %v1108
    %v1115 = vlaneseq
    %v1116 = vshrl.u32 %v1115, 7
    %v1117 = vsub.s32 0, %v1116
    %v1118 = vrot.slane %v1043, %v1117
    %v1120 = vadd.f32 %v1110, %v1118
    %v1121 = vadd.f32 %v1111, %v1118
    %v1122 = vadd.f32 %v1112, %v1118
    %v1123 = vadd.f32 %v1113, %v1118
    %v1124 = vld [vmem:[%s13] sm:$0xf]
    %v1125 = vld [vmem:[%s13 + $0x4] sm:$0xf]
    %v1126 = vld [vmem:[%s13 + $0x8] sm:$0xf]
    %v1127 = vld [vmem:[%s13 + $0xc] sm:$0xf]
    %v1128 = vpack.c.bf16 %v1121, %v1120
    %v1129 = vpack.c.bf16 %v1123, %v1122
    %v1130 = vld [vmem:[%s14] sm:$0x1]
    %v1132 = vlaneseq
    %v1133 = vshrl.u32 %v1132, 7
    %v1134 = vsub.s32 0, %v1133
    %v1135 = vrot.slane %v1130, %v1134
    %v1141 = vunpack.c.l.b16 %v1124
    %v1142 = vunpack.c.l.b16 %v1125
    %v1143 = vunpack.c.l.b16 %v1126
    %v1144 = vunpack.c.l.b16 %v1127
    %v1145 = vpack.c.b16 %v1142, %v1141
    %v1146 = vpack.c.b16 %v1144, %v1143
    %v1150 = vsel %vm280, %v1128, 0
    %v1153 = vsel %vm280, %v1129, 0
    %1155 = vmatprep.subr.bf16.mxu0 0
    %1156 = vmatpush1.bf16.msra.mxu0 0
    %1157 = vmatprep.subr.bf16.mxu0 0
    %1158 = vmatpush1.bf16.msra.mxu0 0
    %1159 = vmatprep.subr.bf16.mxu0 0
    %1160 = vmatpush1.bf16.msra.mxu0 0
    %1161 = vmatprep.subr.bf16.mxu0 0
    %1162 = vmatpush1.bf16.msra.mxu0 0
    %1163 = vmatprep.subr.bf16.mxu0 0
    %1164 = vmatpush1.bf16.msra.mxu0 0
    %1165 = vmatprep.subr.bf16.mxu0 0
    %1166 = vmatpush1.bf16.msra.mxu0 0
    %1167 = vmatprep.subr.bf16.mxu0 0
    %1168 = vmatpush1.bf16.msra.mxu0 %v1146
    %1169 = vmatprep.subr.bf16.mxu0 0
    %1170 = vmatpush1.bf16.msra.mxu0 %v1145
    %1171 = vmatprep.subr.bf16.mxu0 0
    %1172 = vmatpush2.bf16.msra.mxu0 0
    %1173 = vmatprep.subr.bf16.mxu0 0
    %1174 = vmatpush2.bf16.msra.mxu0 0
    %1175 = vmatprep.subr.bf16.mxu0 0
    %1176 = vmatpush2.bf16.msra.mxu0 0
    %1177 = vmatprep.subr.bf16.mxu0 0
    %1178 = vmatpush2.bf16.msra.mxu0 0
    %1179 = vmatprep.subr.bf16.mxu0 0
    %1180 = vmatpush2.bf16.msra.mxu0 0
    %1181 = vmatprep.subr.bf16.mxu0 0
    %1182 = vmatpush2.bf16.msra.mxu0 0
    %1183 = vmatprep.subr.bf16.mxu0 0
    %1184 = vmatpush2.bf16.msra.mxu0 0
    %1185 = vmatprep.subr.bf16.mxu0 0
    %1186 = vmatpush2.bf16.msra.mxu0 0
    %1187 = vmatprep.mubr.bf16.mxu0 0
    %1188 = vmatmul.mubr.bf16.gmra.mxu0 %v1150
    %v1189 = vpop.f32.mrf.mxu0
    %v1190 = vadd.f32 %v1135, %v1189
    %v1191 = vpop.f32.mrf.mxu0
    %v1192 = vpop.f32.mrf.mxu0
    %v1193 = vadd.f32 %v1135, %v1192
    %v1194 = vpop.f32.mrf.mxu0
    %1195 = vmatprep.mubr.bf16.mxu0 0
    %1196 = vmatmul.mubr.bf16.gmra.mxu0 %v1153
    %v1197 = vpop.f32.mrf.mxu0
    %v1198 = vadd.f32 %v1135, %v1197
    %v1199 = vpop.f32.mrf.mxu0
    %v1200 = vpop.f32.mrf.mxu0
    %v1201 = vadd.f32 %v1135, %v1200
    %v1202 = vpop.f32.mrf.mxu0
    %1203 = vdwg.mxu0
    %v1204 = vmul.f32 %v1190, 0.5
    %v1205 = vmul.f32 %v1193, 0.5
    %v1206 = vmul.f32 %v1198, 0.5
    %v1207 = vmul.f32 %v1201, 0.5
    %v1208 = vmul.f32 %v1190, 0.044715
    %v1209 = vmul.f32 %v1193, 0.044715
    %v1210 = vmul.f32 %v1198, 0.044715
    %v1211 = vmul.f32 %v1201, 0.044715
    %v1212 = vmul.f32 %v1208, %v1190
    %v1213 = vmul.f32 %v1209, %v1193
    %v1214 = vmul.f32 %v1210, %v1198
    %v1215 = vmul.f32 %v1211, %v1201
    %v1216 = vmul.f32 %v1212, %v1190
    %v1217 = vmul.f32 %v1213, %v1193
    %v1218 = vmul.f32 %v1214, %v1198
    %v1219 = vmul.f32 %v1215, %v1201
    %v1220 = vadd.f32 %v1190, %v1216
    %v1221 = vadd.f32 %v1193, %v1217
    %v1222 = vadd.f32 %v1198, %v1218
    %v1223 = vadd.f32 %v1201, %v1219
    %v1224 = vmul.f32 %v1220, 0.7978846
    %v1225 = vmul.f32 %v1221, 0.7978846
    %v1226 = vmul.f32 %v1222, 0.7978846
    %v1227 = vmul.f32 %v1223, 0.7978846
    %v1228 = vtanh.pop %v1224
    %v1229 = vtanh.pop %v1225
    %v1230 = vtanh.pop %v1226
    %v1231 = vtanh.pop %v1227
    %v1232 = vadd.f32 %v1228, 1.0
    %v1233 = vadd.f32 %v1229, 1.0
    %v1234 = vadd.f32 %v1230, 1.0
    %v1235 = vadd.f32 %v1231, 1.0
    %v1236 = vmul.f32 %v1204, %v1232
    %v1237 = vmul.f32 %v1205, %v1233
    %v1238 = vmul.f32 %v1206, %v1234
    %v1239 = vmul.f32 %v1207, %v1235
    %v1240 = vld [vmem:[%s15] sm:$0xf]
    %v1241 = vld [vmem:[%s15 + $0x4] sm:$0xf]
    %v1242 = vld [vmem:[%s15 + $0x8] sm:$0xf]
    %v1243 = vld [vmem:[%s15 + $0xc] sm:$0xf]
    %v1244 = vld [vmem:[%s15 + $0x10] sm:$0xf]
    %v1245 = vld [vmem:[%s15 + $0x14] sm:$0xf]
    %v1246 = vld [vmem:[%s15 + $0x18] sm:$0xf]
    %v1247 = vld [vmem:[%s15 + $0x1c] sm:$0xf]
    %v1248 = vld [vmem:[%s15 + $0x20] sm:$0xf]
    %v1249 = vld [vmem:[%s15 + $0x24] sm:$0xf]
    %v1250 = vld [vmem:[%s15 + $0x28] sm:$0xf]
    %v1251 = vld [vmem:[%s15 + $0x2c] sm:$0xf]
    %v1252 = vld [vmem:[%s15 + $0x30] sm:$0xf]
    %v1253 = vld [vmem:[%s15 + $0x34] sm:$0xf]
    %v1254 = vld [vmem:[%s15 + $0x38] sm:$0xf]
    %v1255 = vld [vmem:[%s15 + $0x3c] sm:$0xf]
    %v1256 = vpack.c.bf16 %v1237, %v1236
    %v1257 = vpack.c.bf16 %v1239, %v1238
    %v1274 = vunpack.c.l.b16 %v1240
    %v1275 = vunpack.c.l.b16 %v1241
    %v1276 = vunpack.c.l.b16 %v1242
    %v1277 = vunpack.c.l.b16 %v1243
    %v1278 = vunpack.c.l.b16 %v1244
    %v1279 = vunpack.c.l.b16 %v1245
    %v1280 = vunpack.c.l.b16 %v1246
    %v1281 = vunpack.c.l.b16 %v1247
    %v1282 = vunpack.c.l.b16 %v1248
    %v1283 = vunpack.c.l.b16 %v1249
    %v1284 = vunpack.c.l.b16 %v1250
    %v1285 = vunpack.c.l.b16 %v1251
    %v1286 = vunpack.c.l.b16 %v1252
    %v1287 = vunpack.c.l.b16 %v1253
    %v1288 = vunpack.c.l.b16 %v1254
    %v1289 = vunpack.c.l.b16 %v1255
    %v1290 = vpack.c.b16 %v1275, %v1274
    %v1291 = vpack.c.b16 %v1277, %v1276
    %v1292 = vpack.c.b16 %v1279, %v1278
    %v1293 = vpack.c.b16 %v1281, %v1280
    %v1294 = vpack.c.b16 %v1283, %v1282
    %v1295 = vpack.c.b16 %v1285, %v1284
    %v1296 = vpack.c.b16 %v1287, %v1286
    %v1297 = vpack.c.b16 %v1289, %v1288
    %1306 = vmatprep.subr.bf16.mxu0 0
    %1307 = vmatpush1.bf16.msra.mxu0 %v1297
    %1308 = vmatprep.subr.bf16.mxu0 0
    %1309 = vmatpush1.bf16.msra.mxu0 %v1296
    %1310 = vmatprep.subr.bf16.mxu0 0
    %1311 = vmatpush1.bf16.msra.mxu0 %v1295
    %1312 = vmatprep.subr.bf16.mxu0 0
    %1313 = vmatpush1.bf16.msra.mxu0 %v1294
    %1314 = vmatprep.subr.bf16.mxu0 0
    %1315 = vmatpush1.bf16.msra.mxu0 %v1293
    %1316 = vmatprep.subr.bf16.mxu0 0
    %1317 = vmatpush1.bf16.msra.mxu0 %v1292
    %1318 = vmatprep.subr.bf16.mxu0 0
    %1319 = vmatpush1.bf16.msra.mxu0 %v1291
    %1320 = vmatprep.subr.bf16.mxu0 0
    %1321 = vmatpush1.bf16.msra.mxu0 %v1290
    %1322 = vmatprep.subr.bf16.mxu0 0
    %1323 = vmatpush2.bf16.msra.mxu0 0
    %1324 = vmatprep.subr.bf16.mxu0 0
    %1325 = vmatpush2.bf16.msra.mxu0 0
    %1326 = vmatprep.subr.bf16.mxu0 0
    %1327 = vmatpush2.bf16.msra.mxu0 0
    %1328 = vmatprep.subr.bf16.mxu0 0
    %1329 = vmatpush2.bf16.msra.mxu0 0
    %1330 = vmatprep.subr.bf16.mxu0 0
    %1331 = vmatpush2.bf16.msra.mxu0 0
    %1332 = vmatprep.subr.bf16.mxu0 0
    %1333 = vmatpush2.bf16.msra.mxu0 0
    %1334 = vmatprep.subr.bf16.mxu0 0
    %1335 = vmatpush2.bf16.msra.mxu0 0
    %1336 = vmatprep.subr.bf16.mxu0 0
    %1337 = vmatpush2.bf16.msra.mxu0 0
    %1338 = vmatprep.mubr.bf16.mxu0 0
    %1339 = vmatmul.mubr.bf16.gmra.mxu0 %v1256
    %v1340 = vpop.f32.mrf.mxu0
    %v1341 = vadd.f32 0.0, %v1340
    %v1342 = vpop.f32.mrf.mxu0
    %v1343 = vpop.f32.mrf.mxu0
    %v1344 = vadd.f32 0.0, %v1343
    %v1345 = vpop.f32.mrf.mxu0
    %1346 = vmatprep.mubr.bf16.mxu0 0
    %1347 = vmatmul.mubr.bf16.gmra.mxu0 %v1257
    %v1348 = vpop.f32.mrf.mxu0
    %v1349 = vadd.f32 0.0, %v1348
    %v1350 = vpop.f32.mrf.mxu0
    %v1351 = vpop.f32.mrf.mxu0
    %v1352 = vadd.f32 0.0, %v1351
    %v1353 = vpop.f32.mrf.mxu0
    %1354 = vdwg.mxu0
    %v1355 = vadd.f32 %v1038, %v1341
    %v1356 = vadd.f32 %v1039, %v1344
    %v1357 = vadd.f32 %v1040, %v1349
    %v1358 = vadd.f32 %v1041, %v1352
    %v1359 = vld [vmem:[%s16] sm:$0x1]
    %v1361 = vlaneseq
    %v1362 = vshrl.u32 %v1361, 7
    %v1363 = vsub.s32 0, %v1362
    %v1364 = vrot.slane %v1359, %v1363
    %v1366 = vadd.f32 %v1355, %v1364
    %v1367 = vadd.f32 %v1356, %v1364
    %v1368 = vadd.f32 %v1357, %v1364
    %v1369 = vadd.f32 %v1358, %v1364
    %v1370 = vld [vmem:[%s17] sm:$0xf]
    %v1371 = vld [vmem:[%s17 + $0x4] sm:$0xf]
    %v1372 = vld [vmem:[%s17 + $0x8] sm:$0xf]
    %v1373 = vld [vmem:[%s17 + $0xc] sm:$0xf]
    %v1374 = vpack.c.bf16 %v1367, %v1366
    %v1375 = vpack.c.bf16 %v1369, %v1368
    %v1380 = vunpack.c.l.b16 %v1370
    %v1381 = vunpack.c.l.b16 %v1371
    %v1382 = vunpack.c.l.b16 %v1372
    %v1383 = vunpack.c.l.b16 %v1373
    %v1384 = vpack.c.b16 %v1381, %v1380
    %v1385 = vpack.c.b16 %v1383, %v1382
    %v1389 = vsel %vm280, %v1374, 0
    %v1392 = vsel %vm280, %v1375, 0
    %1394 = vmatprep.subr.bf16.mxu0 0
    %1395 = vmatpush1.bf16.msra.mxu0 0
    %1396 = vmatprep.subr.bf16.mxu0 0
    %1397 = vmatpush1.bf16.msra.mxu0 0
    %1398 = vmatprep.subr.bf16.mxu0 0
    %1399 = vmatpush1.bf16.msra.mxu0 0
    %1400 = vmatprep.subr.bf16.mxu0 0
    %1401 = vmatpush1.bf16.msra.mxu0 0
    %1402 = vmatprep.subr.bf16.mxu0 0
    %1403 = vmatpush1.bf16.msra.mxu0 0
    %1404 = vmatprep.subr.bf16.mxu0 0
    %1405 = vmatpush1.bf16.msra.mxu0 0
    %1406 = vmatprep.subr.bf16.mxu0 0
    %1407 = vmatpush1.bf16.msra.mxu0 %v1385
    %1408 = vmatprep.subr.bf16.mxu0 0
    %1409 = vmatpush1.bf16.msra.mxu0 %v1384
    %1410 = vmatprep.subr.bf16.mxu0 0
    %1411 = vmatpush2.bf16.msra.mxu0 0
    %1412 = vmatprep.subr.bf16.mxu0 0
    %1413 = vmatpush2.bf16.msra.mxu0 0
    %1414 = vmatprep.subr.bf16.mxu0 0
    %1415 = vmatpush2.bf16.msra.mxu0 0
    %1416 = vmatprep.subr.bf16.mxu0 0
    %1417 = vmatpush2.bf16.msra.mxu0 0
    %1418 = vmatprep.subr.bf16.mxu0 0
    %1419 = vmatpush2.bf16.msra.mxu0 0
    %1420 = vmatprep.subr.bf16.mxu0 0
    %1421 = vmatpush2.bf16.msra.mxu0 0
    %1422 = vmatprep.subr.bf16.mxu0 0
    %1423 = vmatpush2.bf16.msra.mxu0 0
    %1424 = vmatprep.subr.bf16.mxu0 0
    %1425 = vmatpush2.bf16.msra.mxu0 0
    %1426 = vmatprep.mubr.bf16.mxu0 0
    %1427 = vmatmul.mubr.bf16.gmra.mxu0 %v1389
    %v1428 = vpop.f32.mrf.mxu0
    %v1429 = vadd.f32 0.0, %v1428
    %v1430 = vpop.f32.mrf.mxu0
    %v1431 = vpop.f32.mrf.mxu0
    %v1432 = vadd.f32 0.0, %v1431
    %v1433 = vpop.f32.mrf.mxu0
    %1434 = vmatprep.mubr.bf16.mxu0 0
    %1435 = vmatmul.mubr.bf16.gmra.mxu0 %v1392
    %v1436 = vpop.f32.mrf.mxu0
    %v1437 = vadd.f32 0.0, %v1436
    %v1438 = vpop.f32.mrf.mxu0
    %v1439 = vpop.f32.mrf.mxu0
    %v1440 = vadd.f32 0.0, %v1439
    %v1441 = vpop.f32.mrf.mxu0
    %1442 = vdwg.mxu0
    %v1443 = vld [vmem:[%s18] sm:$0x1]
    %v1444 = vld [vmem:[%s19] sm:$0x1]
    %v1445 = vsel %vm448, %v1429, 0.0
    %1446 = vadd.xlane.f32.xlu0 %v1445
    %v1447 = vpop.xlane.xlu0 %1446
    %v1448 = vsel %vm448, %v1432, 0.0
    %1449 = vadd.xlane.f32.xlu0 %v1448
    %v1450 = vpop.xlane.xlu0 %1449
    %v1451 = vsel %vm448, %v1437, 0.0
    %1452 = vadd.xlane.f32.xlu0 %v1451
    %v1453 = vpop.xlane.xlu0 %1452
    %v1454 = vsel %vm448, %v1440, 0.0
    %1455 = vadd.xlane.f32.xlu0 %v1454
    %v1456 = vpop.xlane.xlu0 %1455
    %v1457 = vmul.f32 %v1447, 0.0625
    %v1458 = vmul.f32 %v1450, 0.0625
    %v1459 = vmul.f32 %v1453, 0.0625
    %v1460 = vmul.f32 %v1456, 0.0625
    %v1461 = vmul.f32 %v1429, %v1429
    %v1462 = vmul.f32 %v1432, %v1432
    %v1463 = vmul.f32 %v1437, %v1437
    %v1464 = vmul.f32 %v1440, %v1440
    %v1465 = vsel %vm448, %v1461, 0.0
    %1466 = vadd.xlane.f32.xlu0 %v1465
    %v1467 = vpop.xlane.xlu0 %1466
    %v1468 = vsel %vm448, %v1462, 0.0
    %1469 = vadd.xlane.f32.xlu0 %v1468
    %v1470 = vpop.xlane.xlu0 %1469
    %v1471 = vsel %vm448, %v1463, 0.0
    %1472 = vadd.xlane.f32.xlu0 %v1471
    %v1473 = vpop.xlane.xlu0 %1472
    %v1474 = vsel %vm448, %v1464, 0.0
    %1475 = vadd.xlane.f32.xlu0 %v1474
    %v1476 = vpop.xlane.xlu0 %1475
    %v1477 = vmul.f32 %v1467, 0.0625
    %v1478 = vmul.f32 %v1470, 0.0625
    %v1479 = vmul.f32 %v1473, 0.0625
    %v1480 = vmul.f32 %v1476, 0.0625
    %v1481 = vmul.f32 %v1457, %v1457
    %v1482 = vmul.f32 %v1458, %v1458
    %v1483 = vmul.f32 %v1459, %v1459
    %v1484 = vmul.f32 %v1460, %v1460
    %v1485 = vsub.f32 %v1477, %v1481
    %v1486 = vsub.f32 %v1478, %v1482
    %v1487 = vsub.f32 %v1479, %v1483
    %v1488 = vsub.f32 %v1480, %v1484
    %v1489 = vsub.f32 %v1429, %v1457
    %v1490 = vsub.f32 %v1432, %v1458
    %v1491 = vsub.f32 %v1437, %v1459
    %v1492 = vsub.f32 %v1440, %v1460
    %v1493 = vadd.f32 %v1485, 1e-06
    %v1494 = vadd.f32 %v1486, 1e-06
    %v1495 = vadd.f32 %v1487, 1e-06
    %v1496 = vadd.f32 %v1488, 1e-06
    %v1497 = vrsqrt.pop %v1493
    %v1498 = vrsqrt.pop %v1494
    %v1499 = vrsqrt.pop %v1495
    %v1500 = vrsqrt.pop %v1496
    %v1501 = vmul.f32 %v1489, %v1497
    %v1502 = vmul.f32 %v1490, %v1498
    %v1503 = vmul.f32 %v1491, %v1499
    %v1504 = vmul.f32 %v1492, %v1500
    %v1506 = vlaneseq
    %v1507 = vshrl.u32 %v1506, 7
    %v1508 = vsub.s32 0, %v1507
    %v1509 = vrot.slane %v1443, %v1508
    %v1511 = vmul.f32 %v1501, %v1509
    %v1512 = vmul.f32 %v1502, %v1509
    %v1513 = vmul.f32 %v1503, %v1509
    %v1514 = vmul.f32 %v1504, %v1509
    %v1516 = vlaneseq
    %v1517 = vshrl.u32 %v1516, 7
    %v1518 = vsub.s32 0, %v1517
    %v1519 = vrot.slane %v1444, %v1518
    %v1521 = vadd.f32 %v1511, %v1519
    %v1522 = vadd.f32 %v1512, %v1519
    %v1523 = vadd.f32 %v1513, %v1519
    %v1524 = vadd.f32 %v1514, %v1519
    %v1525 = vld [vmem:[%s20] sm:$0xf]
    %v1526 = vld [vmem:[%s20 + $0x4] sm:$0xf]
    %v1527 = vld [vmem:[%s21] sm:$0xf]
    %v1528 = vld [vmem:[%s21 + $0x4] sm:$0xf]
    %v1529 = vpack.c.bf16 %v1522, %v1521
    %v1532 = vunpack.c.l.b16 %v1525
    %v1533 = vunpack.c.l.b16 %v1526
    %v1534 = vpack.c.b16 %v1533, %v1532
    %v1536 = vsel %vm448, %v1534, 0
    %1538 = vmatprep.subr.bf16.mxu0 0
    %1539 = vmatpush1.bf16.msra.mxu0 0
    %1540 = vmatprep.subr.bf16.mxu0 0
    %1541 = vmatpush1.bf16.msra.mxu0 0
    %1542 = vmatprep.subr.bf16.mxu0 0
    %1543 = vmatpush1.bf16.msra.mxu0 0
    %1544 = vmatprep.subr.bf16.mxu0 0
    %1545 = vmatpush1.bf16.msra.mxu0 0
    %1546 = vmatprep.subr.bf16.mxu0 0
    %1547 = vmatpush1.bf16.msra.mxu0 0
    %1548 = vmatprep.subr.bf16.mxu0 0
    %1549 = vmatpush1.bf16.msra.mxu0 0
    %1550 = vmatprep.subr.bf16.mxu0 0
    %1551 = vmatpush1.bf16.msra.mxu0 0
    %1552 = vmatprep.subr.bf16.mxu0 0
    %1553 = vmatpush1.bf16.msra.mxu0 %v1529
    %1554 = vmatprep.subr.bf16.mxu0 0
    %1555 = vmatpush2.bf16.msra.mxu0 0
    %1556 = vmatprep.subr.bf16.mxu0 0
    %1557 = vmatpush2.bf16.msra.mxu0 0
    %1558 = vmatprep.subr.bf16.mxu0 0
    %1559 = vmatpush2.bf16.msra.mxu0 0
    %1560 = vmatprep.subr.bf16.mxu0 0
    %1561 = vmatpush2.bf16.msra.mxu0 0
    %1562 = vmatprep.subr.bf16.mxu0 0
    %1563 = vmatpush2.bf16.msra.mxu0 0
    %1564 = vmatprep.subr.bf16.mxu0 0
    %1565 = vmatpush2.bf16.msra.mxu0 0
    %1566 = vmatprep.subr.bf16.mxu0 0
    %1567 = vmatpush2.bf16.msra.mxu0 0
    %1568 = vmatprep.subr.bf16.mxu0 0
    %1569 = vmatpush2.bf16.msra.mxu0 0
    %1570 = vmatprep.mubr.bf16.mxu0 0
    %1571 = vmatmul.mubr.bf16.gmra.mxu0 %v1536
    %v1572 = vpop.f32.mrf.mxu0
    %v1573 = vadd.f32 0.0, %v1572
    %v1574 = vpop.f32.mrf.mxu0
    %v1575 = vpop.f32.mrf.mxu0
    %v1576 = vadd.f32 0.0, %v1575
    %v1577 = vpop.f32.mrf.mxu0
    %1578 = vdwg.mxu0
    %v1579 = vpack.c.bf16 %v1576, %v1573
    %v1580 = vld [vmem:[%s20 + $0x8] sm:$0xf]
    %v1581 = vld [vmem:[%s20 + $0xc] sm:$0xf]
    %v1582 = vld [vmem:[%s21 + $0x8] sm:$0xf]
    %v1583 = vld [vmem:[%s21 + $0xc] sm:$0xf]
    %v1586 = vunpack.c.l.b16 %v1580
    %v1587 = vunpack.c.l.b16 %v1581
    %v1588 = vpack.c.b16 %v1587, %v1586
    %v1590 = vsel %vm448, %v1588, 0
    %1592 = vmatprep.subr.bf16.mxu0 0
    %1593 = vmatpush1.bf16.msra.mxu0 0
    %1594 = vmatprep.subr.bf16.mxu0 0
    %1595 = vmatpush1.bf16.msra.mxu0 0
    %1596 = vmatprep.subr.bf16.mxu0 0
    %1597 = vmatpush1.bf16.msra.mxu0 0
    %1598 = vmatprep.subr.bf16.mxu0 0
    %1599 = vmatpush1.bf16.msra.mxu0 0
    %1600 = vmatprep.subr.bf16.mxu0 0
    %1601 = vmatpush1.bf16.msra.mxu0 0
    %1602 = vmatprep.subr.bf16.mxu0 0
    %1603 = vmatpush1.bf16.msra.mxu0 0
    %1604 = vmatprep.subr.bf16.mxu0 0
    %1605 = vmatpush1.bf16.msra.mxu0 0
    %1606 = vmatprep.subr.bf16.mxu0 0
    %1607 = vmatpush1.bf16.msra.mxu0 %v1529
    %1608 = vmatprep.subr.bf16.mxu0 0
    %1609 = vmatpush2.bf16.msra.mxu0 0
    %1610 = vmatprep.subr.bf16.mxu0 0
    %1611 = vmatpush2.bf16.msra.mxu0 0
    %1612 = vmatprep.subr.bf16.mxu0 0
    %1613 = vmatpush2.bf16.msra.mxu0 0
    %1614 = vmatprep.subr.bf16.mxu0 0
    %1615 = vmatpush2.bf16.msra.mxu0 0
    %1616 = vmatprep.subr.bf16.mxu0 0
    %1617 = vmatpush2.bf16.msra.mxu0 0
    %1618 = vmatprep.subr.bf16.mxu0 0
    %1619 = vmatpush2.bf16.msra.mxu0 0
    %1620 = vmatprep.subr.bf16.mxu0 0
    %1621 = vmatpush2.bf16.msra.mxu0 0
    %1622 = vmatprep.subr.bf16.mxu0 0
    %1623 = vmatpush2.bf16.msra.mxu0 0
    %1624 = vmatprep.mubr.bf16.mxu0 0
    %1625 = vmatmul.mubr.bf16.gmra.mxu0 %v1590
    %v1626 = vpop.f32.mrf.mxu0
    %v1627 = vadd.f32 0.0, %v1626
    %v1628 = vpop.f32.mrf.mxu0
    %v1629 = vpop.f32.mrf.mxu0
    %v1630 = vadd.f32 0.0, %v1629
    %v1631 = vpop.f32.mrf.mxu0
    %1632 = vdwg.mxu0
    %v1633 = vpack.c.bf16 %v1630, %v1627
    %v1636 = vunpack.c.l.b16 %v1582
    %v1637 = vunpack.c.l.b16 %v1583
    %v1638 = vpack.c.b16 %v1637, %v1636
    %v1641 = vsel %vm448, %v1633, 0
    %1643 = vmatprep.subr.bf16.mxu0 0
    %1644 = vmatpush1.bf16.msra.mxu0 0
    %1645 = vmatprep.subr.bf16.mxu0 0
    %1646 = vmatpush1.bf16.msra.mxu0 0
    %1647 = vmatprep.subr.bf16.mxu0 0
    %1648 = vmatpush1.bf16.msra.mxu0 0
    %1649 = vmatprep.subr.bf16.mxu0 0
    %1650 = vmatpush1.bf16.msra.mxu0 0
    %1651 = vmatprep.subr.bf16.mxu0 0
    %1652 = vmatpush1.bf16.msra.mxu0 0
    %1653 = vmatprep.subr.bf16.mxu0 0
    %1654 = vmatpush1.bf16.msra.mxu0 0
    %1655 = vmatprep.subr.bf16.mxu0 0
    %1656 = vmatpush1.bf16.msra.mxu0 0
    %1657 = vmatprep.subr.bf16.mxu0 0
    %1658 = vmatpush1.bf16.msra.mxu0 %v1638
    %1659 = vmatprep.subr.bf16.mxu0 0
    %1660 = vmatpush2.bf16.msra.mxu0 0
    %1661 = vmatprep.subr.bf16.mxu0 0
    %1662 = vmatpush2.bf16.msra.mxu0 0
    %1663 = vmatprep.subr.bf16.mxu0 0
    %1664 = vmatpush2.bf16.msra.mxu0 0
    %1665 = vmatprep.subr.bf16.mxu0 0
    %1666 = vmatpush2.bf16.msra.mxu0 0
    %1667 = vmatprep.subr.bf16.mxu0 0
    %1668 = vmatpush2.bf16.msra.mxu0 0
    %1669 = vmatprep.subr.bf16.mxu0 0
    %1670 = vmatpush2.bf16.msra.mxu0 0
    %1671 = vmatprep.subr.bf16.mxu0 0
    %1672 = vmatpush2.bf16.msra.mxu0 0
    %1673 = vmatprep.subr.bf16.mxu0 0
    %1674 = vmatpush2.bf16.msra.mxu0 0
    %1675 = vmatprep.mubr.bf16.mxu0 0
    %1676 = vmatmul.mubr.bf16.gmra.mxu0 %v1641
    %v1677 = vpop.f32.mrf.mxu0
    %v1678 = vadd.f32 0.0, %v1677
    %v1679 = vpop.f32.mrf.mxu0
    %v1680 = vpop.f32.mrf.mxu0
    %v1681 = vadd.f32 0.0, %v1680
    %v1682 = vpop.f32.mrf.mxu0
    %1683 = vdwg.mxu0
    %v1686 = vunpack.c.l.b16 %v1527
    %v1687 = vunpack.c.l.b16 %v1528
    %v1688 = vpack.c.b16 %v1687, %v1686
    %v1691 = vsel %vm448, %v1579, 0
    %1693 = vmatprep.subr.bf16.mxu0 0
    %1694 = vmatpush1.bf16.msra.mxu0 0
    %1695 = vmatprep.subr.bf16.mxu0 0
    %1696 = vmatpush1.bf16.msra.mxu0 0
    %1697 = vmatprep.subr.bf16.mxu0 0
    %1698 = vmatpush1.bf16.msra.mxu0 0
    %1699 = vmatprep.subr.bf16.mxu0 0
    %1700 = vmatpush1.bf16.msra.mxu0 0
    %1701 = vmatprep.subr.bf16.mxu0 0
    %1702 = vmatpush1.bf16.msra.mxu0 0
    %1703 = vmatprep.subr.bf16.mxu0 0
    %1704 = vmatpush1.bf16.msra.mxu0 0
    %1705 = vmatprep.subr.bf16.mxu0 0
    %1706 = vmatpush1.bf16.msra.mxu0 0
    %1707 = vmatprep.subr.bf16.mxu0 0
    %1708 = vmatpush1.bf16.msra.mxu0 %v1688
    %1709 = vmatprep.subr.bf16.mxu0 0
    %1710 = vmatpush2.bf16.msra.mxu0 0
    %1711 = vmatprep.subr.bf16.mxu0 0
    %1712 = vmatpush2.bf16.msra.mxu0 0
    %1713 = vmatprep.subr.bf16.mxu0 0
    %1714 = vmatpush2.bf16.msra.mxu0 0
    %1715 = vmatprep.subr.bf16.mxu0 0
    %1716 = vmatpush2.bf16.msra.mxu0 0
    %1717 = vmatprep.subr.bf16.mxu0 0
    %1718 = vmatpush2.bf16.msra.mxu0 0
    %1719 = vmatprep.subr.bf16.mxu0 0
    %1720 = vmatpush2.bf16.msra.mxu0 0
    %1721 = vmatprep.subr.bf16.mxu0 0
    %1722 = vmatpush2.bf16.msra.mxu0 0
    %1723 = vmatprep.subr.bf16.mxu0 0
    %1724 = vmatpush2.bf16.msra.mxu0 0
    %1725 = vmatprep.mubr.bf16.mxu0 0
    %1726 = vmatmul.mubr.bf16.gmra.mxu0 %v1691
    %v1727 = vpop.f32.mrf.mxu0
    %v1728 = vadd.f32 %v1678, %v1727
    %v1729 = vpop.f32.mrf.mxu0
    %v1730 = vpop.f32.mrf.mxu0
    %v1731 = vadd.f32 %v1681, %v1730
    %v1732 = vpop.f32.mrf.mxu0
    %1733 = vdwg.mxu0
    %v1734 = vld [vmem:[%s20 + $0x10] sm:$0xf]
    %v1735 = vld [vmem:[%s20 + $0x14] sm:$0xf]
    %v1736 = vld [vmem:[%s21 + $0x10] sm:$0xf]
    %v1737 = vld [vmem:[%s21 + $0x14] sm:$0xf]
    %v1740 = vunpack.c.l.b16 %v1734
    %v1741 = vunpack.c.l.b16 %v1735
    %v1742 = vpack.c.b16 %v1741, %v1740
    %v1744 = vsel %vm448, %v1742, 0
    %1746 = vmatprep.subr.bf16.mxu0 0
    %1747 = vmatpush1.bf16.msra.mxu0 0
    %1748 = vmatprep.subr.bf16.mxu0 0
    %1749 = vmatpush1.bf16.msra.mxu0 0
    %1750 = vmatprep.subr.bf16.mxu0 0
    %1751 = vmatpush1.bf16.msra.mxu0 0
    %1752 = vmatprep.subr.bf16.mxu0 0
    %1753 = vmatpush1.bf16.msra.mxu0 0
    %1754 = vmatprep.subr.bf16.mxu0 0
    %1755 = vmatpush1.bf16.msra.mxu0 0
    %1756 = vmatprep.subr.bf16.mxu0 0
    %1757 = vmatpush1.bf16.msra.mxu0 0
    %1758 = vmatprep.subr.bf16.mxu0 0
    %1759 = vmatpush1.bf16.msra.mxu0 0
    %1760 = vmatprep.subr.bf16.mxu0 0
    %1761 = vmatpush1.bf16.msra.mxu0 %v1529
    %1762 = vmatprep.subr.bf16.mxu0 0
    %1763 = vmatpush2.bf16.msra.mxu0 0
    %1764 = vmatprep.subr.bf16.mxu0 0
    %1765 = vmatpush2.bf16.msra.mxu0 0
    %1766 = vmatprep.subr.bf16.mxu0 0
    %1767 = vmatpush2.bf16.msra.mxu0 0
    %1768 = vmatprep.subr.bf16.mxu0 0
    %1769 = vmatpush2.bf16.msra.mxu0 0
    %1770 = vmatprep.subr.bf16.mxu0 0
    %1771 = vmatpush2.bf16.msra.mxu0 0
    %1772 = vmatprep.subr.bf16.mxu0 0
    %1773 = vmatpush2.bf16.msra.mxu0 0
    %1774 = vmatprep.subr.bf16.mxu0 0
    %1775 = vmatpush2.bf16.msra.mxu0 0
    %1776 = vmatprep.subr.bf16.mxu0 0
    %1777 = vmatpush2.bf16.msra.mxu0 0
    %1778 = vmatprep.mubr.bf16.mxu0 0
    %1779 = vmatmul.mubr.bf16.gmra.mxu0 %v1744
    %v1780 = vpop.f32.mrf.mxu0
    %v1781 = vadd.f32 0.0, %v1780
    %v1782 = vpop.f32.mrf.mxu0
    %v1783 = vpop.f32.mrf.mxu0
    %v1784 = vadd.f32 0.0, %v1783
    %v1785 = vpop.f32.mrf.mxu0
    %1786 = vdwg.mxu0
    %v1787 = vpack.c.bf16 %v1784, %v1781
    %v1790 = vunpack.c.l.b16 %v1736
    %v1791 = vunpack.c.l.b16 %v1737
    %v1792 = vpack.c.b16 %v1791, %v1790
    %v1795 = vsel %vm448, %v1787, 0
    %1797 = vmatprep.subr.bf16.mxu0 0
    %1798 = vmatpush1.bf16.msra.mxu0 0
    %1799 = vmatprep.subr.bf16.mxu0 0
    %1800 = vmatpush1.bf16.msra.mxu0 0
    %1801 = vmatprep.subr.bf16.mxu0 0
    %1802 = vmatpush1.bf16.msra.mxu0 0
    %1803 = vmatprep.subr.bf16.mxu0 0
    %1804 = vmatpush1.bf16.msra.mxu0 0
    %1805 = vmatprep.subr.bf16.mxu0 0
    %1806 = vmatpush1.bf16.msra.mxu0 0
    %1807 = vmatprep.subr.bf16.mxu0 0
    %1808 = vmatpush1.bf16.msra.mxu0 0
    %1809 = vmatprep.subr.bf16.mxu0 0
    %1810 = vmatpush1.bf16.msra.mxu0 0
    %1811 = vmatprep.subr.bf16.mxu0 0
    %1812 = vmatpush1.bf16.msra.mxu0 %v1792
    %1813 = vmatprep.subr.bf16.mxu0 0
    %1814 = vmatpush2.bf16.msra.mxu0 0
    %1815 = vmatprep.subr.bf16.mxu0 0
    %1816 = vmatpush2.bf16.msra.mxu0 0
    %1817 = vmatprep.subr.bf16.mxu0 0
    %1818 = vmatpush2.bf16.msra.mxu0 0
    %1819 = vmatprep.subr.bf16.mxu0 0
    %1820 = vmatpush2.bf16.msra.mxu0 0
    %1821 = vmatprep.subr.bf16.mxu0 0
    %1822 = vmatpush2.bf16.msra.mxu0 0
    %1823 = vmatprep.subr.bf16.mxu0 0
    %1824 = vmatpush2.bf16.msra.mxu0 0
    %1825 = vmatprep.subr.bf16.mxu0 0
    %1826 = vmatpush2.bf16.msra.mxu0 0
    %1827 = vmatprep.subr.bf16.mxu0 0
    %1828 = vmatpush2.bf16.msra.mxu0 0
    %1829 = vmatprep.mubr.bf16.mxu0 0
    %1830 = vmatmul.mubr.bf16.gmra.mxu0 %v1795
    %v1831 = vpop.f32.mrf.mxu0
    %v1832 = vadd.f32 0.0, %v1831
    %v1833 = vpop.f32.mrf.mxu0
    %v1834 = vpop.f32.mrf.mxu0
    %v1835 = vadd.f32 0.0, %v1834
    %v1836 = vpop.f32.mrf.mxu0
    %1837 = vdwg.mxu0
    %v1838 = vadd.f32 %v1728, %v1832
    %v1839 = vadd.f32 %v1731, %v1835
    %v1840 = vld [vmem:[%s20 + $0x18] sm:$0xf]
    %v1841 = vld [vmem:[%s20 + $0x1c] sm:$0xf]
    %v1842 = vld [vmem:[%s21 + $0x18] sm:$0xf]
    %v1843 = vld [vmem:[%s21 + $0x1c] sm:$0xf]
    %v1846 = vunpack.c.l.b16 %v1840
    %v1847 = vunpack.c.l.b16 %v1841
    %v1848 = vpack.c.b16 %v1847, %v1846
    %v1850 = vsel %vm448, %v1848, 0
    %1852 = vmatprep.subr.bf16.mxu0 0
    %1853 = vmatpush1.bf16.msra.mxu0 0
    %1854 = vmatprep.subr.bf16.mxu0 0
    %1855 = vmatpush1.bf16.msra.mxu0 0
    %1856 = vmatprep.subr.bf16.mxu0 0
    %1857 = vmatpush1.bf16.msra.mxu0 0
    %1858 = vmatprep.subr.bf16.mxu0 0
    %1859 = vmatpush1.bf16.msra.mxu0 0
    %1860 = vmatprep.subr.bf16.mxu0 0
    %1861 = vmatpush1.bf16.msra.mxu0 0
    %1862 = vmatprep.subr.bf16.mxu0 0
    %1863 = vmatpush1.bf16.msra.mxu0 0
    %1864 = vmatprep.subr.bf16.mxu0 0
    %1865 = vmatpush1.bf16.msra.mxu0 0
    %1866 = vmatprep.subr.bf16.mxu0 0
    %1867 = vmatpush1.bf16.msra.mxu0 %v1529
    %1868 = vmatprep.subr.bf16.mxu0 0
    %1869 = vmatpush2.bf16.msra.mxu0 0
    %1870 = vmatprep.subr.bf16.mxu0 0
    %1871 = vmatpush2.bf16.msra.mxu0 0
    %1872 = vmatprep.subr.bf16.mxu0 0
    %1873 = vmatpush2.bf16.msra.mxu0 0
    %1874 = vmatprep.subr.bf16.mxu0 0
    %1875 = vmatpush2.bf16.msra.mxu0 0
    %1876 = vmatprep.subr.bf16.mxu0 0
    %1877 = vmatpush2.bf16.msra.mxu0 0
    %1878 = vmatprep.subr.bf16.mxu0 0
    %1879 = vmatpush2.bf16.msra.mxu0 0
    %1880 = vmatprep.subr.bf16.mxu0 0
    %1881 = vmatpush2.bf16.msra.mxu0 0
    %1882 = vmatprep.subr.bf16.mxu0 0
    %1883 = vmatpush2.bf16.msra.mxu0 0
    %1884 = vmatprep.mubr.bf16.mxu0 0
    %1885 = vmatmul.mubr.bf16.gmra.mxu0 %v1850
    %v1886 = vpop.f32.mrf.mxu0
    %v1887 = vadd.f32 0.0, %v1886
    %v1888 = vpop.f32.mrf.mxu0
    %v1889 = vpop.f32.mrf.mxu0
    %v1890 = vadd.f32 0.0, %v1889
    %v1891 = vpop.f32.mrf.mxu0
    %1892 = vdwg.mxu0
    %v1893 = vpack.c.bf16 %v1890, %v1887
    %v1896 = vunpack.c.l.b16 %v1842
    %v1897 = vunpack.c.l.b16 %v1843
    %v1898 = vpack.c.b16 %v1897, %v1896
    %v1901 = vsel %vm448, %v1893, 0
    %1903 = vmatprep.subr.bf16.mxu0 0
    %1904 = vmatpush1.bf16.msra.mxu0 0
    %1905 = vmatprep.subr.bf16.mxu0 0
    %1906 = vmatpush1.bf16.msra.mxu0 0
    %1907 = vmatprep.subr.bf16.mxu0 0
    %1908 = vmatpush1.bf16.msra.mxu0 0
    %1909 = vmatprep.subr.bf16.mxu0 0
    %1910 = vmatpush1.bf16.msra.mxu0 0
    %1911 = vmatprep.subr.bf16.mxu0 0
    %1912 = vmatpush1.bf16.msra.mxu0 0
    %1913 = vmatprep.subr.bf16.mxu0 0
    %1914 = vmatpush1.bf16.msra.mxu0 0
    %1915 = vmatprep.subr.bf16.mxu0 0
    %1916 = vmatpush1.bf16.msra.mxu0 0
    %1917 = vmatprep.subr.bf16.mxu0 0
    %1918 = vmatpush1.bf16.msra.mxu0 %v1898
    %1919 = vmatprep.subr.bf16.mxu0 0
    %1920 = vmatpush2.bf16.msra.mxu0 0
    %1921 = vmatprep.subr.bf16.mxu0 0
    %1922 = vmatpush2.bf16.msra.mxu0 0
    %1923 = vmatprep.subr.bf16.mxu0 0
    %1924 = vmatpush2.bf16.msra.mxu0 0
    %1925 = vmatprep.subr.bf16.mxu0 0
    %1926 = vmatpush2.bf16.msra.mxu0 0
    %1927 = vmatprep.subr.bf16.mxu0 0
    %1928 = vmatpush2.bf16.msra.mxu0 0
    %1929 = vmatprep.subr.bf16.mxu0 0
    %1930 = vmatpush2.bf16.msra.mxu0 0
    %1931 = vmatprep.subr.bf16.mxu0 0
    %1932 = vmatpush2.bf16.msra.mxu0 0
    %1933 = vmatprep.subr.bf16.mxu0 0
    %1934 = vmatpush2.bf16.msra.mxu0 0
    %1935 = vmatprep.mubr.bf16.mxu0 0
    %1936 = vmatmul.mubr.bf16.gmra.mxu0 %v1901
    %v1937 = vpop.f32.mrf.mxu0
    %v1938 = vadd.f32 0.0, %v1937
    %v1939 = vpop.f32.mrf.mxu0
    %v1940 = vpop.f32.mrf.mxu0
    %v1941 = vadd.f32 0.0, %v1940
    %v1942 = vpop.f32.mrf.mxu0
    %1943 = vdwg.mxu0
    %v1944 = vadd.f32 %v1838, %v1938
    %v1945 = vadd.f32 %v1839, %v1941
    %v1946 = vld [vmem:[%s20 + $0x20] sm:$0xf]
    %v1947 = vld [vmem:[%s20 + $0x24] sm:$0xf]
    %v1948 = vld [vmem:[%s21 + $0x20] sm:$0xf]
    %v1949 = vld [vmem:[%s21 + $0x24] sm:$0xf]
    %v1952 = vunpack.c.l.b16 %v1946
    %v1953 = vunpack.c.l.b16 %v1947
    %v1954 = vpack.c.b16 %v1953, %v1952
    %v1956 = vsel %vm448, %v1954, 0
    %1958 = vmatprep.subr.bf16.mxu0 0
    %1959 = vmatpush1.bf16.msra.mxu0 0
    %1960 = vmatprep.subr.bf16.mxu0 0
    %1961 = vmatpush1.bf16.msra.mxu0 0
    %1962 = vmatprep.subr.bf16.mxu0 0
    %1963 = vmatpush1.bf16.msra.mxu0 0
    %1964 = vmatprep.subr.bf16.mxu0 0
    %1965 = vmatpush1.bf16.msra.mxu0 0
    %1966 = vmatprep.subr.bf16.mxu0 0
    %1967 = vmatpush1.bf16.msra.mxu0 0
    %1968 = vmatprep.subr.bf16.mxu0 0
    %1969 = vmatpush1.bf16.msra.mxu0 0
    %1970 = vmatprep.subr.bf16.mxu0 0
    %1971 = vmatpush1.bf16.msra.mxu0 0
    %1972 = vmatprep.subr.bf16.mxu0 0
    %1973 = vmatpush1.bf16.msra.mxu0 %v1529
    %1974 = vmatprep.subr.bf16.mxu0 0
    %1975 = vmatpush2.bf16.msra.mxu0 0
    %1976 = vmatprep.subr.bf16.mxu0 0
    %1977 = vmatpush2.bf16.msra.mxu0 0
    %1978 = vmatprep.subr.bf16.mxu0 0
    %1979 = vmatpush2.bf16.msra.mxu0 0
    %1980 = vmatprep.subr.bf16.mxu0 0
    %1981 = vmatpush2.bf16.msra.mxu0 0
    %1982 = vmatprep.subr.bf16.mxu0 0
    %1983 = vmatpush2.bf16.msra.mxu0 0
    %1984 = vmatprep.subr.bf16.mxu0 0
    %1985 = vmatpush2.bf16.msra.mxu0 0
    %1986 = vmatprep.subr.bf16.mxu0 0
    %1987 = vmatpush2.bf16.msra.mxu0 0
    %1988 = vmatprep.subr.bf16.mxu0 0
    %1989 = vmatpush2.bf16.msra.mxu0 0
    %1990 = vmatprep.mubr.bf16.mxu0 0
    %1991 = vmatmul.mubr.bf16.gmra.mxu0 %v1956
    %v1992 = vpop.f32.mrf.mxu0
    %v1993 = vadd.f32 0.0, %v1992
    %v1994 = vpop.f32.mrf.mxu0
    %v1995 = vpop.f32.mrf.mxu0
    %v1996 = vadd.f32 0.0, %v1995
    %v1997 = vpop.f32.mrf.mxu0
    %1998 = vdwg.mxu0
    %v1999 = vpack.c.bf16 %v1996, %v1993
    %v2002 = vunpack.c.l.b16 %v1948
    %v2003 = vunpack.c.l.b16 %v1949
    %v2004 = vpack.c.b16 %v2003, %v2002
    %v2007 = vsel %vm448, %v1999, 0
    %2009 = vmatprep.subr.bf16.mxu0 0
    %2010 = vmatpush1.bf16.msra.mxu0 0
    %2011 = vmatprep.subr.bf16.mxu0 0
    %2012 = vmatpush1.bf16.msra.mxu0 0
    %2013 = vmatprep.subr.bf16.mxu0 0
    %2014 = vmatpush1.bf16.msra.mxu0 0
    %2015 = vmatprep.subr.bf16.mxu0 0
    %2016 = vmatpush1.bf16.msra.mxu0 0
    %2017 = vmatprep.subr.bf16.mxu0 0
    %2018 = vmatpush1.bf16.msra.mxu0 0
    %2019 = vmatprep.subr.bf16.mxu0 0
    %2020 = vmatpush1.bf16.msra.mxu0 0
    %2021 = vmatprep.subr.bf16.mxu0 0
    %2022 = vmatpush1.bf16.msra.mxu0 0
    %2023 = vmatprep.subr.bf16.mxu0 0
    %2024 = vmatpush1.bf16.msra.mxu0 %v2004
    %2025 = vmatprep.subr.bf16.mxu0 0
    %2026 = vmatpush2.bf16.msra.mxu0 0
    %2027 = vmatprep.subr.bf16.mxu0 0
    %2028 = vmatpush2.bf16.msra.mxu0 0
    %2029 = vmatprep.subr.bf16.mxu0 0
    %2030 = vmatpush2.bf16.msra.mxu0 0
    %2031 = vmatprep.subr.bf16.mxu0 0
    %2032 = vmatpush2.bf16.msra.mxu0 0
    %2033 = vmatprep.subr.bf16.mxu0 0
    %2034 = vmatpush2.bf16.msra.mxu0 0
    %2035 = vmatprep.subr.bf16.mxu0 0
    %2036 = vmatpush2.bf16.msra.mxu0 0
    %2037 = vmatprep.subr.bf16.mxu0 0
    %2038 = vmatpush2.bf16.msra.mxu0 0
    %2039 = vmatprep.subr.bf16.mxu0 0
    %2040 = vmatpush2.bf16.msra.mxu0 0
    %2041 = vmatprep.mubr.bf16.mxu0 0
    %2042 = vmatmul.mubr.bf16.gmra.mxu0 %v2007
    %v2043 = vpop.f32.mrf.mxu0
    %v2044 = vadd.f32 0.0, %v2043
    %v2045 = vpop.f32.mrf.mxu0
    %v2046 = vpop.f32.mrf.mxu0
    %v2047 = vadd.f32 0.0, %v2046
    %v2048 = vpop.f32.mrf.mxu0
    %2049 = vdwg.mxu0
    %v2050 = vadd.f32 %v1944, %v2044
    %v2051 = vadd.f32 %v1945, %v2047
    %v2052 = vld [vmem:[%s20 + $0x28] sm:$0xf]
    %v2053 = vld [vmem:[%s20 + $0x2c] sm:$0xf]
    %v2054 = vld [vmem:[%s21 + $0x28] sm:$0xf]
    %v2055 = vld [vmem:[%s21 + $0x2c] sm:$0xf]
    %v2058 = vunpack.c.l.b16 %v2052
    %v2059 = vunpack.c.l.b16 %v2053
    %v2060 = vpack.c.b16 %v2059, %v2058
    %v2062 = vsel %vm448, %v2060, 0
    %2064 = vmatprep.subr.bf16.mxu0 0
    %2065 = vmatpush1.bf16.msra.mxu0 0
    %2066 = vmatprep.subr.bf16.mxu0 0
    %2067 = vmatpush1.bf16.msra.mxu0 0
    %2068 = vmatprep.subr.bf16.mxu0 0
    %2069 = vmatpush1.bf16.msra.mxu0 0
    %2070 = vmatprep.subr.bf16.mxu0 0
    %2071 = vmatpush1.bf16.msra.mxu0 0
    %2072 = vmatprep.subr.bf16.mxu0 0
    %2073 = vmatpush1.bf16.msra.mxu0 0
    %2074 = vmatprep.subr.bf16.mxu0 0
    %2075 = vmatpush1.bf16.msra.mxu0 0
    %2076 = vmatprep.subr.bf16.mxu0 0
    %2077 = vmatpush1.bf16.msra.mxu0 0
    %2078 = vmatprep.subr.bf16.mxu0 0
    %2079 = vmatpush1.bf16.msra.mxu0 %v1529
    %2080 = vmatprep.subr.bf16.mxu0 0
    %2081 = vmatpush2.bf16.msra.mxu0 0
    %2082 = vmatprep.subr.bf16.mxu0 0
    %2083 = vmatpush2.bf16.msra.mxu0 0
    %2084 = vmatprep.subr.bf16.mxu0 0
    %2085 = vmatpush2.bf16.msra.mxu0 0
    %2086 = vmatprep.subr.bf16.mxu0 0
    %2087 = vmatpush2.bf16.msra.mxu0 0
    %2088 = vmatprep.subr.bf16.mxu0 0
    %2089 = vmatpush2.bf16.msra.mxu0 0
    %2090 = vmatprep.subr.bf16.mxu0 0
    %2091 = vmatpush2.bf16.msra.mxu0 0
    %2092 = vmatprep.subr.bf16.mxu0 0
    %2093 = vmatpush2.bf16.msra.mxu0 0
    %2094 = vmatprep.subr.bf16.mxu0 0
    %2095 = vmatpush2.bf16.msra.mxu0 0
    %2096 = vmatprep.mubr.bf16.mxu0 0
    %2097 = vmatmul.mubr.bf16.gmra.mxu0 %v2062
    %v2098 = vpop.f32.mrf.mxu0
    %v2099 = vadd.f32 0.0, %v2098
    %v2100 = vpop.f32.mrf.mxu0
    %v2101 = vpop.f32.mrf.mxu0
    %v2102 = vadd.f32 0.0, %v2101
    %v2103 = vpop.f32.mrf.mxu0
    %2104 = vdwg.mxu0
    %v2105 = vpack.c.bf16 %v2102, %v2099
    %v2108 = vunpack.c.l.b16 %v2054
    %v2109 = vunpack.c.l.b16 %v2055
    %v2110 = vpack.c.b16 %v2109, %v2108
    %v2113 = vsel %vm448, %v2105, 0
    %2115 = vmatprep.subr.bf16.mxu0 0
    %2116 = vmatpush1.bf16.msra.mxu0 0
    %2117 = vmatprep.subr.bf16.mxu0 0
    %2118 = vmatpush1.bf16.msra.mxu0 0
    %2119 = vmatprep.subr.bf16.mxu0 0
    %2120 = vmatpush1.bf16.msra.mxu0 0
    %2121 = vmatprep.subr.bf16.mxu0 0
    %2122 = vmatpush1.bf16.msra.mxu0 0
    %2123 = vmatprep.subr.bf16.mxu0 0
    %2124 = vmatpush1.bf16.msra.mxu0 0
    %2125 = vmatprep.subr.bf16.mxu0 0
    %2126 = vmatpush1.bf16.msra.mxu0 0
    %2127 = vmatprep.subr.bf16.mxu0 0
    %2128 = vmatpush1.bf16.msra.mxu0 0
    %2129 = vmatprep.subr.bf16.mxu0 0
    %2130 = vmatpush1.bf16.msra.mxu0 %v2110
    %2131 = vmatprep.subr.bf16.mxu0 0
    %2132 = vmatpush2.bf16.msra.mxu0 0
    %2133 = vmatprep.subr.bf16.mxu0 0
    %2134 = vmatpush2.bf16.msra.mxu0 0
    %2135 = vmatprep.subr.bf16.mxu0 0
    %2136 = vmatpush2.bf16.msra.mxu0 0
    %2137 = vmatprep.subr.bf16.mxu0 0
    %2138 = vmatpush2.bf16.msra.mxu0 0
    %2139 = vmatprep.subr.bf16.mxu0 0
    %2140 = vmatpush2.bf16.msra.mxu0 0
    %2141 = vmatprep.subr.bf16.mxu0 0
    %2142 = vmatpush2.bf16.msra.mxu0 0
    %2143 = vmatprep.subr.bf16.mxu0 0
    %2144 = vmatpush2.bf16.msra.mxu0 0
    %2145 = vmatprep.subr.bf16.mxu0 0
    %2146 = vmatpush2.bf16.msra.mxu0 0
    %2147 = vmatprep.mubr.bf16.mxu0 0
    %2148 = vmatmul.mubr.bf16.gmra.mxu0 %v2113
    %v2149 = vpop.f32.mrf.mxu0
    %v2150 = vadd.f32 0.0, %v2149
    %v2151 = vpop.f32.mrf.mxu0
    %v2152 = vpop.f32.mrf.mxu0
    %v2153 = vadd.f32 0.0, %v2152
    %v2154 = vpop.f32.mrf.mxu0
    %2155 = vdwg.mxu0
    %v2156 = vadd.f32 %v2050, %v2150
    %v2157 = vadd.f32 %v2051, %v2153
    %v2158 = vld [vmem:[%s20 + $0x30] sm:$0xf]
    %v2159 = vld [vmem:[%s20 + $0x34] sm:$0xf]
    %v2160 = vld [vmem:[%s21 + $0x30] sm:$0xf]
    %v2161 = vld [vmem:[%s21 + $0x34] sm:$0xf]
    %v2164 = vunpack.c.l.b16 %v2158
    %v2165 = vunpack.c.l.b16 %v2159
    %v2166 = vpack.c.b16 %v2165, %v2164
    %v2168 = vsel %vm448, %v2166, 0
    %2170 = vmatprep.subr.bf16.mxu0 0
    %2171 = vmatpush1.bf16.msra.mxu0 0
    %2172 = vmatprep.subr.bf16.mxu0 0
    %2173 = vmatpush1.bf16.msra.mxu0 0
    %2174 = vmatprep.subr.bf16.mxu0 0
    %2175 = vmatpush1.bf16.msra.mxu0 0
    %2176 = vmatprep.subr.bf16.mxu0 0
    %2177 = vmatpush1.bf16.msra.mxu0 0
    %2178 = vmatprep.subr.bf16.mxu0 0
    %2179 = vmatpush1.bf16.msra.mxu0 0
    %2180 = vmatprep.subr.bf16.mxu0 0
    %2181 = vmatpush1.bf16.msra.mxu0 0
    %2182 = vmatprep.subr.bf16.mxu0 0
    %2183 = vmatpush1.bf16.msra.mxu0 0
    %2184 = vmatprep.subr.bf16.mxu0 0
    %2185 = vmatpush1.bf16.msra.mxu0 %v1529
    %2186 = vmatprep.subr.bf16.mxu0 0
    %2187 = vmatpush2.bf16.msra.mxu0 0
    %2188 = vmatprep.subr.bf16.mxu0 0
    %2189 = vmatpush2.bf16.msra.mxu0 0
    %2190 = vmatprep.subr.bf16.mxu0 0
    %2191 = vmatpush2.bf16.msra.mxu0 0
    %2192 = vmatprep.subr.bf16.mxu0 0
    %2193 = vmatpush2.bf16.msra.mxu0 0
    %2194 = vmatprep.subr.bf16.mxu0 0
    %2195 = vmatpush2.bf16.msra.mxu0 0
    %2196 = vmatprep.subr.bf16.mxu0 0
    %2197 = vmatpush2.bf16.msra.mxu0 0
    %2198 = vmatprep.subr.bf16.mxu0 0
    %2199 = vmatpush2.bf16.msra.mxu0 0
    %2200 = vmatprep.subr.bf16.mxu0 0
    %2201 = vmatpush2.bf16.msra.mxu0 0
    %2202 = vmatprep.mubr.bf16.mxu0 0
    %2203 = vmatmul.mubr.bf16.gmra.mxu0 %v2168
    %v2204 = vpop.f32.mrf.mxu0
    %v2205 = vadd.f32 0.0, %v2204
    %v2206 = vpop.f32.mrf.mxu0
    %v2207 = vpop.f32.mrf.mxu0
    %v2208 = vadd.f32 0.0, %v2207
    %v2209 = vpop.f32.mrf.mxu0
    %2210 = vdwg.mxu0
    %v2211 = vpack.c.bf16 %v2208, %v2205
    %v2214 = vunpack.c.l.b16 %v2160
    %v2215 = vunpack.c.l.b16 %v2161
    %v2216 = vpack.c.b16 %v2215, %v2214
    %v2219 = vsel %vm448, %v2211, 0
    %2221 = vmatprep.subr.bf16.mxu0 0
    %2222 = vmatpush1.bf16.msra.mxu0 0
    %2223 = vmatprep.subr.bf16.mxu0 0
    %2224 = vmatpush1.bf16.msra.mxu0 0
    %2225 = vmatprep.subr.bf16.mxu0 0
    %2226 = vmatpush1.bf16.msra.mxu0 0
    %2227 = vmatprep.subr.bf16.mxu0 0
    %2228 = vmatpush1.bf16.msra.mxu0 0
    %2229 = vmatprep.subr.bf16.mxu0 0
    %2230 = vmatpush1.bf16.msra.mxu0 0
    %2231 = vmatprep.subr.bf16.mxu0 0
    %2232 = vmatpush1.bf16.msra.mxu0 0
    %2233 = vmatprep.subr.bf16.mxu0 0
    %2234 = vmatpush1.bf16.msra.mxu0 0
    %2235 = vmatprep.subr.bf16.mxu0 0
    %2236 = vmatpush1.bf16.msra.mxu0 %v2216
    %2237 = vmatprep.subr.bf16.mxu0 0
    %2238 = vmatpush2.bf16.msra.mxu0 0
    %2239 = vmatprep.subr.bf16.mxu0 0
    %2240 = vmatpush2.bf16.msra.mxu0 0
    %2241 = vmatprep.subr.bf16.mxu0 0
    %2242 = vmatpush2.bf16.msra.mxu0 0
    %2243 = vmatprep.subr.bf16.mxu0 0
    %2244 = vmatpush2.bf16.msra.mxu0 0
    %2245 = vmatprep.subr.bf16.mxu0 0
    %2246 = vmatpush2.bf16.msra.mxu0 0
    %2247 = vmatprep.subr.bf16.mxu0 0
    %2248 = vmatpush2.bf16.msra.mxu0 0
    %2249 = vmatprep.subr.bf16.mxu0 0
    %2250 = vmatpush2.bf16.msra.mxu0 0
    %2251 = vmatprep.subr.bf16.mxu0 0
    %2252 = vmatpush2.bf16.msra.mxu0 0
    %2253 = vmatprep.mubr.bf16.mxu0 0
    %2254 = vmatmul.mubr.bf16.gmra.mxu0 %v2219
    %v2255 = vpop.f32.mrf.mxu0
    %v2256 = vadd.f32 0.0, %v2255
    %v2257 = vpop.f32.mrf.mxu0
    %v2258 = vpop.f32.mrf.mxu0
    %v2259 = vadd.f32 0.0, %v2258
    %v2260 = vpop.f32.mrf.mxu0
    %2261 = vdwg.mxu0
    %v2262 = vadd.f32 %v2156, %v2256
    %v2263 = vadd.f32 %v2157, %v2259
    %v2264 = vld [vmem:[%s20 + $0x38] sm:$0xf]
    %v2265 = vld [vmem:[%s20 + $0x3c] sm:$0xf]
    %v2266 = vld [vmem:[%s21 + $0x38] sm:$0xf]
    %v2267 = vld [vmem:[%s21 + $0x3c] sm:$0xf]
    %v2270 = vunpack.c.l.b16 %v2264
    %v2271 = vunpack.c.l.b16 %v2265
    %v2272 = vpack.c.b16 %v2271, %v2270
    %v2274 = vsel %vm448, %v2272, 0
    %2276 = vmatprep.subr.bf16.mxu0 0
    %2277 = vmatpush1.bf16.msra.mxu0 0
    %2278 = vmatprep.subr.bf16.mxu0 0
    %2279 = vmatpush1.bf16.msra.mxu0 0
    %2280 = vmatprep.subr.bf16.mxu0 0
    %2281 = vmatpush1.bf16.msra.mxu0 0
    %2282 = vmatprep.subr.bf16.mxu0 0
    %2283 = vmatpush1.bf16.msra.mxu0 0
    %2284 = vmatprep.subr.bf16.mxu0 0
    %2285 = vmatpush1.bf16.msra.mxu0 0
    %2286 = vmatprep.subr.bf16.mxu0 0
    %2287 = vmatpush1.bf16.msra.mxu0 0
    %2288 = vmatprep.subr.bf16.mxu0 0
    %2289 = vmatpush1.bf16.msra.mxu0 0
    %2290 = vmatprep.subr.bf16.mxu0 0
    %2291 = vmatpush1.bf16.msra.mxu0 %v1529
    %2292 = vmatprep.subr.bf16.mxu0 0
    %2293 = vmatpush2.bf16.msra.mxu0 0
    %2294 = vmatprep.subr.bf16.mxu0 0
    %2295 = vmatpush2.bf16.msra.mxu0 0
    %2296 = vmatprep.subr.bf16.mxu0 0
    %2297 = vmatpush2.bf16.msra.mxu0 0
    %2298 = vmatprep.subr.bf16.mxu0 0
    %2299 = vmatpush2.bf16.msra.mxu0 0
    %2300 = vmatprep.subr.bf16.mxu0 0
    %2301 = vmatpush2.bf16.msra.mxu0 0
    %2302 = vmatprep.subr.bf16.mxu0 0
    %2303 = vmatpush2.bf16.msra.mxu0 0
    %2304 = vmatprep.subr.bf16.mxu0 0
    %2305 = vmatpush2.bf16.msra.mxu0 0
    %2306 = vmatprep.subr.bf16.mxu0 0
    %2307 = vmatpush2.bf16.msra.mxu0 0
    %2308 = vmatprep.mubr.bf16.mxu0 0
    %2309 = vmatmul.mubr.bf16.gmra.mxu0 %v2274
    %v2310 = vpop.f32.mrf.mxu0
    %v2311 = vadd.f32 0.0, %v2310
    %v2312 = vpop.f32.mrf.mxu0
    %v2313 = vpop.f32.mrf.mxu0
    %v2314 = vadd.f32 0.0, %v2313
    %v2315 = vpop.f32.mrf.mxu0
    %2316 = vdwg.mxu0
    %v2317 = vpack.c.bf16 %v2314, %v2311
    %v2320 = vunpack.c.l.b16 %v2266
    %v2321 = vunpack.c.l.b16 %v2267
    %v2322 = vpack.c.b16 %v2321, %v2320
    %v2325 = vsel %vm448, %v2317, 0
    %2327 = vmatprep.subr.bf16.mxu0 0
    %2328 = vmatpush1.bf16.msra.mxu0 0
    %2329 = vmatprep.subr.bf16.mxu0 0
    %2330 = vmatpush1.bf16.msra.mxu0 0
    %2331 = vmatprep.subr.bf16.mxu0 0
    %2332 = vmatpush1.bf16.msra.mxu0 0
    %2333 = vmatprep.subr.bf16.mxu0 0
    %2334 = vmatpush1.bf16.msra.mxu0 0
    %2335 = vmatprep.subr.bf16.mxu0 0
    %2336 = vmatpush1.bf16.msra.mxu0 0
    %2337 = vmatprep.subr.bf16.mxu0 0
    %2338 = vmatpush1.bf16.msra.mxu0 0
    %2339 = vmatprep.subr.bf16.mxu0 0
    %2340 = vmatpush1.bf16.msra.mxu0 0
    %2341 = vmatprep.subr.bf16.mxu0 0
    %2342 = vmatpush1.bf16.msra.mxu0 %v2322
    %2343 = vmatprep.subr.bf16.mxu0 0
    %2344 = vmatpush2.bf16.msra.mxu0 0
    %2345 = vmatprep.subr.bf16.mxu0 0
    %2346 = vmatpush2.bf16.msra.mxu0 0
    %2347 = vmatprep.subr.bf16.mxu0 0
    %2348 = vmatpush2.bf16.msra.mxu0 0
    %2349 = vmatprep.subr.bf16.mxu0 0
    %2350 = vmatpush2.bf16.msra.mxu0 0
    %2351 = vmatprep.subr.bf16.mxu0 0
    %2352 = vmatpush2.bf16.msra.mxu0 0
    %2353 = vmatprep.subr.bf16.mxu0 0
    %2354 = vmatpush2.bf16.msra.mxu0 0
    %2355 = vmatprep.subr.bf16.mxu0 0
    %2356 = vmatpush2.bf16.msra.mxu0 0
    %2357 = vmatprep.subr.bf16.mxu0 0
    %2358 = vmatpush2.bf16.msra.mxu0 0
    %2359 = vmatprep.mubr.bf16.mxu0 0
    %2360 = vmatmul.mubr.bf16.gmra.mxu0 %v2325
    %v2361 = vpop.f32.mrf.mxu0
    %v2362 = vadd.f32 0.0, %v2361
    %v2363 = vpop.f32.mrf.mxu0
    %v2364 = vpop.f32.mrf.mxu0
    %v2365 = vadd.f32 0.0, %v2364
    %v2366 = vpop.f32.mrf.mxu0
    %2367 = vdwg.mxu0
    %v2368 = vadd.f32 %v2262, %v2362
    %v2369 = vadd.f32 %v2263, %v2365
    %v2370 = vld [vmem:[%s20 + $0x40] sm:$0xf]
    %v2371 = vld [vmem:[%s20 + $0x44] sm:$0xf]
    %v2372 = vld [vmem:[%s21 + $0x40] sm:$0xf]
    %v2373 = vld [vmem:[%s21 + $0x44] sm:$0xf]
    %v2376 = vunpack.c.l.b16 %v2370
    %v2377 = vunpack.c.l.b16 %v2371
    %v2378 = vpack.c.b16 %v2377, %v2376
    %v2380 = vsel %vm448, %v2378, 0
    %2382 = vmatprep.subr.bf16.mxu0 0
    %2383 = vmatpush1.bf16.msra.mxu0 0
    %2384 = vmatprep.subr.bf16.mxu0 0
    %2385 = vmatpush1.bf16.msra.mxu0 0
    %2386 = vmatprep.subr.bf16.mxu0 0
    %2387 = vmatpush1.bf16.msra.mxu0 0
    %2388 = vmatprep.subr.bf16.mxu0 0
    %2389 = vmatpush1.bf16.msra.mxu0 0
    %2390 = vmatprep.subr.bf16.mxu0 0
    %2391 = vmatpush1.bf16.msra.mxu0 0
    %2392 = vmatprep.subr.bf16.mxu0 0
    %2393 = vmatpush1.bf16.msra.mxu0 0
    %2394 = vmatprep.subr.bf16.mxu0 0
    %2395 = vmatpush1.bf16.msra.mxu0 0
    %2396 = vmatprep.subr.bf16.mxu0 0
    %2397 = vmatpush1.bf16.msra.mxu0 %v1529
    %2398 = vmatprep.subr.bf16.mxu0 0
    %2399 = vmatpush2.bf16.msra.mxu0 0
    %2400 = vmatprep.subr.bf16.mxu0 0
    %2401 = vmatpush2.bf16.msra.mxu0 0
    %2402 = vmatprep.subr.bf16.mxu0 0
    %2403 = vmatpush2.bf16.msra.mxu0 0
    %2404 = vmatprep.subr.bf16.mxu0 0
    %2405 = vmatpush2.bf16.msra.mxu0 0
    %2406 = vmatprep.subr.bf16.mxu0 0
    %2407 = vmatpush2.bf16.msra.mxu0 0
    %2408 = vmatprep.subr.bf16.mxu0 0
    %2409 = vmatpush2.bf16.msra.mxu0 0
    %2410 = vmatprep.subr.bf16.mxu0 0
    %2411 = vmatpush2.bf16.msra.mxu0 0
    %2412 = vmatprep.subr.bf16.mxu0 0
    %2413 = vmatpush2.bf16.msra.mxu0 0
    %2414 = vmatprep.mubr.bf16.mxu0 0
    %2415 = vmatmul.mubr.bf16.gmra.mxu0 %v2380
    %v2416 = vpop.f32.mrf.mxu0
    %v2417 = vadd.f32 0.0, %v2416
    %v2418 = vpop.f32.mrf.mxu0
    %v2419 = vpop.f32.mrf.mxu0
    %v2420 = vadd.f32 0.0, %v2419
    %v2421 = vpop.f32.mrf.mxu0
    %2422 = vdwg.mxu0
    %v2423 = vpack.c.bf16 %v2420, %v2417
    %v2426 = vunpack.c.l.b16 %v2372
    %v2427 = vunpack.c.l.b16 %v2373
    %v2428 = vpack.c.b16 %v2427, %v2426
    %v2431 = vsel %vm448, %v2423, 0
    %2433 = vmatprep.subr.bf16.mxu0 0
    %2434 = vmatpush1.bf16.msra.mxu0 0
    %2435 = vmatprep.subr.bf16.mxu0 0
    %2436 = vmatpush1.bf16.msra.mxu0 0
    %2437 = vmatprep.subr.bf16.mxu0 0
    %2438 = vmatpush1.bf16.msra.mxu0 0
    %2439 = vmatprep.subr.bf16.mxu0 0
    %2440 = vmatpush1.bf16.msra.mxu0 0
    %2441 = vmatprep.subr.bf16.mxu0 0
    %2442 = vmatpush1.bf16.msra.mxu0 0
    %2443 = vmatprep.subr.bf16.mxu0 0
    %2444 = vmatpush1.bf16.msra.mxu0 0
    %2445 = vmatprep.subr.bf16.mxu0 0
    %2446 = vmatpush1.bf16.msra.mxu0 0
    %2447 = vmatprep.subr.bf16.mxu0 0
    %2448 = vmatpush1.bf16.msra.mxu0 %v2428
    %2449 = vmatprep.subr.bf16.mxu0 0
    %2450 = vmatpush2.bf16.msra.mxu0 0
    %2451 = vmatprep.subr.bf16.mxu0 0
    %2452 = vmatpush2.bf16.msra.mxu0 0
    %2453 = vmatprep.subr.bf16.mxu0 0
    %2454 = vmatpush2.bf16.msra.mxu0 0
    %2455 = vmatprep.subr.bf16.mxu0 0
    %2456 = vmatpush2.bf16.msra.mxu0 0
    %2457 = vmatprep.subr.bf16.mxu0 0
    %2458 = vmatpush2.bf16.msra.mxu0 0
    %2459 = vmatprep.subr.bf16.mxu0 0
    %2460 = vmatpush2.bf16.msra.mxu0 0
    %2461 = vmatprep.subr.bf16.mxu0 0
    %2462 = vmatpush2.bf16.msra.mxu0 0
    %2463 = vmatprep.subr.bf16.mxu0 0
    %2464 = vmatpush2.bf16.msra.mxu0 0
    %2465 = vmatprep.mubr.bf16.mxu0 0
    %2466 = vmatmul.mubr.bf16.gmra.mxu0 %v2431
    %v2467 = vpop.f32.mrf.mxu0
    %v2468 = vadd.f32 0.0, %v2467
    %v2469 = vpop.f32.mrf.mxu0
    %v2470 = vpop.f32.mrf.mxu0
    %v2471 = vadd.f32 0.0, %v2470
    %v2472 = vpop.f32.mrf.mxu0
    %2473 = vdwg.mxu0
    %v2474 = vadd.f32 %v2368, %v2468
    %v2475 = vadd.f32 %v2369, %v2471
    %v2476 = vpack.c.bf16 %v1524, %v1523
    %2477 = vmatprep.subr.bf16.mxu0 0
    %2478 = vmatpush1.bf16.msra.mxu0 0
    %2479 = vmatprep.subr.bf16.mxu0 0
    %2480 = vmatpush1.bf16.msra.mxu0 0
    %2481 = vmatprep.subr.bf16.mxu0 0
    %2482 = vmatpush1.bf16.msra.mxu0 0
    %2483 = vmatprep.subr.bf16.mxu0 0
    %2484 = vmatpush1.bf16.msra.mxu0 0
    %2485 = vmatprep.subr.bf16.mxu0 0
    %2486 = vmatpush1.bf16.msra.mxu0 0
    %2487 = vmatprep.subr.bf16.mxu0 0
    %2488 = vmatpush1.bf16.msra.mxu0 0
    %2489 = vmatprep.subr.bf16.mxu0 0
    %2490 = vmatpush1.bf16.msra.mxu0 0
    %2491 = vmatprep.subr.bf16.mxu0 0
    %2492 = vmatpush1.bf16.msra.mxu0 %v2476
    %2493 = vmatprep.subr.bf16.mxu0 0
    %2494 = vmatpush2.bf16.msra.mxu0 0
    %2495 = vmatprep.subr.bf16.mxu0 0
    %2496 = vmatpush2.bf16.msra.mxu0 0
    %2497 = vmatprep.subr.bf16.mxu0 0
    %2498 = vmatpush2.bf16.msra.mxu0 0
    %2499 = vmatprep.subr.bf16.mxu0 0
    %2500 = vmatpush2.bf16.msra.mxu0 0
    %2501 = vmatprep.subr.bf16.mxu0 0
    %2502 = vmatpush2.bf16.msra.mxu0 0
    %2503 = vmatprep.subr.bf16.mxu0 0
    %2504 = vmatpush2.bf16.msra.mxu0 0
    %2505 = vmatprep.subr.bf16.mxu0 0
    %2506 = vmatpush2.bf16.msra.mxu0 0
    %2507 = vmatprep.subr.bf16.mxu0 0
    %2508 = vmatpush2.bf16.msra.mxu0 0
    %2509 = vmatprep.mubr.bf16.mxu0 0
    %2510 = vmatmul.mubr.bf16.gmra.mxu0 %v1536
    %v2511 = vpop.f32.mrf.mxu0
    %v2512 = vadd.f32 0.0, %v2511
    %v2513 = vpop.f32.mrf.mxu0
    %v2514 = vpop.f32.mrf.mxu0
    %v2515 = vadd.f32 0.0, %v2514
    %v2516 = vpop.f32.mrf.mxu0
    %2517 = vdwg.mxu0
    %v2518 = vpack.c.bf16 %v2515, %v2512
    %2519 = vmatprep.subr.bf16.mxu0 0
    %2520 = vmatpush1.bf16.msra.mxu0 0
    %2521 = vmatprep.subr.bf16.mxu0 0
    %2522 = vmatpush1.bf16.msra.mxu0 0
    %2523 = vmatprep.subr.bf16.mxu0 0
    %2524 = vmatpush1.bf16.msra.mxu0 0
    %2525 = vmatprep.subr.bf16.mxu0 0
    %2526 = vmatpush1.bf16.msra.mxu0 0
    %2527 = vmatprep.subr.bf16.mxu0 0
    %2528 = vmatpush1.bf16.msra.mxu0 0
    %2529 = vmatprep.subr.bf16.mxu0 0
    %2530 = vmatpush1.bf16.msra.mxu0 0
    %2531 = vmatprep.subr.bf16.mxu0 0
    %2532 = vmatpush1.bf16.msra.mxu0 0
    %2533 = vmatprep.subr.bf16.mxu0 0
    %2534 = vmatpush1.bf16.msra.mxu0 %v2476
    %2535 = vmatprep.subr.bf16.mxu0 0
    %2536 = vmatpush2.bf16.msra.mxu0 0
    %2537 = vmatprep.subr.bf16.mxu0 0
    %2538 = vmatpush2.bf16.msra.mxu0 0
    %2539 = vmatprep.subr.bf16.mxu0 0
    %2540 = vmatpush2.bf16.msra.mxu0 0
    %2541 = vmatprep.subr.bf16.mxu0 0
    %2542 = vmatpush2.bf16.msra.mxu0 0
    %2543 = vmatprep.subr.bf16.mxu0 0
    %2544 = vmatpush2.bf16.msra.mxu0 0
    %2545 = vmatprep.subr.bf16.mxu0 0
    %2546 = vmatpush2.bf16.msra.mxu0 0
    %2547 = vmatprep.subr.bf16.mxu0 0
    %2548 = vmatpush2.bf16.msra.mxu0 0
    %2549 = vmatprep.subr.bf16.mxu0 0
    %2550 = vmatpush2.bf16.msra.mxu0 0
    %2551 = vmatprep.mubr.bf16.mxu0 0
    %2552 = vmatmul.mubr.bf16.gmra.mxu0 %v1590
    %v2553 = vpop.f32.mrf.mxu0
    %v2554 = vadd.f32 0.0, %v2553
    %v2555 = vpop.f32.mrf.mxu0
    %v2556 = vpop.f32.mrf.mxu0
    %v2557 = vadd.f32 0.0, %v2556
    %v2558 = vpop.f32.mrf.mxu0
    %2559 = vdwg.mxu0
    %v2560 = vpack.c.bf16 %v2557, %v2554
    %v2562 = vsel %vm448, %v2560, 0
    %2564 = vmatprep.subr.bf16.mxu0 0
    %2565 = vmatpush1.bf16.msra.mxu0 0
    %2566 = vmatprep.subr.bf16.mxu0 0
    %2567 = vmatpush1.bf16.msra.mxu0 0
    %2568 = vmatprep.subr.bf16.mxu0 0
    %2569 = vmatpush1.bf16.msra.mxu0 0
    %2570 = vmatprep.subr.bf16.mxu0 0
    %2571 = vmatpush1.bf16.msra.mxu0 0
    %2572 = vmatprep.subr.bf16.mxu0 0
    %2573 = vmatpush1.bf16.msra.mxu0 0
    %2574 = vmatprep.subr.bf16.mxu0 0
    %2575 = vmatpush1.bf16.msra.mxu0 0
    %2576 = vmatprep.subr.bf16.mxu0 0
    %2577 = vmatpush1.bf16.msra.mxu0 0
    %2578 = vmatprep.subr.bf16.mxu0 0
    %2579 = vmatpush1.bf16.msra.mxu0 %v1638
    %2580 = vmatprep.subr.bf16.mxu0 0
    %2581 = vmatpush2.bf16.msra.mxu0 0
    %2582 = vmatprep.subr.bf16.mxu0 0
    %2583 = vmatpush2.bf16.msra.mxu0 0
    %2584 = vmatprep.subr.bf16.mxu0 0
    %2585 = vmatpush2.bf16.msra.mxu0 0
    %2586 = vmatprep.subr.bf16.mxu0 0
    %2587 = vmatpush2.bf16.msra.mxu0 0
    %2588 = vmatprep.subr.bf16.mxu0 0
    %2589 = vmatpush2.bf16.msra.mxu0 0
    %2590 = vmatprep.subr.bf16.mxu0 0
    %2591 = vmatpush2.bf16.msra.mxu0 0
    %2592 = vmatprep.subr.bf16.mxu0 0
    %2593 = vmatpush2.bf16.msra.mxu0 0
    %2594 = vmatprep.subr.bf16.mxu0 0
    %2595 = vmatpush2.bf16.msra.mxu0 0
    %2596 = vmatprep.mubr.bf16.mxu0 0
    %2597 = vmatmul.mubr.bf16.gmra.mxu0 %v2562
    %v2598 = vpop.f32.mrf.mxu0
    %v2599 = vadd.f32 0.0, %v2598
    %v2600 = vpop.f32.mrf.mxu0
    %v2601 = vpop.f32.mrf.mxu0
    %v2602 = vadd.f32 0.0, %v2601
    %v2603 = vpop.f32.mrf.mxu0
    %2604 = vdwg.mxu0
    %v2606 = vsel %vm448, %v2518, 0
    %2608 = vmatprep.subr.bf16.mxu0 0
    %2609 = vmatpush1.bf16.msra.mxu0 0
    %2610 = vmatprep.subr.bf16.mxu0 0
    %2611 = vmatpush1.bf16.msra.mxu0 0
    %2612 = vmatprep.subr.bf16.mxu0 0
    %2613 = vmatpush1.bf16.msra.mxu0 0
    %2614 = vmatprep.subr.bf16.mxu0 0
    %2615 = vmatpush1.bf16.msra.mxu0 0
    %2616 = vmatprep.subr.bf16.mxu0 0
    %2617 = vmatpush1.bf16.msra.mxu0 0
    %2618 = vmatprep.subr.bf16.mxu0 0
    %2619 = vmatpush1.bf16.msra.mxu0 0
    %2620 = vmatprep.subr.bf16.mxu0 0
    %2621 = vmatpush1.bf16.msra.mxu0 0
    %2622 = vmatprep.subr.bf16.mxu0 0
    %2623 = vmatpush1.bf16.msra.mxu0 %v1688
    %2624 = vmatprep.subr.bf16.mxu0 0
    %2625 = vmatpush2.bf16.msra.mxu0 0
    %2626 = vmatprep.subr.bf16.mxu0 0
    %2627 = vmatpush2.bf16.msra.mxu0 0
    %2628 = vmatprep.subr.bf16.mxu0 0
    %2629 = vmatpush2.bf16.msra.mxu0 0
    %2630 = vmatprep.subr.bf16.mxu0 0
    %2631 = vmatpush2.bf16.msra.mxu0 0
    %2632 = vmatprep.subr.bf16.mxu0 0
    %2633 = vmatpush2.bf16.msra.mxu0 0
    %2634 = vmatprep.subr.bf16.mxu0 0
    %2635 = vmatpush2.bf16.msra.mxu0 0
    %2636 = vmatprep.subr.bf16.mxu0 0
    %2637 = vmatpush2.bf16.msra.mxu0 0
    %2638 = vmatprep.subr.bf16.mxu0 0
    %2639 = vmatpush2.bf16.msra.mxu0 0
    %2640 = vmatprep.mubr.bf16.mxu0 0
    %2641 = vmatmul.mubr.bf16.gmra.mxu0 %v2606
    %v2642 = vpop.f32.mrf.mxu0
    %v2643 = vadd.f32 %v2599, %v2642
    %v2644 = vpop.f32.mrf.mxu0
    %v2645 = vpop.f32.mrf.mxu0
    %v2646 = vadd.f32 %v2602, %v2645
    %v2647 = vpop.f32.mrf.mxu0
    %2648 = vdwg.mxu0
    %2649 = vmatprep.subr.bf16.mxu0 0
    %2650 = vmatpush1.bf16.msra.mxu0 0
    %2651 = vmatprep.subr.bf16.mxu0 0
    %2652 = vmatpush1.bf16.msra.mxu0 0
    %2653 = vmatprep.subr.bf16.mxu0 0
    %2654 = vmatpush1.bf16.msra.mxu0 0
    %2655 = vmatprep.subr.bf16.mxu0 0
    %2656 = vmatpush1.bf16.msra.mxu0 0
    %2657 = vmatprep.subr.bf16.mxu0 0
    %2658 = vmatpush1.bf16.msra.mxu0 0
    %2659 = vmatprep.subr.bf16.mxu0 0
    %2660 = vmatpush1.bf16.msra.mxu0 0
    %2661 = vmatprep.subr.bf16.mxu0 0
    %2662 = vmatpush1.bf16.msra.mxu0 0
    %2663 = vmatprep.subr.bf16.mxu0 0
    %2664 = vmatpush1.bf16.msra.mxu0 %v2476
    %2665 = vmatprep.subr.bf16.mxu0 0
    %2666 = vmatpush2.bf16.msra.mxu0 0
    %2667 = vmatprep.subr.bf16.mxu0 0
    %2668 = vmatpush2.bf16.msra.mxu0 0
    %2669 = vmatprep.subr.bf16.mxu0 0
    %2670 = vmatpush2.bf16.msra.mxu0 0
    %2671 = vmatprep.subr.bf16.mxu0 0
    %2672 = vmatpush2.bf16.msra.mxu0 0
    %2673 = vmatprep.subr.bf16.mxu0 0
    %2674 = vmatpush2.bf16.msra.mxu0 0
    %2675 = vmatprep.subr.bf16.mxu0 0
    %2676 = vmatpush2.bf16.msra.mxu0 0
    %2677 = vmatprep.subr.bf16.mxu0 0
    %2678 = vmatpush2.bf16.msra.mxu0 0
    %2679 = vmatprep.subr.bf16.mxu0 0
    %2680 = vmatpush2.bf16.msra.mxu0 0
    %2681 = vmatprep.mubr.bf16.mxu0 0
    %2682 = vmatmul.mubr.bf16.gmra.mxu0 %v1744
    %v2683 = vpop.f32.mrf.mxu0
    %v2684 = vadd.f32 0.0, %v2683
    %v2685 = vpop.f32.mrf.mxu0
    %v2686 = vpop.f32.mrf.mxu0
    %v2687 = vadd.f32 0.0, %v2686
    %v2688 = vpop.f32.mrf.mxu0
    %2689 = vdwg.mxu0
    %v2690 = vpack.c.bf16 %v2687, %v2684
    %v2692 = vsel %vm448, %v2690, 0
    %2694 = vmatprep.subr.bf16.mxu0 0
    %2695 = vmatpush1.bf16.msra.mxu0 0
    %2696 = vmatprep.subr.bf16.mxu0 0
    %2697 = vmatpush1.bf16.msra.mxu0 0
    %2698 = vmatprep.subr.bf16.mxu0 0
    %2699 = vmatpush1.bf16.msra.mxu0 0
    %2700 = vmatprep.subr.bf16.mxu0 0
    %2701 = vmatpush1.bf16.msra.mxu0 0
    %2702 = vmatprep.subr.bf16.mxu0 0
    %2703 = vmatpush1.bf16.msra.mxu0 0
    %2704 = vmatprep.subr.bf16.mxu0 0
    %2705 = vmatpush1.bf16.msra.mxu0 0
    %2706 = vmatprep.subr.bf16.mxu0 0
    %2707 = vmatpush1.bf16.msra.mxu0 0
    %2708 = vmatprep.subr.bf16.mxu0 0
    %2709 = vmatpush1.bf16.msra.mxu0 %v1792
    %2710 = vmatprep.subr.bf16.mxu0 0
    %2711 = vmatpush2.bf16.msra.mxu0 0
    %2712 = vmatprep.subr.bf16.mxu0 0
    %2713 = vmatpush2.bf16.msra.mxu0 0
    %2714 = vmatprep.subr.bf16.mxu0 0
    %2715 = vmatpush2.bf16.msra.mxu0 0
    %2716 = vmatprep.subr.bf16.mxu0 0
    %2717 = vmatpush2.bf16.msra.mxu0 0
    %2718 = vmatprep.subr.bf16.mxu0 0
    %2719 = vmatpush2.bf16.msra.mxu0 0
    %2720 = vmatprep.subr.bf16.mxu0 0
    %2721 = vmatpush2.bf16.msra.mxu0 0
    %2722 = vmatprep.subr.bf16.mxu0 0
    %2723 = vmatpush2.bf16.msra.mxu0 0
    %2724 = vmatprep.subr.bf16.mxu0 0
    %2725 = vmatpush2.bf16.msra.mxu0 0
    %2726 = vmatprep.mubr.bf16.mxu0 0
    %2727 = vmatmul.mubr.bf16.gmra.mxu0 %v2692
    %v2728 = vpop.f32.mrf.mxu0
    %v2729 = vadd.f32 0.0, %v2728
    %v2730 = vpop.f32.mrf.mxu0
    %v2731 = vpop.f32.mrf.mxu0
    %v2732 = vadd.f32 0.0, %v2731
    %v2733 = vpop.f32.mrf.mxu0
    %2734 = vdwg.mxu0
    %v2735 = vadd.f32 %v2643, %v2729
    %v2736 = vadd.f32 %v2646, %v2732
    %2737 = vmatprep.subr.bf16.mxu0 0
    %2738 = vmatpush1.bf16.msra.mxu0 0
    %2739 = vmatprep.subr.bf16.mxu0 0
    %2740 = vmatpush1.bf16.msra.mxu0 0
    %2741 = vmatprep.subr.bf16.mxu0 0
    %2742 = vmatpush1.bf16.msra.mxu0 0
    %2743 = vmatprep.subr.bf16.mxu0 0
    %2744 = vmatpush1.bf16.msra.mxu0 0
    %2745 = vmatprep.subr.bf16.mxu0 0
    %2746 = vmatpush1.bf16.msra.mxu0 0
    %2747 = vmatprep.subr.bf16.mxu0 0
    %2748 = vmatpush1.bf16.msra.mxu0 0
    %2749 = vmatprep.subr.bf16.mxu0 0
    %2750 = vmatpush1.bf16.msra.mxu0 0
    %2751 = vmatprep.subr.bf16.mxu0 0
    %2752 = vmatpush1.bf16.msra.mxu0 %v2476
    %2753 = vmatprep.subr.bf16.mxu0 0
    %2754 = vmatpush2.bf16.msra.mxu0 0
    %2755 = vmatprep.subr.bf16.mxu0 0
    %2756 = vmatpush2.bf16.msra.mxu0 0
    %2757 = vmatprep.subr.bf16.mxu0 0
    %2758 = vmatpush2.bf16.msra.mxu0 0
    %2759 = vmatprep.subr.bf16.mxu0 0
    %2760 = vmatpush2.bf16.msra.mxu0 0
    %2761 = vmatprep.subr.bf16.mxu0 0
    %2762 = vmatpush2.bf16.msra.mxu0 0
    %2763 = vmatprep.subr.bf16.mxu0 0
    %2764 = vmatpush2.bf16.msra.mxu0 0
    %2765 = vmatprep.subr.bf16.mxu0 0
    %2766 = vmatpush2.bf16.msra.mxu0 0
    %2767 = vmatprep.subr.bf16.mxu0 0
    %2768 = vmatpush2.bf16.msra.mxu0 0
    %2769 = vmatprep.mubr.bf16.mxu0 0
    %2770 = vmatmul.mubr.bf16.gmra.mxu0 %v1850
    %v2771 = vpop.f32.mrf.mxu0
    %v2772 = vadd.f32 0.0, %v2771
    %v2773 = vpop.f32.mrf.mxu0
    %v2774 = vpop.f32.mrf.mxu0
    %v2775 = vadd.f32 0.0, %v2774
    %v2776 = vpop.f32.mrf.mxu0
    %2777 = vdwg.mxu0
    %v2778 = vpack.c.bf16 %v2775, %v2772
    %v2780 = vsel %vm448, %v2778, 0
    %2782 = vmatprep.subr.bf16.mxu0 0
    %2783 = vmatpush1.bf16.msra.mxu0 0
    %2784 = vmatprep.subr.bf16.mxu0 0
    %2785 = vmatpush1.bf16.msra.mxu0 0
    %2786 = vmatprep.subr.bf16.mxu0 0
    %2787 = vmatpush1.bf16.msra.mxu0 0
    %2788 = vmatprep.subr.bf16.mxu0 0
    %2789 = vmatpush1.bf16.msra.mxu0 0
    %2790 = vmatprep.subr.bf16.mxu0 0
    %2791 = vmatpush1.bf16.msra.mxu0 0
    %2792 = vmatprep.subr.bf16.mxu0 0
    %2793 = vmatpush1.bf16.msra.mxu0 0
    %2794 = vmatprep.subr.bf16.mxu0 0
    %2795 = vmatpush1.bf16.msra.mxu0 0
    %2796 = vmatprep.subr.bf16.mxu0 0
    %2797 = vmatpush1.bf16.msra.mxu0 %v1898
    %2798 = vmatprep.subr.bf16.mxu0 0
    %2799 = vmatpush2.bf16.msra.mxu0 0
    %2800 = vmatprep.subr.bf16.mxu0 0
    %2801 = vmatpush2.bf16.msra.mxu0 0
    %2802 = vmatprep.subr.bf16.mxu0 0
    %2803 = vmatpush2.bf16.msra.mxu0 0
    %2804 = vmatprep.subr.bf16.mxu0 0
    %2805 = vmatpush2.bf16.msra.mxu0 0
    %2806 = vmatprep.subr.bf16.mxu0 0
    %2807 = vmatpush2.bf16.msra.mxu0 0
    %2808 = vmatprep.subr.bf16.mxu0 0
    %2809 = vmatpush2.bf16.msra.mxu0 0
    %2810 = vmatprep.subr.bf16.mxu0 0
    %2811 = vmatpush2.bf16.msra.mxu0 0
    %2812 = vmatprep.subr.bf16.mxu0 0
    %2813 = vmatpush2.bf16.msra.mxu0 0
    %2814 = vmatprep.mubr.bf16.mxu0 0
    %2815 = vmatmul.mubr.bf16.gmra.mxu0 %v2780
    %v2816 = vpop.f32.mrf.mxu0
    %v2817 = vadd.f32 0.0, %v2816
    %v2818 = vpop.f32.mrf.mxu0
    %v2819 = vpop.f32.mrf.mxu0
    %v2820 = vadd.f32 0.0, %v2819
    %v2821 = vpop.f32.mrf.mxu0
    %2822 = vdwg.mxu0
    %v2823 = vadd.f32 %v2735, %v2817
    %v2824 = vadd.f32 %v2736, %v2820
    %2825 = vmatprep.subr.bf16.mxu0 0
    %2826 = vmatpush1.bf16.msra.mxu0 0
    %2827 = vmatprep.subr.bf16.mxu0 0
    %2828 = vmatpush1.bf16.msra.mxu0 0
    %2829 = vmatprep.subr.bf16.mxu0 0
    %2830 = vmatpush1.bf16.msra.mxu0 0
    %2831 = vmatprep.subr.bf16.mxu0 0
    %2832 = vmatpush1.bf16.msra.mxu0 0
    %2833 = vmatprep.subr.bf16.mxu0 0
    %2834 = vmatpush1.bf16.msra.mxu0 0
    %2835 = vmatprep.subr.bf16.mxu0 0
    %2836 = vmatpush1.bf16.msra.mxu0 0
    %2837 = vmatprep.subr.bf16.mxu0 0
    %2838 = vmatpush1.bf16.msra.mxu0 0
    %2839 = vmatprep.subr.bf16.mxu0 0
    %2840 = vmatpush1.bf16.msra.mxu0 %v2476
    %2841 = vmatprep.subr.bf16.mxu0 0
    %2842 = vmatpush2.bf16.msra.mxu0 0
    %2843 = vmatprep.subr.bf16.mxu0 0
    %2844 = vmatpush2.bf16.msra.mxu0 0
    %2845 = vmatprep.subr.bf16.mxu0 0
    %2846 = vmatpush2.bf16.msra.mxu0 0
    %2847 = vmatprep.subr.bf16.mxu0 0
    %2848 = vmatpush2.bf16.msra.mxu0 0
    %2849 = vmatprep.subr.bf16.mxu0 0
    %2850 = vmatpush2.bf16.msra.mxu0 0
    %2851 = vmatprep.subr.bf16.mxu0 0
    %2852 = vmatpush2.bf16.msra.mxu0 0
    %2853 = vmatprep.subr.bf16.mxu0 0
    %2854 = vmatpush2.bf16.msra.mxu0 0
    %2855 = vmatprep.subr.bf16.mxu0 0
    %2856 = vmatpush2.bf16.msra.mxu0 0
    %2857 = vmatprep.mubr.bf16.mxu0 0
    %2858 = vmatmul.mubr.bf16.gmra.mxu0 %v1956
    %v2859 = vpop.f32.mrf.mxu0
    %v2860 = vadd.f32 0.0, %v2859
    %v2861 = vpop.f32.mrf.mxu0
    %v2862 = vpop.f32.mrf.mxu0
    %v2863 = vadd.f32 0.0, %v2862
    %v2864 = vpop.f32.mrf.mxu0
    %2865 = vdwg.mxu0
    %v2866 = vpack.c.bf16 %v2863, %v2860
    %v2868 = vsel %vm448, %v2866, 0
    %2870 = vmatprep.subr.bf16.mxu0 0
    %2871 = vmatpush1.bf16.msra.mxu0 0
    %2872 = vmatprep.subr.bf16.mxu0 0
    %2873 = vmatpush1.bf16.msra.mxu0 0
    %2874 = vmatprep.subr.bf16.mxu0 0
    %2875 = vmatpush1.bf16.msra.mxu0 0
    %2876 = vmatprep.subr.bf16.mxu0 0
    %2877 = vmatpush1.bf16.msra.mxu0 0
    %2878 = vmatprep.subr.bf16.mxu0 0
    %2879 = vmatpush1.bf16.msra.mxu0 0
    %2880 = vmatprep.subr.bf16.mxu0 0
    %2881 = vmatpush1.bf16.msra.mxu0 0
    %2882 = vmatprep.subr.bf16.mxu0 0
    %2883 = vmatpush1.bf16.msra.mxu0 0
    %2884 = vmatprep.subr.bf16.mxu0 0
    %2885 = vmatpush1.bf16.msra.mxu0 %v2004
    %2886 = vmatprep.subr.bf16.mxu0 0
    %2887 = vmatpush2.bf16.msra.mxu0 0
    %2888 = vmatprep.subr.bf16.mxu0 0
    %2889 = vmatpush2.bf16.msra.mxu0 0
    %2890 = vmatprep.subr.bf16.mxu0 0
    %2891 = vmatpush2.bf16.msra.mxu0 0
    %2892 = vmatprep.subr.bf16.mxu0 0
    %2893 = vmatpush2.bf16.msra.mxu0 0
    %2894 = vmatprep.subr.bf16.mxu0 0
    %2895 = vmatpush2.bf16.msra.mxu0 0
    %2896 = vmatprep.subr.bf16.mxu0 0
    %2897 = vmatpush2.bf16.msra.mxu0 0
    %2898 = vmatprep.subr.bf16.mxu0 0
    %2899 = vmatpush2.bf16.msra.mxu0 0
    %2900 = vmatprep.subr.bf16.mxu0 0
    %2901 = vmatpush2.bf16.msra.mxu0 0
    %2902 = vmatprep.mubr.bf16.mxu0 0
    %2903 = vmatmul.mubr.bf16.gmra.mxu0 %v2868
    %v2904 = vpop.f32.mrf.mxu0
    %v2905 = vadd.f32 0.0, %v2904
    %v2906 = vpop.f32.mrf.mxu0
    %v2907 = vpop.f32.mrf.mxu0
    %v2908 = vadd.f32 0.0, %v2907
    %v2909 = vpop.f32.mrf.mxu0
    %2910 = vdwg.mxu0
    %v2911 = vadd.f32 %v2823, %v2905
    %v2912 = vadd.f32 %v2824, %v2908
    %2913 = vmatprep.subr.bf16.mxu0 0
    %2914 = vmatpush1.bf16.msra.mxu0 0
    %2915 = vmatprep.subr.bf16.mxu0 0
    %2916 = vmatpush1.bf16.msra.mxu0 0
    %2917 = vmatprep.subr.bf16.mxu0 0
    %2918 = vmatpush1.bf16.msra.mxu0 0
    %2919 = vmatprep.subr.bf16.mxu0 0
    %2920 = vmatpush1.bf16.msra.mxu0 0
    %2921 = vmatprep.subr.bf16.mxu0 0
    %2922 = vmatpush1.bf16.msra.mxu0 0
    %2923 = vmatprep.subr.bf16.mxu0 0
    %2924 = vmatpush1.bf16.msra.mxu0 0
    %2925 = vmatprep.subr.bf16.mxu0 0
    %2926 = vmatpush1.bf16.msra.mxu0 0
    %2927 = vmatprep.subr.bf16.mxu0 0
    %2928 = vmatpush1.bf16.msra.mxu0 %v2476
    %2929 = vmatprep.subr.bf16.mxu0 0
    %2930 = vmatpush2.bf16.msra.mxu0 0
    %2931 = vmatprep.subr.bf16.mxu0 0
    %2932 = vmatpush2.bf16.msra.mxu0 0
    %2933 = vmatprep.subr.bf16.mxu0 0
    %2934 = vmatpush2.bf16.msra.mxu0 0
    %2935 = vmatprep.subr.bf16.mxu0 0
    %2936 = vmatpush2.bf16.msra.mxu0 0
    %2937 = vmatprep.subr.bf16.mxu0 0
    %2938 = vmatpush2.bf16.msra.mxu0 0
    %2939 = vmatprep.subr.bf16.mxu0 0
    %2940 = vmatpush2.bf16.msra.mxu0 0
    %2941 = vmatprep.subr.bf16.mxu0 0
    %2942 = vmatpush2.bf16.msra.mxu0 0
    %2943 = vmatprep.subr.bf16.mxu0 0
    %2944 = vmatpush2.bf16.msra.mxu0 0
    %2945 = vmatprep.mubr.bf16.mxu0 0
    %2946 = vmatmul.mubr.bf16.gmra.mxu0 %v2062
    %v2947 = vpop.f32.mrf.mxu0
    %v2948 = vadd.f32 0.0, %v2947
    %v2949 = vpop.f32.mrf.mxu0
    %v2950 = vpop.f32.mrf.mxu0
    %v2951 = vadd.f32 0.0, %v2950
    %v2952 = vpop.f32.mrf.mxu0
    %2953 = vdwg.mxu0
    %v2954 = vpack.c.bf16 %v2951, %v2948
    %v2956 = vsel %vm448, %v2954, 0
    %2958 = vmatprep.subr.bf16.mxu0 0
    %2959 = vmatpush1.bf16.msra.mxu0 0
    %2960 = vmatprep.subr.bf16.mxu0 0
    %2961 = vmatpush1.bf16.msra.mxu0 0
    %2962 = vmatprep.subr.bf16.mxu0 0
    %2963 = vmatpush1.bf16.msra.mxu0 0
    %2964 = vmatprep.subr.bf16.mxu0 0
    %2965 = vmatpush1.bf16.msra.mxu0 0
    %2966 = vmatprep.subr.bf16.mxu0 0
    %2967 = vmatpush1.bf16.msra.mxu0 0
    %2968 = vmatprep.subr.bf16.mxu0 0
    %2969 = vmatpush1.bf16.msra.mxu0 0
    %2970 = vmatprep.subr.bf16.mxu0 0
    %2971 = vmatpush1.bf16.msra.mxu0 0
    %2972 = vmatprep.subr.bf16.mxu0 0
    %2973 = vmatpush1.bf16.msra.mxu0 %v2110
    %2974 = vmatprep.subr.bf16.mxu0 0
    %2975 = vmatpush2.bf16.msra.mxu0 0
    %2976 = vmatprep.subr.bf16.mxu0 0
    %2977 = vmatpush2.bf16.msra.mxu0 0
    %2978 = vmatprep.subr.bf16.mxu0 0
    %2979 = vmatpush2.bf16.msra.mxu0 0
    %2980 = vmatprep.subr.bf16.mxu0 0
    %2981 = vmatpush2.bf16.msra.mxu0 0
    %2982 = vmatprep.subr.bf16.mxu0 0
    %2983 = vmatpush2.bf16.msra.mxu0 0
    %2984 = vmatprep.subr.bf16.mxu0 0
    %2985 = vmatpush2.bf16.msra.mxu0 0
    %2986 = vmatprep.subr.bf16.mxu0 0
    %2987 = vmatpush2.bf16.msra.mxu0 0
    %2988 = vmatprep.subr.bf16.mxu0 0
    %2989 = vmatpush2.bf16.msra.mxu0 0
    %2990 = vmatprep.mubr.bf16.mxu0 0
    %2991 = vmatmul.mubr.bf16.gmra.mxu0 %v2956
    %v2992 = vpop.f32.mrf.mxu0
    %v2993 = vadd.f32 0.0, %v2992
    %v2994 = vpop.f32.mrf.mxu0
    %v2995 = vpop.f32.mrf.mxu0
    %v2996 = vadd.f32 0.0, %v2995
    %v2997 = vpop.f32.mrf.mxu0
    %2998 = vdwg.mxu0
    %v2999 = vadd.f32 %v2911, %v2993
    %v3000 = vadd.f32 %v2912, %v2996
    %3001 = vmatprep.subr.bf16.mxu0 0
    %3002 = vmatpush1.bf16.msra.mxu0 0
    %3003 = vmatprep.subr.bf16.mxu0 0
    %3004 = vmatpush1.bf16.msra.mxu0 0
    %3005 = vmatprep.subr.bf16.mxu0 0
    %3006 = vmatpush1.bf16.msra.mxu0 0
    %3007 = vmatprep.subr.bf16.mxu0 0
    %3008 = vmatpush1.bf16.msra.mxu0 0
    %3009 = vmatprep.subr.bf16.mxu0 0
    %3010 = vmatpush1.bf16.msra.mxu0 0
    %3011 = vmatprep.subr.bf16.mxu0 0
    %3012 = vmatpush1.bf16.msra.mxu0 0
    %3013 = vmatprep.subr.bf16.mxu0 0
    %3014 = vmatpush1.bf16.msra.mxu0 0
    %3015 = vmatprep.subr.bf16.mxu0 0
    %3016 = vmatpush1.bf16.msra.mxu0 %v2476
    %3017 = vmatprep.subr.bf16.mxu0 0
    %3018 = vmatpush2.bf16.msra.mxu0 0
    %3019 = vmatprep.subr.bf16.mxu0 0
    %3020 = vmatpush2.bf16.msra.mxu0 0
    %3021 = vmatprep.subr.bf16.mxu0 0
    %3022 = vmatpush2.bf16.msra.mxu0 0
    %3023 = vmatprep.subr.bf16.mxu0 0
    %3024 = vmatpush2.bf16.msra.mxu0 0
    %3025 = vmatprep.subr.bf16.mxu0 0
    %3026 = vmatpush2.bf16.msra.mxu0 0
    %3027 = vmatprep.subr.bf16.mxu0 0
    %3028 = vmatpush2.bf16.msra.mxu0 0
    %3029 = vmatprep.subr.bf16.mxu0 0
    %3030 = vmatpush2.bf16.msra.mxu0 0
    %3031 = vmatprep.subr.bf16.mxu0 0
    %3032 = vmatpush2.bf16.msra.mxu0 0
    %3033 = vmatprep.mubr.bf16.mxu0 0
    %3034 = vmatmul.mubr.bf16.gmra.mxu0 %v2168
    %v3035 = vpop.f32.mrf.mxu0
    %v3036 = vadd.f32 0.0, %v3035
    %v3037 = vpop.f32.mrf.mxu0
    %v3038 = vpop.f32.mrf.mxu0
    %v3039 = vadd.f32 0.0, %v3038
    %v3040 = vpop.f32.mrf.mxu0
    %3041 = vdwg.mxu0
    %v3042 = vpack.c.bf16 %v3039, %v3036
    %v3044 = vsel %vm448, %v3042, 0
    %3046 = vmatprep.subr.bf16.mxu0 0
    %3047 = vmatpush1.bf16.msra.mxu0 0
    %3048 = vmatprep.subr.bf16.mxu0 0
    %3049 = vmatpush1.bf16.msra.mxu0 0
    %3050 = vmatprep.subr.bf16.mxu0 0
    %3051 = vmatpush1.bf16.msra.mxu0 0
    %3052 = vmatprep.subr.bf16.mxu0 0
    %3053 = vmatpush1.bf16.msra.mxu0 0
    %3054 = vmatprep.subr.bf16.mxu0 0
    %3055 = vmatpush1.bf16.msra.mxu0 0
    %3056 = vmatprep.subr.bf16.mxu0 0
    %3057 = vmatpush1.bf16.msra.mxu0 0
    %3058 = vmatprep.subr.bf16.mxu0 0
    %3059 = vmatpush1.bf16.msra.mxu0 0
    %3060 = vmatprep.subr.bf16.mxu0 0
    %3061 = vmatpush1.bf16.msra.mxu0 %v2216
    %3062 = vmatprep.subr.bf16.mxu0 0
    %3063 = vmatpush2.bf16.msra.mxu0 0
    %3064 = vmatprep.subr.bf16.mxu0 0
    %3065 = vmatpush2.bf16.msra.mxu0 0
    %3066 = vmatprep.subr.bf16.mxu0 0
    %3067 = vmatpush2.bf16.msra.mxu0 0
    %3068 = vmatprep.subr.bf16.mxu0 0
    %3069 = vmatpush2.bf16.msra.mxu0 0
    %3070 = vmatprep.subr.bf16.mxu0 0
    %3071 = vmatpush2.bf16.msra.mxu0 0
    %3072 = vmatprep.subr.bf16.mxu0 0
    %3073 = vmatpush2.bf16.msra.mxu0 0
    %3074 = vmatprep.subr.bf16.mxu0 0
    %3075 = vmatpush2.bf16.msra.mxu0 0
    %3076 = vmatprep.subr.bf16.mxu0 0
    %3077 = vmatpush2.bf16.msra.mxu0 0
    %3078 = vmatprep.mubr.bf16.mxu0 0
    %3079 = vmatmul.mubr.bf16.gmra.mxu0 %v3044
    %v3080 = vpop.f32.mrf.mxu0
    %v3081 = vadd.f32 0.0, %v3080
    %v3082 = vpop.f32.mrf.mxu0
    %v3083 = vpop.f32.mrf.mxu0
    %v3084 = vadd.f32 0.0, %v3083
    %v3085 = vpop.f32.mrf.mxu0
    %3086 = vdwg.mxu0
    %v3087 = vadd.f32 %v2999, %v3081
    %v3088 = vadd.f32 %v3000, %v3084
    %3089 = vmatprep.subr.bf16.mxu0 0
    %3090 = vmatpush1.bf16.msra.mxu0 0
    %3091 = vmatprep.subr.bf16.mxu0 0
    %3092 = vmatpush1.bf16.msra.mxu0 0
    %3093 = vmatprep.subr.bf16.mxu0 0
    %3094 = vmatpush1.bf16.msra.mxu0 0
    %3095 = vmatprep.subr.bf16.mxu0 0
    %3096 = vmatpush1.bf16.msra.mxu0 0
    %3097 = vmatprep.subr.bf16.mxu0 0
    %3098 = vmatpush1.bf16.msra.mxu0 0
    %3099 = vmatprep.subr.bf16.mxu0 0
    %3100 = vmatpush1.bf16.msra.mxu0 0
    %3101 = vmatprep.subr.bf16.mxu0 0
    %3102 = vmatpush1.bf16.msra.mxu0 0
    %3103 = vmatprep.subr.bf16.mxu0 0
    %3104 = vmatpush1.bf16.msra.mxu0 %v2476
    %3105 = vmatprep.subr.bf16.mxu0 0
    %3106 = vmatpush2.bf16.msra.mxu0 0
    %3107 = vmatprep.subr.bf16.mxu0 0
    %3108 = vmatpush2.bf16.msra.mxu0 0
    %3109 = vmatprep.subr.bf16.mxu0 0
    %3110 = vmatpush2.bf16.msra.mxu0 0
    %3111 = vmatprep.subr.bf16.mxu0 0
    %3112 = vmatpush2.bf16.msra.mxu0 0
    %3113 = vmatprep.subr.bf16.mxu0 0
    %3114 = vmatpush2.bf16.msra.mxu0 0
    %3115 = vmatprep.subr.bf16.mxu0 0
    %3116 = vmatpush2.bf16.msra.mxu0 0
    %3117 = vmatprep.subr.bf16.mxu0 0
    %3118 = vmatpush2.bf16.msra.mxu0 0
    %3119 = vmatprep.subr.bf16.mxu0 0
    %3120 = vmatpush2.bf16.msra.mxu0 0
    %3121 = vmatprep.mubr.bf16.mxu0 0
    %3122 = vmatmul.mubr.bf16.gmra.mxu0 %v2274
    %v3123 = vpop.f32.mrf.mxu0
    %v3124 = vadd.f32 0.0, %v3123
    %v3125 = vpop.f32.mrf.mxu0
    %v3126 = vpop.f32.mrf.mxu0
    %v3127 = vadd.f32 0.0, %v3126
    %v3128 = vpop.f32.mrf.mxu0
    %3129 = vdwg.mxu0
    %v3130 = vpack.c.bf16 %v3127, %v3124
    %v3132 = vsel %vm448, %v3130, 0
    %3134 = vmatprep.subr.bf16.mxu0 0
    %3135 = vmatpush1.bf16.msra.mxu0 0
    %3136 = vmatprep.subr.bf16.mxu0 0
    %3137 = vmatpush1.bf16.msra.mxu0 0
    %3138 = vmatprep.subr.bf16.mxu0 0
    %3139 = vmatpush1.bf16.msra.mxu0 0
    %3140 = vmatprep.subr.bf16.mxu0 0
    %3141 = vmatpush1.bf16.msra.mxu0 0
    %3142 = vmatprep.subr.bf16.mxu0 0
    %3143 = vmatpush1.bf16.msra.mxu0 0
    %3144 = vmatprep.subr.bf16.mxu0 0
    %3145 = vmatpush1.bf16.msra.mxu0 0
    %3146 = vmatprep.subr.bf16.mxu0 0
    %3147 = vmatpush1.bf16.msra.mxu0 0
    %3148 = vmatprep.subr.bf16.mxu0 0
    %3149 = vmatpush1.bf16.msra.mxu0 %v2322
    %3150 = vmatprep.subr.bf16.mxu0 0
    %3151 = vmatpush2.bf16.msra.mxu0 0
    %3152 = vmatprep.subr.bf16.mxu0 0
    %3153 = vmatpush2.bf16.msra.mxu0 0
    %3154 = vmatprep.subr.bf16.mxu0 0
    %3155 = vmatpush2.bf16.msra.mxu0 0
    %3156 = vmatprep.subr.bf16.mxu0 0
    %3157 = vmatpush2.bf16.msra.mxu0 0
    %3158 = vmatprep.subr.bf16.mxu0 0
    %3159 = vmatpush2.bf16.msra.mxu0 0
    %3160 = vmatprep.subr.bf16.mxu0 0
    %3161 = vmatpush2.bf16.msra.mxu0 0
    %3162 = vmatprep.subr.bf16.mxu0 0
    %3163 = vmatpush2.bf16.msra.mxu0 0
    %3164 = vmatprep.subr.bf16.mxu0 0
    %3165 = vmatpush2.bf16.msra.mxu0 0
    %3166 = vmatprep.mubr.bf16.mxu0 0
    %3167 = vmatmul.mubr.bf16.gmra.mxu0 %v3132
    %v3168 = vpop.f32.mrf.mxu0
    %v3169 = vadd.f32 0.0, %v3168
    %v3170 = vpop.f32.mrf.mxu0
    %v3171 = vpop.f32.mrf.mxu0
    %v3172 = vadd.f32 0.0, %v3171
    %v3173 = vpop.f32.mrf.mxu0
    %3174 = vdwg.mxu0
    %v3175 = vadd.f32 %v3087, %v3169
    %v3176 = vadd.f32 %v3088, %v3172
    %3177 = vmatprep.subr.bf16.mxu0 0
    %3178 = vmatpush1.bf16.msra.mxu0 0
    %3179 = vmatprep.subr.bf16.mxu0 0
    %3180 = vmatpush1.bf16.msra.mxu0 0
    %3181 = vmatprep.subr.bf16.mxu0 0
    %3182 = vmatpush1.bf16.msra.mxu0 0
    %3183 = vmatprep.subr.bf16.mxu0 0
    %3184 = vmatpush1.bf16.msra.mxu0 0
    %3185 = vmatprep.subr.bf16.mxu0 0
    %3186 = vmatpush1.bf16.msra.mxu0 0
    %3187 = vmatprep.subr.bf16.mxu0 0
    %3188 = vmatpush1.bf16.msra.mxu0 0
    %3189 = vmatprep.subr.bf16.mxu0 0
    %3190 = vmatpush1.bf16.msra.mxu0 0
    %3191 = vmatprep.subr.bf16.mxu0 0
    %3192 = vmatpush1.bf16.msra.mxu0 %v2476
    %3193 = vmatprep.subr.bf16.mxu0 0
    %3194 = vmatpush2.bf16.msra.mxu0 0
    %3195 = vmatprep.subr.bf16.mxu0 0
    %3196 = vmatpush2.bf16.msra.mxu0 0
    %3197 = vmatprep.subr.bf16.mxu0 0
    %3198 = vmatpush2.bf16.msra.mxu0 0
    %3199 = vmatprep.subr.bf16.mxu0 0
    %3200 = vmatpush2.bf16.msra.mxu0 0
    %3201 = vmatprep.subr.bf16.mxu0 0
    %3202 = vmatpush2.bf16.msra.mxu0 0
    %3203 = vmatprep.subr.bf16.mxu0 0
    %3204 = vmatpush2.bf16.msra.mxu0 0
    %3205 = vmatprep.subr.bf16.mxu0 0
    %3206 = vmatpush2.bf16.msra.mxu0 0
    %3207 = vmatprep.subr.bf16.mxu0 0
    %3208 = vmatpush2.bf16.msra.mxu0 0
    %3209 = vmatprep.mubr.bf16.mxu0 0
    %3210 = vmatmul.mubr.bf16.gmra.mxu0 %v2380
    %v3211 = vpop.f32.mrf.mxu0
    %v3212 = vadd.f32 0.0, %v3211
    %v3213 = vpop.f32.mrf.mxu0
    %v3214 = vpop.f32.mrf.mxu0
    %v3215 = vadd.f32 0.0, %v3214
    %v3216 = vpop.f32.mrf.mxu0
    %3217 = vdwg.mxu0
    %v3218 = vpack.c.bf16 %v3215, %v3212
    %v3220 = vsel %vm448, %v3218, 0
    %3222 = vmatprep.subr.bf16.mxu0 0
    %3223 = vmatpush1.bf16.msra.mxu0 0
    %3224 = vmatprep.subr.bf16.mxu0 0
    %3225 = vmatpush1.bf16.msra.mxu0 0
    %3226 = vmatprep.subr.bf16.mxu0 0
    %3227 = vmatpush1.bf16.msra.mxu0 0
    %3228 = vmatprep.subr.bf16.mxu0 0
    %3229 = vmatpush1.bf16.msra.mxu0 0
    %3230 = vmatprep.subr.bf16.mxu0 0
    %3231 = vmatpush1.bf16.msra.mxu0 0
    %3232 = vmatprep.subr.bf16.mxu0 0
    %3233 = vmatpush1.bf16.msra.mxu0 0
    %3234 = vmatprep.subr.bf16.mxu0 0
    %3235 = vmatpush1.bf16.msra.mxu0 0
    %3236 = vmatprep.subr.bf16.mxu0 0
    %3237 = vmatpush1.bf16.msra.mxu0 %v2428
    %3238 = vmatprep.subr.bf16.mxu0 0
    %3239 = vmatpush2.bf16.msra.mxu0 0
    %3240 = vmatprep.subr.bf16.mxu0 0
    %3241 = vmatpush2.bf16.msra.mxu0 0
    %3242 = vmatprep.subr.bf16.mxu0 0
    %3243 = vmatpush2.bf16.msra.mxu0 0
    %3244 = vmatprep.subr.bf16.mxu0 0
    %3245 = vmatpush2.bf16.msra.mxu0 0
    %3246 = vmatprep.subr.bf16.mxu0 0
    %3247 = vmatpush2.bf16.msra.mxu0 0
    %3248 = vmatprep.subr.bf16.mxu0 0
    %3249 = vmatpush2.bf16.msra.mxu0 0
    %3250 = vmatprep.subr.bf16.mxu0 0
    %3251 = vmatpush2.bf16.msra.mxu0 0
    %3252 = vmatprep.subr.bf16.mxu0 0
    %3253 = vmatpush2.bf16.msra.mxu0 0
    %3254 = vmatprep.mubr.bf16.mxu0 0
    %3255 = vmatmul.mubr.bf16.gmra.mxu0 %v3220
    %v3256 = vpop.f32.mrf.mxu0
    %v3257 = vadd.f32 0.0, %v3256
    %v3258 = vpop.f32.mrf.mxu0
    %v3259 = vpop.f32.mrf.mxu0
    %v3260 = vadd.f32 0.0, %v3259
    %v3261 = vpop.f32.mrf.mxu0
    %3262 = vdwg.mxu0
    %v3263 = vadd.f32 %v3175, %v3257
    %v3264 = vadd.f32 %v3176, %v3260
    %v3265 = vld [vmem:[%s22] sm:$0x1]
    %v3266 = vld [vmem:[%s23] sm:$0x1]
    %v3267 = vsel %vm448, %v2474, 0.0
    %3268 = vadd.xlane.f32.xlu0 %v3267
    %v3269 = vpop.xlane.xlu0 %3268
    %v3270 = vsel %vm448, %v2475, 0.0
    %3271 = vadd.xlane.f32.xlu0 %v3270
    %v3272 = vpop.xlane.xlu0 %3271
    %v3273 = vsel %vm448, %v3263, 0.0
    %3274 = vadd.xlane.f32.xlu0 %v3273
    %v3275 = vpop.xlane.xlu0 %3274
    %v3276 = vsel %vm448, %v3264, 0.0
    %3277 = vadd.xlane.f32.xlu0 %v3276
    %v3278 = vpop.xlane.xlu0 %3277
    %v3279 = vmul.f32 %v3269, 0.0625
    %v3280 = vmul.f32 %v3272, 0.0625
    %v3281 = vmul.f32 %v3275, 0.0625
    %v3282 = vmul.f32 %v3278, 0.0625
    %v3283 = vmul.f32 %v2474, %v2474
    %v3284 = vmul.f32 %v2475, %v2475
    %v3285 = vmul.f32 %v3263, %v3263
    %v3286 = vmul.f32 %v3264, %v3264
    %v3287 = vsel %vm448, %v3283, 0.0
    %3288 = vadd.xlane.f32.xlu0 %v3287
    %v3289 = vpop.xlane.xlu0 %3288
    %v3290 = vsel %vm448, %v3284, 0.0
    %3291 = vadd.xlane.f32.xlu0 %v3290
    %v3292 = vpop.xlane.xlu0 %3291
    %v3293 = vsel %vm448, %v3285, 0.0
    %3294 = vadd.xlane.f32.xlu0 %v3293
    %v3295 = vpop.xlane.xlu0 %3294
    %v3296 = vsel %vm448, %v3286, 0.0
    %3297 = vadd.xlane.f32.xlu0 %v3296
    %v3298 = vpop.xlane.xlu0 %3297
    %v3299 = vmul.f32 %v3289, 0.0625
    %v3300 = vmul.f32 %v3292, 0.0625
    %v3301 = vmul.f32 %v3295, 0.0625
    %v3302 = vmul.f32 %v3298, 0.0625
    %v3303 = vmul.f32 %v3279, %v3279
    %v3304 = vmul.f32 %v3280, %v3280
    %v3305 = vmul.f32 %v3281, %v3281
    %v3306 = vmul.f32 %v3282, %v3282
    %v3307 = vsub.f32 %v3299, %v3303
    %v3308 = vsub.f32 %v3300, %v3304
    %v3309 = vsub.f32 %v3301, %v3305
    %v3310 = vsub.f32 %v3302, %v3306
    %v3311 = vsub.f32 %v2474, %v3279
    %v3312 = vsub.f32 %v2475, %v3280
    %v3313 = vsub.f32 %v3263, %v3281
    %v3314 = vsub.f32 %v3264, %v3282
    %v3315 = vadd.f32 %v3307, 1e-06
    %v3316 = vadd.f32 %v3308, 1e-06
    %v3317 = vadd.f32 %v3309, 1e-06
    %v3318 = vadd.f32 %v3310, 1e-06
    %v3319 = vrsqrt.pop %v3315
    %v3320 = vrsqrt.pop %v3316
    %v3321 = vrsqrt.pop %v3317
    %v3322 = vrsqrt.pop %v3318
    %v3323 = vmul.f32 %v3311, %v3319
    %v3324 = vmul.f32 %v3312, %v3320
    %v3325 = vmul.f32 %v3313, %v3321
    %v3326 = vmul.f32 %v3314, %v3322
    %v3328 = vlaneseq
    %v3329 = vshrl.u32 %v3328, 7
    %v3330 = vsub.s32 0, %v3329
    %v3331 = vrot.slane %v3265, %v3330
    %v3333 = vmul.f32 %v3323, %v3331
    %v3334 = vmul.f32 %v3324, %v3331
    %v3335 = vmul.f32 %v3325, %v3331
    %v3336 = vmul.f32 %v3326, %v3331
    %v3338 = vlaneseq
    %v3339 = vshrl.u32 %v3338, 7
    %v3340 = vsub.s32 0, %v3339
    %v3341 = vrot.slane %v3266, %v3340
    %v3343 = vadd.f32 %v3333, %v3341
    %v3344 = vadd.f32 %v3334, %v3341
    %v3345 = vadd.f32 %v3335, %v3341
    %v3346 = vadd.f32 %v3336, %v3341
    %v3347 = vsel %vm448, %v3343, 0.0
    %v3348 = vsel %vm448, %v3344, 0.0
    %v3349 = vsel %vm448, %v3345, 0.0
    %v3350 = vsel %vm448, %v3346, 0.0
    %3351 = vst [vmem:[#allocation2] sm:$0xff] %v3347
    %3352 = vst [vmem:[#allocation2 + $0x8] sm:$0xff] %v3348
    %3353 = vst [vmem:[#allocation2 + $0x10] sm:$0xff] %v3349
    %3354 = vst [vmem:[#allocation2 + $0x18] sm:$0xff] %v3350
    // Predicated region
    $region98: #{sam_unet_forward.1} parent=1 // pred_check
      _
    $region99: #{sam_unet_forward.1} parent=1 // pred_check_branch
      %3356 = sbr.rel (0) target = $region101
    $region100: #{sam_unet_forward.1} parent=1 // pred_region
      %s3358 = ssub.s32 512, 512
      %3359 = vsyncadd [#allocation3], %s3358
      %s3360 = sshll.u32 [#allocation2], 4
      %s3361 = int_to_ptr.vmem [resolvable:$true] %s3360
      %3366 = dma.vmem_to_hbm [thread:$0]  %s3361, 512, %s24, [#allocation3], 128, 128, 8
    $region101: #{sam_unet_forward.1} parent=1 // pred_fallthru
      _
    // Predicated region
    $region102: #{sam_unet_forward.1} parent=1 // pred_check
      _
    $region103: #{sam_unet_forward.1} parent=1 // pred_check_branch
      %3368 = sbr.rel (0) target = $region105
    $region104: #{sam_unet_forward.1} parent=1 // pred_region
      %3369 = dma.done [#allocation3], 512
    $region105: #{sam_unet_forward.1} parent=1 // pred_fallthru
      _
    %3370 = vsyncpa [#allocation3], 1

</llo_original>
